<compile_context>
chip_gen: v7x
topology: tpu7x:2x2x1
jax: 0.10.0
libtpu: 0.0.40
codegen_flags: <defaults>
</compile_context>

<pallas_src>
import math

import jax
import jax.numpy as jnp
from jax.experimental import pallas as pl
from jax.experimental.pallas import tpu as pltpu

EPS = 1e-5


def _round_up(n, m=8):
    return ((n + m - 1) // m) * m


# ---------------- Pallas kernel ------------------------------------------------------

def resnet_kernel(x_ref, w_blk_ref, slab_ref, o_ref):
    n_layers = w_blk_ref.shape[0]          # 2 * blocknumber
    n_blocks = n_layers // 2
    C = w_blk_ref.shape[1]
    in_dim = x_ref.shape[1]
    out_dim = o_ref.shape[1]
    L = n_layers + 1                       # BN layer count (stem + 2 per block)
    batch = x_ref.shape[0]
    inv_b = 1.0 / batch

    # slab row offsets (must match pack_slab; all static Python ints)
    r_gamma = _round_up(in_dim)
    r_beta = r_gamma + _round_up(L)
    r_wout = r_beta + _round_up(L)
    r_bout = r_wout + _round_up(C)

    def linear_bn(h, w, layer):
        # Linear (bias omitted: cancelled exactly by BN mean subtraction).
        y = jnp.dot(h, w, preferred_element_type=jnp.float32)
        # Fused one-pass batch statistics: a single XLU sublane reduce over
        # [batch, 2C] (2C <= 128, lives in one lane tile).
        cat = jnp.concatenate([y, y * y], axis=-1)           # [batch, 2C]
        s = jnp.sum(cat, axis=0, keepdims=True) * inv_b      # [1, 2C]
        mean = s[:, :C]                                       # E[y]
        msq = s[:, C:]                                        # E[y^2]
        var = jnp.maximum(msq - mean * mean, 0.0)             # clamp cancellation
        gamma = slab_ref[r_gamma + layer:r_gamma + layer + 1, :]
        beta = slab_ref[r_beta + layer:r_beta + layer + 1, :]
        # Folded affine: y_hat = y * scale + shift
        scale = gamma * jax.lax.rsqrt(var + EPS)
        shift = beta - mean * scale
        return y * scale + shift

    h = x_ref[...].astype(jnp.float32)

    # stem: Linear(input, C) + BN + ReLU
    w_in = slab_ref[0:in_dim, :]
    h = jnp.maximum(linear_bn(h, w_in, 0), 0.0)

    # residual blocks (statically unrolled; everything is VMEM-resident)
    for i in range(n_blocks):
        residual = h
        out = jnp.maximum(linear_bn(h, w_blk_ref[2 * i], 1 + 2 * i), 0.0)
        out = linear_bn(out, w_blk_ref[2 * i + 1], 2 + 2 * i)
        h = jnp.maximum(out + residual, 0.0)

    # classifier: plain Linear(C, output) — bias kept (no BN after it).
    w_out = slab_ref[r_wout:r_wout + C, 0:out_dim]
    b_out = slab_ref[r_bout:r_bout + 1, 0:out_dim]
    o_ref[...] = (jnp.dot(h, w_out, preferred_element_type=jnp.float32)
                  + b_out).astype(o_ref.dtype)


def pack_slab(w_in, gamma, beta, w_out, b_out):
    """Pack all small params into one [R, C] f32 slab (8-row aligned sections)."""
    in_dim, C = w_in.shape
    L = gamma.shape[0]
    out_dim = w_out.shape[1]
    assert out_dim <= C
    r_gamma = _round_up(in_dim)
    r_beta = r_gamma + _round_up(L)
    r_wout = r_beta + _round_up(L)
    r_bout = r_wout + _round_up(C)
    total = r_bout + 8
    slab = jnp.zeros((total, C), jnp.float32)
    slab = slab.at[0:in_dim, :].set(w_in)
    slab = slab.at[r_gamma:r_gamma + L, :].set(gamma)
    slab = slab.at[r_beta:r_beta + L, :].set(beta)
    slab = slab.at[r_wout:r_wout + C, 0:out_dim].set(w_out)
    slab = slab.at[r_bout:r_bout + 1, 0:out_dim].set(b_out)
    return slab


def resnet_forward(x, params):
    args = (x, params["w_blk"], params["slab"])
    out_dim = params["w_out"].shape[1]
    out_shape = jax.ShapeDtypeStruct((x.shape[0], out_dim), jnp.float32)
    vmem_spec = lambda: pl.BlockSpec(memory_space=pltpu.MemorySpace.VMEM)
    return pl.pallas_call(
        resnet_kernel,
        in_specs=[vmem_spec() for _ in args],
        out_specs=vmem_spec(),
        out_shape=out_shape,
    )(*args)


# ---------------- parameter construction (matches PyTorch __init__/initialize) -------

def _kaiming_linear(key, fan_in, fan_out):
    # nn.init.kaiming_normal_(weight) on a (out, in) PyTorch weight: std = sqrt(2/fan_in)
    std = math.sqrt(2.0 / fan_in)
    w_pt = jax.random.normal(key, (fan_out, fan_in), jnp.float32) * std
    return w_pt.T  # stored as [in, out] so the kernel does h @ W


def _default_linear_bias(key, fan_in, fan_out):
    bound = 1.0 / math.sqrt(fan_in)
    return jax.random.uniform(key, (1, fan_out), jnp.float32, -bound, bound)


def init_params(key, input_dim=2, channels=20, blocknumber=10, output_dim=2):
    n_keys = 4 + 4 * blocknumber
    keys = iter(jax.random.split(key, n_keys))

    p = {}
    # stem Linear
    p["w_in"] = _kaiming_linear(next(keys), input_dim, channels)
    p["b_in"] = _default_linear_bias(next(keys), input_dim, channels)  # reference only

    # residual block Linears, packed as [2*B, C, C] (ln1, ln2 interleaved)
    w_blk, b_blk = [], []
    for _ in range(blocknumber):
        w_blk.append(_kaiming_linear(next(keys), channels, channels))
        b_blk.append(_default_linear_bias(next(keys), channels, channels))
        w_blk.append(_kaiming_linear(next(keys), channels, channels))
        b_blk.append(_default_linear_bias(next(keys), channels, channels))
    p["w_blk"] = jnp.stack(w_blk)                 # [2B, C, C]
    p["b_blk"] = jnp.stack(b_blk)                 # [2B, 1, C]  (reference only)

    # BN gamma=1 / beta=0 for stem + every block layer, as [L, C] row tables
    L = 2 * blocknumber + 1
    p["gamma"] = jnp.ones((L, channels), jnp.float32)
    p["beta"] = jnp.zeros((L, channels), jnp.float32)

    # classifier
    p["w_out"] = _kaiming_linear(next(keys), channels, output_dim)
    p["b_out"] = _default_linear_bias(next(keys), channels, output_dim)

    # single packed slab consumed by the kernel
    p["slab"] = pack_slab(p["w_in"], p["gamma"], p["beta"], p["w_out"], p["b_out"])
    return p


# ---------------- pure-JAX reference (full PyTorch semantics incl. pre-BN biases) ----

def resnet_reference(x, p):
    def linear_bn(h, w, b, g, be):
        y = h @ w + b
        mean = jnp.mean(y, axis=0, keepdims=True)
        var = jnp.mean((y - mean) ** 2, axis=0, keepdims=True)
        return (y - mean) / jnp.sqrt(var + EPS) * g + be

    g, be = p["gamma"], p["beta"]
    h = jnp.maximum(linear_bn(x, p["w_in"], p["b_in"], g[0:1], be[0:1]), 0.0)
    n_blocks = p["w_blk"].shape[0] // 2
    for i in range(n_blocks):
        res = h
        out = jnp.maximum(
            linear_bn(h, p["w_blk"][2 * i], p["b_blk"][2 * i],
                      g[1 + 2 * i:2 + 2 * i], be[1 + 2 * i:2 + 2 * i]), 0.0)
        out = linear_bn(out, p["w_blk"][2 * i + 1], p["b_blk"][2 * i + 1],
                        g[2 + 2 * i:3 + 2 * i], be[2 + 2 * i:3 + 2 * i])
        h = jnp.maximum(out + res, 0.0)
    return h @ p["w_out"] + p["b_out"]


if __name__ == "__main__":
    key = jax.random.PRNGKey(0)
    k_params, k_x = jax.random.split(key)

    batch, input_dim, channels, blocks, output_dim = 8, 2, 20, 10, 2
    params = init_params(k_params, input_dim, channels, blocks, output_dim)
    x = jax.random.normal(k_x, (batch, input_dim), jnp.float32)

    out = resnet_forward(x, params)
    out = jax.block_until_ready(out)

    ref = resnet_reference(x, params)
    assert out.shape == (batch, output_dim)
    assert jnp.allclose(out, ref, atol=1e-4, rtol=1e-4), "mismatch vs reference"

    print("KERNEL_OK")
</pallas_src>

<mosaic_0001>
module attributes {stable_mosaic.version = 11 : i64} {
  func.func @resnet_kernel(%arg0: memref<8x2xf32, #tpu.memory_space<vmem>>, %arg1: memref<20x20x20xf32, #tpu.memory_space<vmem>>, %arg2: memref<88x20xf32, #tpu.memory_space<vmem>>, %arg3: memref<8x2xf32, #tpu.memory_space<vmem>>) attributes {dimension_semantics = [], scalar_prefetch = 0 : i64, scratch_operands = 0 : i64, tpu.core_type = #tpu.core_type<tc>} {
    %c0 = arith.constant 0 : index
    %c0_0 = arith.constant 0 : index
    %0 = vector.load %arg0[%c0, %c0_0] : memref<8x2xf32, #tpu.memory_space<vmem>>, vector<8x2xf32>
    %c0_1 = arith.constant 0 : index
    %c0_2 = arith.constant 0 : index
    %1 = vector.load %arg2[%c0_1, %c0_2] : memref<88x20xf32, #tpu.memory_space<vmem>>, vector<2x20xf32>
    %cst = arith.constant dense<0.000000e+00> : vector<8x20xf32>
    %2 = tpu.matmul %0, %1, %cst {dimension_numbers = #tpu.dot_dimension_numbers<[1], [0], [0], [1], [0, 0, 1, 1], [], []>} : vector<8x2xf32>, vector<2x20xf32>, vector<8x20xf32> -> vector<8x20xf32>
    %3 = arith.mulf %2, %2 : vector<8x20xf32>
    %4 = tpu.concatenate %2, %3 in 1 : vector<8x20xf32>, vector<8x20xf32> -> vector<8x40xf32>
    %cst_3 = arith.constant dense<0.000000e+00> : vector<40xf32>
    %5 = vector.multi_reduction <add>, %4, %cst_3 [0] : vector<8x40xf32> to vector<40xf32>
    %6 = vector.shape_cast %5 : vector<40xf32> to vector<1x40xf32>
    %cst_4 = arith.constant 1.250000e-01 : f32
    %7 = vector.broadcast %cst_4 : f32 to vector<1x40xf32>
    %8 = arith.mulf %6, %7 : vector<1x40xf32>
    %9 = vector.extract_strided_slice %8 {offsets = [0, 0], sizes = [1, 20], strides = [1, 1]} : vector<1x40xf32> to vector<1x20xf32>
    %10 = vector.extract_strided_slice %8 {offsets = [0, 20], sizes = [1, 20], strides = [1, 1]} : vector<1x40xf32> to vector<1x20xf32>
    %11 = arith.mulf %9, %9 : vector<1x20xf32>
    %12 = arith.subf %10, %11 : vector<1x20xf32>
    %cst_5 = arith.constant 0.000000e+00 : f32
    %13 = vector.broadcast %cst_5 : f32 to vector<1x20xf32>
    %14 = arith.maximumf %12, %13 : vector<1x20xf32>
    %c8 = arith.constant 8 : index
    %c0_6 = arith.constant 0 : index
    %15 = vector.load %arg2[%c8, %c0_6] : memref<88x20xf32, #tpu.memory_space<vmem>>, vector<1x20xf32>
    %c32 = arith.constant 32 : index
    %c0_7 = arith.constant 0 : index
    %16 = vector.load %arg2[%c32, %c0_7] : memref<88x20xf32, #tpu.memory_space<vmem>>, vector<1x20xf32>
    %cst_8 = arith.constant 9.99999974E-6 : f32
    %17 = vector.broadcast %cst_8 : f32 to vector<1x20xf32>
    %18 = arith.addf %14, %17 : vector<1x20xf32>
    %19 = math.rsqrt %18 : vector<1x20xf32>
    %20 = arith.mulf %15, %19 : vector<1x20xf32>
    %21 = arith.mulf %9, %20 : vector<1x20xf32>
    %22 = arith.subf %16, %21 : vector<1x20xf32>
    %23 = vector.broadcast %20 : vector<1x20xf32> to vector<8x20xf32>
    %24 = arith.mulf %2, %23 : vector<8x20xf32>
    %25 = vector.broadcast %22 : vector<1x20xf32> to vector<8x20xf32>
    %26 = arith.addf %24, %25 : vector<8x20xf32>
    %cst_9 = arith.constant 0.000000e+00 : f32
    %27 = vector.broadcast %cst_9 : f32 to vector<8x20xf32>
    %28 = arith.maximumf %26, %27 : vector<8x20xf32>
    %c0_10 = arith.constant 0 : index
    %c0_11 = arith.constant 0 : index
    %c0_12 = arith.constant 0 : index
    %29 = vector.load %arg1[%c0_10, %c0_11, %c0_12] : memref<20x20x20xf32, #tpu.memory_space<vmem>>, vector<1x20x20xf32>
    %30 = vector.shape_cast %29 : vector<1x20x20xf32> to vector<20x20xf32>
    %cst_13 = arith.constant dense<0.000000e+00> : vector<8x20xf32>
    %31 = tpu.matmul %28, %30, %cst_13 {dimension_numbers = #tpu.dot_dimension_numbers<[1], [0], [0], [1], [0, 0, 1, 1], [], []>} : vector<8x20xf32>, vector<20x20xf32>, vector<8x20xf32> -> vector<8x20xf32>
    %32 = arith.mulf %31, %31 : vector<8x20xf32>
    %33 = tpu.concatenate %31, %32 in 1 : vector<8x20xf32>, vector<8x20xf32> -> vector<8x40xf32>
    %cst_14 = arith.constant dense<0.000000e+00> : vector<40xf32>
    %34 = vector.multi_reduction <add>, %33, %cst_14 [0] : vector<8x40xf32> to vector<40xf32>
    %35 = vector.shape_cast %34 : vector<40xf32> to vector<1x40xf32>
    %cst_15 = arith.constant 1.250000e-01 : f32
    %36 = vector.broadcast %cst_15 : f32 to vector<1x40xf32>
    %37 = arith.mulf %35, %36 : vector<1x40xf32>
    %38 = vector.extract_strided_slice %37 {offsets = [0, 0], sizes = [1, 20], strides = [1, 1]} : vector<1x40xf32> to vector<1x20xf32>
    %39 = vector.extract_strided_slice %37 {offsets = [0, 20], sizes = [1, 20], strides = [1, 1]} : vector<1x40xf32> to vector<1x20xf32>
    %40 = arith.mulf %38, %38 : vector<1x20xf32>
    %41 = arith.subf %39, %40 : vector<1x20xf32>
    %cst_16 = arith.constant 0.000000e+00 : f32
    %42 = vector.broadcast %cst_16 : f32 to vector<1x20xf32>
    %43 = arith.maximumf %41, %42 : vector<1x20xf32>
    %c9 = arith.constant 9 : index
    %c0_17 = arith.constant 0 : index
    %44 = vector.load %arg2[%c9, %c0_17] : memref<88x20xf32, #tpu.memory_space<vmem>>, vector<1x20xf32>
    %c33 = arith.constant 33 : index
    %c0_18 = arith.constant 0 : index
    %45 = vector.load %arg2[%c33, %c0_18] : memref<88x20xf32, #tpu.memory_space<vmem>>, vector<1x20xf32>
    %cst_19 = arith.constant 9.99999974E-6 : f32
    %46 = vector.broadcast %cst_19 : f32 to vector<1x20xf32>
    %47 = arith.addf %43, %46 : vector<1x20xf32>
    %48 = math.rsqrt %47 : vector<1x20xf32>
    %49 = arith.mulf %44, %48 : vector<1x20xf32>
    %50 = arith.mulf %38, %49 : vector<1x20xf32>
    %51 = arith.subf %45, %50 : vector<1x20xf32>
    %52 = vector.broadcast %49 : vector<1x20xf32> to vector<8x20xf32>
    %53 = arith.mulf %31, %52 : vector<8x20xf32>
    %54 = vector.broadcast %51 : vector<1x20xf32> to vector<8x20xf32>
    %55 = arith.addf %53, %54 : vector<8x20xf32>
    %cst_20 = arith.constant 0.000000e+00 : f32
    %56 = vector.broadcast %cst_20 : f32 to vector<8x20xf32>
    %57 = arith.maximumf %55, %56 : vector<8x20xf32>
    %c1 = arith.constant 1 : index
    %c0_21 = arith.constant 0 : index
    %c0_22 = arith.constant 0 : index
    %58 = vector.load %arg1[%c1, %c0_21, %c0_22] : memref<20x20x20xf32, #tpu.memory_space<vmem>>, vector<1x20x20xf32>
    %59 = vector.shape_cast %58 : vector<1x20x20xf32> to vector<20x20xf32>
    %cst_23 = arith.constant dense<0.000000e+00> : vector<8x20xf32>
    %60 = tpu.matmul %57, %59, %cst_23 {dimension_numbers = #tpu.dot_dimension_numbers<[1], [0], [0], [1], [0, 0, 1, 1], [], []>} : vector<8x20xf32>, vector<20x20xf32>, vector<8x20xf32> -> vector<8x20xf32>
    %61 = arith.mulf %60, %60 : vector<8x20xf32>
    %62 = tpu.concatenate %60, %61 in 1 : vector<8x20xf32>, vector<8x20xf32> -> vector<8x40xf32>
    %cst_24 = arith.constant dense<0.000000e+00> : vector<40xf32>
    %63 = vector.multi_reduction <add>, %62, %cst_24 [0] : vector<8x40xf32> to vector<40xf32>
    %64 = vector.shape_cast %63 : vector<40xf32> to vector<1x40xf32>
    %cst_25 = arith.constant 1.250000e-01 : f32
    %65 = vector.broadcast %cst_25 : f32 to vector<1x40xf32>
    %66 = arith.mulf %64, %65 : vector<1x40xf32>
    %67 = vector.extract_strided_slice %66 {offsets = [0, 0], sizes = [1, 20], strides = [1, 1]} : vector<1x40xf32> to vector<1x20xf32>
    %68 = vector.extract_strided_slice %66 {offsets = [0, 20], sizes = [1, 20], strides = [1, 1]} : vector<1x40xf32> to vector<1x20xf32>
    %69 = arith.mulf %67, %67 : vector<1x20xf32>
    %70 = arith.subf %68, %69 : vector<1x20xf32>
    %cst_26 = arith.constant 0.000000e+00 : f32
    %71 = vector.broadcast %cst_26 : f32 to vector<1x20xf32>
    %72 = arith.maximumf %70, %71 : vector<1x20xf32>
    %c10 = arith.constant 10 : index
    %c0_27 = arith.constant 0 : index
    %73 = vector.load %arg2[%c10, %c0_27] : memref<88x20xf32, #tpu.memory_space<vmem>>, vector<1x20xf32>
    %c34 = arith.constant 34 : index
    %c0_28 = arith.constant 0 : index
    %74 = vector.load %arg2[%c34, %c0_28] : memref<88x20xf32, #tpu.memory_space<vmem>>, vector<1x20xf32>
    %cst_29 = arith.constant 9.99999974E-6 : f32
    %75 = vector.broadcast %cst_29 : f32 to vector<1x20xf32>
    %76 = arith.addf %72, %75 : vector<1x20xf32>
    %77 = math.rsqrt %76 : vector<1x20xf32>
    %78 = arith.mulf %73, %77 : vector<1x20xf32>
    %79 = arith.mulf %67, %78 : vector<1x20xf32>
    %80 = arith.subf %74, %79 : vector<1x20xf32>
    %81 = vector.broadcast %78 : vector<1x20xf32> to vector<8x20xf32>
    %82 = arith.mulf %60, %81 : vector<8x20xf32>
    %83 = vector.broadcast %80 : vector<1x20xf32> to vector<8x20xf32>
    %84 = arith.addf %82, %83 : vector<8x20xf32>
    %85 = arith.addf %84, %28 : vector<8x20xf32>
    %cst_30 = arith.constant 0.000000e+00 : f32
    %86 = vector.broadcast %cst_30 : f32 to vector<8x20xf32>
    %87 = arith.maximumf %85, %86 : vector<8x20xf32>
    %c2 = arith.constant 2 : index
    %c0_31 = arith.constant 0 : index
    %c0_32 = arith.constant 0 : index
    %88 = vector.load %arg1[%c2, %c0_31, %c0_32] : memref<20x20x20xf32, #tpu.memory_space<vmem>>, vector<1x20x20xf32>
    %89 = vector.shape_cast %88 : vector<1x20x20xf32> to vector<20x20xf32>
    %cst_33 = arith.constant dense<0.000000e+00> : vector<8x20xf32>
    %90 = tpu.matmul %87, %89, %cst_33 {dimension_numbers = #tpu.dot_dimension_numbers<[1], [0], [0], [1], [0, 0, 1, 1], [], []>} : vector<8x20xf32>, vector<20x20xf32>, vector<8x20xf32> -> vector<8x20xf32>
    %91 = arith.mulf %90, %90 : vector<8x20xf32>
    %92 = tpu.concatenate %90, %91 in 1 : vector<8x20xf32>, vector<8x20xf32> -> vector<8x40xf32>
    %cst_34 = arith.constant dense<0.000000e+00> : vector<40xf32>
    %93 = vector.multi_reduction <add>, %92, %cst_34 [0] : vector<8x40xf32> to vector<40xf32>
    %94 = vector.shape_cast %93 : vector<40xf32> to vector<1x40xf32>
    %cst_35 = arith.constant 1.250000e-01 : f32
    %95 = vector.broadcast %cst_35 : f32 to vector<1x40xf32>
    %96 = arith.mulf %94, %95 : vector<1x40xf32>
    %97 = vector.extract_strided_slice %96 {offsets = [0, 0], sizes = [1, 20], strides = [1, 1]} : vector<1x40xf32> to vector<1x20xf32>
    %98 = vector.extract_strided_slice %96 {offsets = [0, 20], sizes = [1, 20], strides = [1, 1]} : vector<1x40xf32> to vector<1x20xf32>
    %99 = arith.mulf %97, %97 : vector<1x20xf32>
    %100 = arith.subf %98, %99 : vector<1x20xf32>
    %cst_36 = arith.constant 0.000000e+00 : f32
    %101 = vector.broadcast %cst_36 : f32 to vector<1x20xf32>
    %102 = arith.maximumf %100, %101 : vector<1x20xf32>
    %c11 = arith.constant 11 : index
    %c0_37 = arith.constant 0 : index
    %103 = vector.load %arg2[%c11, %c0_37] : memref<88x20xf32, #tpu.memory_space<vmem>>, vector<1x20xf32>
    %c35 = arith.constant 35 : index
    %c0_38 = arith.constant 0 : index
    %104 = vector.load %arg2[%c35, %c0_38] : memref<88x20xf32, #tpu.memory_space<vmem>>, vector<1x20xf32>
    %cst_39 = arith.constant 9.99999974E-6 : f32
    %105 = vector.broadcast %cst_39 : f32 to vector<1x20xf32>
    %106 = arith.addf %102, %105 : vector<1x20xf32>
    %107 = math.rsqrt %106 : vector<1x20xf32>
    %108 = arith.mulf %103, %107 : vector<1x20xf32>
    %109 = arith.mulf %97, %108 : vector<1x20xf32>
    %110 = arith.subf %104, %109 : vector<1x20xf32>
    %111 = vector.broadcast %108 : vector<1x20xf32> to vector<8x20xf32>
    %112 = arith.mulf %90, %111 : vector<8x20xf32>
    %113 = vector.broadcast %110 : vector<1x20xf32> to vector<8x20xf32>
    %114 = arith.addf %112, %113 : vector<8x20xf32>
    %cst_40 = arith.constant 0.000000e+00 : f32
    %115 = vector.broadcast %cst_40 : f32 to vector<8x20xf32>
    %116 = arith.maximumf %114, %115 : vector<8x20xf32>
    %c3 = arith.constant 3 : index
    %c0_41 = arith.constant 0 : index
    %c0_42 = arith.constant 0 : index
    %117 = vector.load %arg1[%c3, %c0_41, %c0_42] : memref<20x20x20xf32, #tpu.memory_space<vmem>>, vector<1x20x20xf32>
    %118 = vector.shape_cast %117 : vector<1x20x20xf32> to vector<20x20xf32>
    %cst_43 = arith.constant dense<0.000000e+00> : vector<8x20xf32>
    %119 = tpu.matmul %116, %118, %cst_43 {dimension_numbers = #tpu.dot_dimension_numbers<[1], [0], [0], [1], [0, 0, 1, 1], [], []>} : vector<8x20xf32>, vector<20x20xf32>, vector<8x20xf32> -> vector<8x20xf32>
    %120 = arith.mulf %119, %119 : vector<8x20xf32>
    %121 = tpu.concatenate %119, %120 in 1 : vector<8x20xf32>, vector<8x20xf32> -> vector<8x40xf32>
    %cst_44 = arith.constant dense<0.000000e+00> : vector<40xf32>
    %122 = vector.multi_reduction <add>, %121, %cst_44 [0] : vector<8x40xf32> to vector<40xf32>
    %123 = vector.shape_cast %122 : vector<40xf32> to vector<1x40xf32>
    %cst_45 = arith.constant 1.250000e-01 : f32
    %124 = vector.broadcast %cst_45 : f32 to vector<1x40xf32>
    %125 = arith.mulf %123, %124 : vector<1x40xf32>
    %126 = vector.extract_strided_slice %125 {offsets = [0, 0], sizes = [1, 20], strides = [1, 1]} : vector<1x40xf32> to vector<1x20xf32>
    %127 = vector.extract_strided_slice %125 {offsets = [0, 20], sizes = [1, 20], strides = [1, 1]} : vector<1x40xf32> to vector<1x20xf32>
    %128 = arith.mulf %126, %126 : vector<1x20xf32>
    %129 = arith.subf %127, %128 : vector<1x20xf32>
    %cst_46 = arith.constant 0.000000e+00 : f32
    %130 = vector.broadcast %cst_46 : f32 to vector<1x20xf32>
    %131 = arith.maximumf %129, %130 : vector<1x20xf32>
    %c12 = arith.constant 12 : index
    %c0_47 = arith.constant 0 : index
    %132 = vector.load %arg2[%c12, %c0_47] : memref<88x20xf32, #tpu.memory_space<vmem>>, vector<1x20xf32>
    %c36 = arith.constant 36 : index
    %c0_48 = arith.constant 0 : index
    %133 = vector.load %arg2[%c36, %c0_48] : memref<88x20xf32, #tpu.memory_space<vmem>>, vector<1x20xf32>
    %cst_49 = arith.constant 9.99999974E-6 : f32
    %134 = vector.broadcast %cst_49 : f32 to vector<1x20xf32>
    %135 = arith.addf %131, %134 : vector<1x20xf32>
    %136 = math.rsqrt %135 : vector<1x20xf32>
    %137 = arith.mulf %132, %136 : vector<1x20xf32>
    %138 = arith.mulf %126, %137 : vector<1x20xf32>
    %139 = arith.subf %133, %138 : vector<1x20xf32>
    %140 = vector.broadcast %137 : vector<1x20xf32> to vector<8x20xf32>
    %141 = arith.mulf %119, %140 : vector<8x20xf32>
    %142 = vector.broadcast %139 : vector<1x20xf32> to vector<8x20xf32>
    %143 = arith.addf %141, %142 : vector<8x20xf32>
    %144 = arith.addf %143, %87 : vector<8x20xf32>
    %cst_50 = arith.constant 0.000000e+00 : f32
    %145 = vector.broadcast %cst_50 : f32 to vector<8x20xf32>
    %146 = arith.maximumf %144, %145 : vector<8x20xf32>
    %c4 = arith.constant 4 : index
    %c0_51 = arith.constant 0 : index
    %c0_52 = arith.constant 0 : index
    %147 = vector.load %arg1[%c4, %c0_51, %c0_52] : memref<20x20x20xf32, #tpu.memory_space<vmem>>, vector<1x20x20xf32>
    %148 = vector.shape_cast %147 : vector<1x20x20xf32> to vector<20x20xf32>
    %cst_53 = arith.constant dense<0.000000e+00> : vector<8x20xf32>
    %149 = tpu.matmul %146, %148, %cst_53 {dimension_numbers = #tpu.dot_dimension_numbers<[1], [0], [0], [1], [0, 0, 1, 1], [], []>} : vector<8x20xf32>, vector<20x20xf32>, vector<8x20xf32> -> vector<8x20xf32>
    %150 = arith.mulf %149, %149 : vector<8x20xf32>
    %151 = tpu.concatenate %149, %150 in 1 : vector<8x20xf32>, vector<8x20xf32> -> vector<8x40xf32>
    %cst_54 = arith.constant dense<0.000000e+00> : vector<40xf32>
    %152 = vector.multi_reduction <add>, %151, %cst_54 [0] : vector<8x40xf32> to vector<40xf32>
    %153 = vector.shape_cast %152 : vector<40xf32> to vector<1x40xf32>
    %cst_55 = arith.constant 1.250000e-01 : f32
    %154 = vector.broadcast %cst_55 : f32 to vector<1x40xf32>
    %155 = arith.mulf %153, %154 : vector<1x40xf32>
    %156 = vector.extract_strided_slice %155 {offsets = [0, 0], sizes = [1, 20], strides = [1, 1]} : vector<1x40xf32> to vector<1x20xf32>
    %157 = vector.extract_strided_slice %155 {offsets = [0, 20], sizes = [1, 20], strides = [1, 1]} : vector<1x40xf32> to vector<1x20xf32>
    %158 = arith.mulf %156, %156 : vector<1x20xf32>
    %159 = arith.subf %157, %158 : vector<1x20xf32>
    %cst_56 = arith.constant 0.000000e+00 : f32
    %160 = vector.broadcast %cst_56 : f32 to vector<1x20xf32>
    %161 = arith.maximumf %159, %160 : vector<1x20xf32>
    %c13 = arith.constant 13 : index
    %c0_57 = arith.constant 0 : index
    %162 = vector.load %arg2[%c13, %c0_57] : memref<88x20xf32, #tpu.memory_space<vmem>>, vector<1x20xf32>
    %c37 = arith.constant 37 : index
    %c0_58 = arith.constant 0 : index
    %163 = vector.load %arg2[%c37, %c0_58] : memref<88x20xf32, #tpu.memory_space<vmem>>, vector<1x20xf32>
    %cst_59 = arith.constant 9.99999974E-6 : f32
    %164 = vector.broadcast %cst_59 : f32 to vector<1x20xf32>
    %165 = arith.addf %161, %164 : vector<1x20xf32>
    %166 = math.rsqrt %165 : vector<1x20xf32>
    %167 = arith.mulf %162, %166 : vector<1x20xf32>
    %168 = arith.mulf %156, %167 : vector<1x20xf32>
    %169 = arith.subf %163, %168 : vector<1x20xf32>
    %170 = vector.broadcast %167 : vector<1x20xf32> to vector<8x20xf32>
    %171 = arith.mulf %149, %170 : vector<8x20xf32>
    %172 = vector.broadcast %169 : vector<1x20xf32> to vector<8x20xf32>
    %173 = arith.addf %171, %172 : vector<8x20xf32>
    %cst_60 = arith.constant 0.000000e+00 : f32
    %174 = vector.broadcast %cst_60 : f32 to vector<8x20xf32>
    %175 = arith.maximumf %173, %174 : vector<8x20xf32>
    %c5 = arith.constant 5 : index
    %c0_61 = arith.constant 0 : index
    %c0_62 = arith.constant 0 : index
    %176 = vector.load %arg1[%c5, %c0_61, %c0_62] : memref<20x20x20xf32, #tpu.memory_space<vmem>>, vector<1x20x20xf32>
    %177 = vector.shape_cast %176 : vector<1x20x20xf32> to vector<20x20xf32>
    %cst_63 = arith.constant dense<0.000000e+00> : vector<8x20xf32>
    %178 = tpu.matmul %175, %177, %cst_63 {dimension_numbers = #tpu.dot_dimension_numbers<[1], [0], [0], [1], [0, 0, 1, 1], [], []>} : vector<8x20xf32>, vector<20x20xf32>, vector<8x20xf32> -> vector<8x20xf32>
    %179 = arith.mulf %178, %178 : vector<8x20xf32>
    %180 = tpu.concatenate %178, %179 in 1 : vector<8x20xf32>, vector<8x20xf32> -> vector<8x40xf32>
    %cst_64 = arith.constant dense<0.000000e+00> : vector<40xf32>
    %181 = vector.multi_reduction <add>, %180, %cst_64 [0] : vector<8x40xf32> to vector<40xf32>
    %182 = vector.shape_cast %181 : vector<40xf32> to vector<1x40xf32>
    %cst_65 = arith.constant 1.250000e-01 : f32
    %183 = vector.broadcast %cst_65 : f32 to vector<1x40xf32>
    %184 = arith.mulf %182, %183 : vector<1x40xf32>
    %185 = vector.extract_strided_slice %184 {offsets = [0, 0], sizes = [1, 20], strides = [1, 1]} : vector<1x40xf32> to vector<1x20xf32>
    %186 = vector.extract_strided_slice %184 {offsets = [0, 20], sizes = [1, 20], strides = [1, 1]} : vector<1x40xf32> to vector<1x20xf32>
    %187 = arith.mulf %185, %185 : vector<1x20xf32>
    %188 = arith.subf %186, %187 : vector<1x20xf32>
    %cst_66 = arith.constant 0.000000e+00 : f32
    %189 = vector.broadcast %cst_66 : f32 to vector<1x20xf32>
    %190 = arith.maximumf %188, %189 : vector<1x20xf32>
    %c14 = arith.constant 14 : index
    %c0_67 = arith.constant 0 : index
    %191 = vector.load %arg2[%c14, %c0_67] : memref<88x20xf32, #tpu.memory_space<vmem>>, vector<1x20xf32>
    %c38 = arith.constant 38 : index
    %c0_68 = arith.constant 0 : index
    %192 = vector.load %arg2[%c38, %c0_68] : memref<88x20xf32, #tpu.memory_space<vmem>>, vector<1x20xf32>
    %cst_69 = arith.constant 9.99999974E-6 : f32
    %193 = vector.broadcast %cst_69 : f32 to vector<1x20xf32>
    %194 = arith.addf %190, %193 : vector<1x20xf32>
    %195 = math.rsqrt %194 : vector<1x20xf32>
    %196 = arith.mulf %191, %195 : vector<1x20xf32>
    %197 = arith.mulf %185, %196 : vector<1x20xf32>
    %198 = arith.subf %192, %197 : vector<1x20xf32>
    %199 = vector.broadcast %196 : vector<1x20xf32> to vector<8x20xf32>
    %200 = arith.mulf %178, %199 : vector<8x20xf32>
    %201 = vector.broadcast %198 : vector<1x20xf32> to vector<8x20xf32>
    %202 = arith.addf %200, %201 : vector<8x20xf32>
    %203 = arith.addf %202, %146 : vector<8x20xf32>
    %cst_70 = arith.constant 0.000000e+00 : f32
    %204 = vector.broadcast %cst_70 : f32 to vector<8x20xf32>
    %205 = arith.maximumf %203, %204 : vector<8x20xf32>
    %c6 = arith.constant 6 : index
    %c0_71 = arith.constant 0 : index
    %c0_72 = arith.constant 0 : index
    %206 = vector.load %arg1[%c6, %c0_71, %c0_72] : memref<20x20x20xf32, #tpu.memory_space<vmem>>, vector<1x20x20xf32>
    %207 = vector.shape_cast %206 : vector<1x20x20xf32> to vector<20x20xf32>
    %cst_73 = arith.constant dense<0.000000e+00> : vector<8x20xf32>
    %208 = tpu.matmul %205, %207, %cst_73 {dimension_numbers = #tpu.dot_dimension_numbers<[1], [0], [0], [1], [0, 0, 1, 1], [], []>} : vector<8x20xf32>, vector<20x20xf32>, vector<8x20xf32> -> vector<8x20xf32>
    %209 = arith.mulf %208, %208 : vector<8x20xf32>
    %210 = tpu.concatenate %208, %209 in 1 : vector<8x20xf32>, vector<8x20xf32> -> vector<8x40xf32>
    %cst_74 = arith.constant dense<0.000000e+00> : vector<40xf32>
    %211 = vector.multi_reduction <add>, %210, %cst_74 [0] : vector<8x40xf32> to vector<40xf32>
    %212 = vector.shape_cast %211 : vector<40xf32> to vector<1x40xf32>
    %cst_75 = arith.constant 1.250000e-01 : f32
    %213 = vector.broadcast %cst_75 : f32 to vector<1x40xf32>
    %214 = arith.mulf %212, %213 : vector<1x40xf32>
    %215 = vector.extract_strided_slice %214 {offsets = [0, 0], sizes = [1, 20], strides = [1, 1]} : vector<1x40xf32> to vector<1x20xf32>
    %216 = vector.extract_strided_slice %214 {offsets = [0, 20], sizes = [1, 20], strides = [1, 1]} : vector<1x40xf32> to vector<1x20xf32>
    %217 = arith.mulf %215, %215 : vector<1x20xf32>
    %218 = arith.subf %216, %217 : vector<1x20xf32>
    %cst_76 = arith.constant 0.000000e+00 : f32
    %219 = vector.broadcast %cst_76 : f32 to vector<1x20xf32>
    %220 = arith.maximumf %218, %219 : vector<1x20xf32>
    %c15 = arith.constant 15 : index
    %c0_77 = arith.constant 0 : index
    %221 = vector.load %arg2[%c15, %c0_77] : memref<88x20xf32, #tpu.memory_space<vmem>>, vector<1x20xf32>
    %c39 = arith.constant 39 : index
    %c0_78 = arith.constant 0 : index
    %222 = vector.load %arg2[%c39, %c0_78] : memref<88x20xf32, #tpu.memory_space<vmem>>, vector<1x20xf32>
    %cst_79 = arith.constant 9.99999974E-6 : f32
    %223 = vector.broadcast %cst_79 : f32 to vector<1x20xf32>
    %224 = arith.addf %220, %223 : vector<1x20xf32>
    %225 = math.rsqrt %224 : vector<1x20xf32>
    %226 = arith.mulf %221, %225 : vector<1x20xf32>
    %227 = arith.mulf %215, %226 : vector<1x20xf32>
    %228 = arith.subf %222, %227 : vector<1x20xf32>
    %229 = vector.broadcast %226 : vector<1x20xf32> to vector<8x20xf32>
    %230 = arith.mulf %208, %229 : vector<8x20xf32>
    %231 = vector.broadcast %228 : vector<1x20xf32> to vector<8x20xf32>
    %232 = arith.addf %230, %231 : vector<8x20xf32>
    %cst_80 = arith.constant 0.000000e+00 : f32
    %233 = vector.broadcast %cst_80 : f32 to vector<8x20xf32>
    %234 = arith.maximumf %232, %233 : vector<8x20xf32>
    %c7 = arith.constant 7 : index
    %c0_81 = arith.constant 0 : index
    %c0_82 = arith.constant 0 : index
    %235 = vector.load %arg1[%c7, %c0_81, %c0_82] : memref<20x20x20xf32, #tpu.memory_space<vmem>>, vector<1x20x20xf32>
    %236 = vector.shape_cast %235 : vector<1x20x20xf32> to vector<20x20xf32>
    %cst_83 = arith.constant dense<0.000000e+00> : vector<8x20xf32>
    %237 = tpu.matmul %234, %236, %cst_83 {dimension_numbers = #tpu.dot_dimension_numbers<[1], [0], [0], [1], [0, 0, 1, 1], [], []>} : vector<8x20xf32>, vector<20x20xf32>, vector<8x20xf32> -> vector<8x20xf32>
    %238 = arith.mulf %237, %237 : vector<8x20xf32>
    %239 = tpu.concatenate %237, %238 in 1 : vector<8x20xf32>, vector<8x20xf32> -> vector<8x40xf32>
    %cst_84 = arith.constant dense<0.000000e+00> : vector<40xf32>
    %240 = vector.multi_reduction <add>, %239, %cst_84 [0] : vector<8x40xf32> to vector<40xf32>
    %241 = vector.shape_cast %240 : vector<40xf32> to vector<1x40xf32>
    %cst_85 = arith.constant 1.250000e-01 : f32
    %242 = vector.broadcast %cst_85 : f32 to vector<1x40xf32>
    %243 = arith.mulf %241, %242 : vector<1x40xf32>
    %244 = vector.extract_strided_slice %243 {offsets = [0, 0], sizes = [1, 20], strides = [1, 1]} : vector<1x40xf32> to vector<1x20xf32>
    %245 = vector.extract_strided_slice %243 {offsets = [0, 20], sizes = [1, 20], strides = [1, 1]} : vector<1x40xf32> to vector<1x20xf32>
    %246 = arith.mulf %244, %244 : vector<1x20xf32>
    %247 = arith.subf %245, %246 : vector<1x20xf32>
    %cst_86 = arith.constant 0.000000e+00 : f32
    %248 = vector.broadcast %cst_86 : f32 to vector<1x20xf32>
    %249 = arith.maximumf %247, %248 : vector<1x20xf32>
    %c16 = arith.constant 16 : index
    %c0_87 = arith.constant 0 : index
    %250 = vector.load %arg2[%c16, %c0_87] : memref<88x20xf32, #tpu.memory_space<vmem>>, vector<1x20xf32>
    %c40 = arith.constant 40 : index
    %c0_88 = arith.constant 0 : index
    %251 = vector.load %arg2[%c40, %c0_88] : memref<88x20xf32, #tpu.memory_space<vmem>>, vector<1x20xf32>
    %cst_89 = arith.constant 9.99999974E-6 : f32
    %252 = vector.broadcast %cst_89 : f32 to vector<1x20xf32>
    %253 = arith.addf %249, %252 : vector<1x20xf32>
    %254 = math.rsqrt %253 : vector<1x20xf32>
    %255 = arith.mulf %250, %254 : vector<1x20xf32>
    %256 = arith.mulf %244, %255 : vector<1x20xf32>
    %257 = arith.subf %251, %256 : vector<1x20xf32>
    %258 = vector.broadcast %255 : vector<1x20xf32> to vector<8x20xf32>
    %259 = arith.mulf %237, %258 : vector<8x20xf32>
    %260 = vector.broadcast %257 : vector<1x20xf32> to vector<8x20xf32>
    %261 = arith.addf %259, %260 : vector<8x20xf32>
    %262 = arith.addf %261, %205 : vector<8x20xf32>
    %cst_90 = arith.constant 0.000000e+00 : f32
    %263 = vector.broadcast %cst_90 : f32 to vector<8x20xf32>
    %264 = arith.maximumf %262, %263 : vector<8x20xf32>
    %c8_91 = arith.constant 8 : index
    %c0_92 = arith.constant 0 : index
    %c0_93 = arith.constant 0 : index
    %265 = vector.load %arg1[%c8_91, %c0_92, %c0_93] : memref<20x20x20xf32, #tpu.memory_space<vmem>>, vector<1x20x20xf32>
    %266 = vector.shape_cast %265 : vector<1x20x20xf32> to vector<20x20xf32>
    %cst_94 = arith.constant dense<0.000000e+00> : vector<8x20xf32>
    %267 = tpu.matmul %264, %266, %cst_94 {dimension_numbers = #tpu.dot_dimension_numbers<[1], [0], [0], [1], [0, 0, 1, 1], [], []>} : vector<8x20xf32>, vector<20x20xf32>, vector<8x20xf32> -> vector<8x20xf32>
    %268 = arith.mulf %267, %267 : vector<8x20xf32>
    %269 = tpu.concatenate %267, %268 in 1 : vector<8x20xf32>, vector<8x20xf32> -> vector<8x40xf32>
    %cst_95 = arith.constant dense<0.000000e+00> : vector<40xf32>
    %270 = vector.multi_reduction <add>, %269, %cst_95 [0] : vector<8x40xf32> to vector<40xf32>
    %271 = vector.shape_cast %270 : vector<40xf32> to vector<1x40xf32>
    %cst_96 = arith.constant 1.250000e-01 : f32
    %272 = vector.broadcast %cst_96 : f32 to vector<1x40xf32>
    %273 = arith.mulf %271, %272 : vector<1x40xf32>
    %274 = vector.extract_strided_slice %273 {offsets = [0, 0], sizes = [1, 20], strides = [1, 1]} : vector<1x40xf32> to vector<1x20xf32>
    %275 = vector.extract_strided_slice %273 {offsets = [0, 20], sizes = [1, 20], strides = [1, 1]} : vector<1x40xf32> to vector<1x20xf32>
    %276 = arith.mulf %274, %274 : vector<1x20xf32>
    %277 = arith.subf %275, %276 : vector<1x20xf32>
    %cst_97 = arith.constant 0.000000e+00 : f32
    %278 = vector.broadcast %cst_97 : f32 to vector<1x20xf32>
    %279 = arith.maximumf %277, %278 : vector<1x20xf32>
    %c17 = arith.constant 17 : index
    %c0_98 = arith.constant 0 : index
    %280 = vector.load %arg2[%c17, %c0_98] : memref<88x20xf32, #tpu.memory_space<vmem>>, vector<1x20xf32>
    %c41 = arith.constant 41 : index
    %c0_99 = arith.constant 0 : index
    %281 = vector.load %arg2[%c41, %c0_99] : memref<88x20xf32, #tpu.memory_space<vmem>>, vector<1x20xf32>
    %cst_100 = arith.constant 9.99999974E-6 : f32
    %282 = vector.broadcast %cst_100 : f32 to vector<1x20xf32>
    %283 = arith.addf %279, %282 : vector<1x20xf32>
    %284 = math.rsqrt %283 : vector<1x20xf32>
    %285 = arith.mulf %280, %284 : vector<1x20xf32>
    %286 = arith.mulf %274, %285 : vector<1x20xf32>
    %287 = arith.subf %281, %286 : vector<1x20xf32>
    %288 = vector.broadcast %285 : vector<1x20xf32> to vector<8x20xf32>
    %289 = arith.mulf %267, %288 : vector<8x20xf32>
    %290 = vector.broadcast %287 : vector<1x20xf32> to vector<8x20xf32>
    %291 = arith.addf %289, %290 : vector<8x20xf32>
    %cst_101 = arith.constant 0.000000e+00 : f32
    %292 = vector.broadcast %cst_101 : f32 to vector<8x20xf32>
    %293 = arith.maximumf %291, %292 : vector<8x20xf32>
    %c9_102 = arith.constant 9 : index
    %c0_103 = arith.constant 0 : index
    %c0_104 = arith.constant 0 : index
    %294 = vector.load %arg1[%c9_102, %c0_103, %c0_104] : memref<20x20x20xf32, #tpu.memory_space<vmem>>, vector<1x20x20xf32>
    %295 = vector.shape_cast %294 : vector<1x20x20xf32> to vector<20x20xf32>
    %cst_105 = arith.constant dense<0.000000e+00> : vector<8x20xf32>
    %296 = tpu.matmul %293, %295, %cst_105 {dimension_numbers = #tpu.dot_dimension_numbers<[1], [0], [0], [1], [0, 0, 1, 1], [], []>} : vector<8x20xf32>, vector<20x20xf32>, vector<8x20xf32> -> vector<8x20xf32>
    %297 = arith.mulf %296, %296 : vector<8x20xf32>
    %298 = tpu.concatenate %296, %297 in 1 : vector<8x20xf32>, vector<8x20xf32> -> vector<8x40xf32>
    %cst_106 = arith.constant dense<0.000000e+00> : vector<40xf32>
    %299 = vector.multi_reduction <add>, %298, %cst_106 [0] : vector<8x40xf32> to vector<40xf32>
    %300 = vector.shape_cast %299 : vector<40xf32> to vector<1x40xf32>
    %cst_107 = arith.constant 1.250000e-01 : f32
    %301 = vector.broadcast %cst_107 : f32 to vector<1x40xf32>
    %302 = arith.mulf %300, %301 : vector<1x40xf32>
    %303 = vector.extract_strided_slice %302 {offsets = [0, 0], sizes = [1, 20], strides = [1, 1]} : vector<1x40xf32> to vector<1x20xf32>
    %304 = vector.extract_strided_slice %302 {offsets = [0, 20], sizes = [1, 20], strides = [1, 1]} : vector<1x40xf32> to vector<1x20xf32>
    %305 = arith.mulf %303, %303 : vector<1x20xf32>
    %306 = arith.subf %304, %305 : vector<1x20xf32>
    %cst_108 = arith.constant 0.000000e+00 : f32
    %307 = vector.broadcast %cst_108 : f32 to vector<1x20xf32>
    %308 = arith.maximumf %306, %307 : vector<1x20xf32>
    %c18 = arith.constant 18 : index
    %c0_109 = arith.constant 0 : index
    %309 = vector.load %arg2[%c18, %c0_109] : memref<88x20xf32, #tpu.memory_space<vmem>>, vector<1x20xf32>
    %c42 = arith.constant 42 : index
    %c0_110 = arith.constant 0 : index
    %310 = vector.load %arg2[%c42, %c0_110] : memref<88x20xf32, #tpu.memory_space<vmem>>, vector<1x20xf32>
    %cst_111 = arith.constant 9.99999974E-6 : f32
    %311 = vector.broadcast %cst_111 : f32 to vector<1x20xf32>
    %312 = arith.addf %308, %311 : vector<1x20xf32>
    %313 = math.rsqrt %312 : vector<1x20xf32>
    %314 = arith.mulf %309, %313 : vector<1x20xf32>
    %315 = arith.mulf %303, %314 : vector<1x20xf32>
    %316 = arith.subf %310, %315 : vector<1x20xf32>
    %317 = vector.broadcast %314 : vector<1x20xf32> to vector<8x20xf32>
    %318 = arith.mulf %296, %317 : vector<8x20xf32>
    %319 = vector.broadcast %316 : vector<1x20xf32> to vector<8x20xf32>
    %320 = arith.addf %318, %319 : vector<8x20xf32>
    %321 = arith.addf %320, %264 : vector<8x20xf32>
    %cst_112 = arith.constant 0.000000e+00 : f32
    %322 = vector.broadcast %cst_112 : f32 to vector<8x20xf32>
    %323 = arith.maximumf %321, %322 : vector<8x20xf32>
    %c10_113 = arith.constant 10 : index
    %c0_114 = arith.constant 0 : index
    %c0_115 = arith.constant 0 : index
    %324 = vector.load %arg1[%c10_113, %c0_114, %c0_115] : memref<20x20x20xf32, #tpu.memory_space<vmem>>, vector<1x20x20xf32>
    %325 = vector.shape_cast %324 : vector<1x20x20xf32> to vector<20x20xf32>
    %cst_116 = arith.constant dense<0.000000e+00> : vector<8x20xf32>
    %326 = tpu.matmul %323, %325, %cst_116 {dimension_numbers = #tpu.dot_dimension_numbers<[1], [0], [0], [1], [0, 0, 1, 1], [], []>} : vector<8x20xf32>, vector<20x20xf32>, vector<8x20xf32> -> vector<8x20xf32>
    %327 = arith.mulf %326, %326 : vector<8x20xf32>
    %328 = tpu.concatenate %326, %327 in 1 : vector<8x20xf32>, vector<8x20xf32> -> vector<8x40xf32>
    %cst_117 = arith.constant dense<0.000000e+00> : vector<40xf32>
    %329 = vector.multi_reduction <add>, %328, %cst_117 [0] : vector<8x40xf32> to vector<40xf32>
    %330 = vector.shape_cast %329 : vector<40xf32> to vector<1x40xf32>
    %cst_118 = arith.constant 1.250000e-01 : f32
    %331 = vector.broadcast %cst_118 : f32 to vector<1x40xf32>
    %332 = arith.mulf %330, %331 : vector<1x40xf32>
    %333 = vector.extract_strided_slice %332 {offsets = [0, 0], sizes = [1, 20], strides = [1, 1]} : vector<1x40xf32> to vector<1x20xf32>
    %334 = vector.extract_strided_slice %332 {offsets = [0, 20], sizes = [1, 20], strides = [1, 1]} : vector<1x40xf32> to vector<1x20xf32>
    %335 = arith.mulf %333, %333 : vector<1x20xf32>
    %336 = arith.subf %334, %335 : vector<1x20xf32>
    %cst_119 = arith.constant 0.000000e+00 : f32
    %337 = vector.broadcast %cst_119 : f32 to vector<1x20xf32>
    %338 = arith.maximumf %336, %337 : vector<1x20xf32>
    %c19 = arith.constant 19 : index
    %c0_120 = arith.constant 0 : index
    %339 = vector.load %arg2[%c19, %c0_120] : memref<88x20xf32, #tpu.memory_space<vmem>>, vector<1x20xf32>
    %c43 = arith.constant 43 : index
    %c0_121 = arith.constant 0 : index
    %340 = vector.load %arg2[%c43, %c0_121] : memref<88x20xf32, #tpu.memory_space<vmem>>, vector<1x20xf32>
    %cst_122 = arith.constant 9.99999974E-6 : f32
    %341 = vector.broadcast %cst_122 : f32 to vector<1x20xf32>
    %342 = arith.addf %338, %341 : vector<1x20xf32>
    %343 = math.rsqrt %342 : vector<1x20xf32>
    %344 = arith.mulf %339, %343 : vector<1x20xf32>
    %345 = arith.mulf %333, %344 : vector<1x20xf32>
    %346 = arith.subf %340, %345 : vector<1x20xf32>
    %347 = vector.broadcast %344 : vector<1x20xf32> to vector<8x20xf32>
    %348 = arith.mulf %326, %347 : vector<8x20xf32>
    %349 = vector.broadcast %346 : vector<1x20xf32> to vector<8x20xf32>
    %350 = arith.addf %348, %349 : vector<8x20xf32>
    %cst_123 = arith.constant 0.000000e+00 : f32
    %351 = vector.broadcast %cst_123 : f32 to vector<8x20xf32>
    %352 = arith.maximumf %350, %351 : vector<8x20xf32>
    %c11_124 = arith.constant 11 : index
    %c0_125 = arith.constant 0 : index
    %c0_126 = arith.constant 0 : index
    %353 = vector.load %arg1[%c11_124, %c0_125, %c0_126] : memref<20x20x20xf32, #tpu.memory_space<vmem>>, vector<1x20x20xf32>
    %354 = vector.shape_cast %353 : vector<1x20x20xf32> to vector<20x20xf32>
    %cst_127 = arith.constant dense<0.000000e+00> : vector<8x20xf32>
    %355 = tpu.matmul %352, %354, %cst_127 {dimension_numbers = #tpu.dot_dimension_numbers<[1], [0], [0], [1], [0, 0, 1, 1], [], []>} : vector<8x20xf32>, vector<20x20xf32>, vector<8x20xf32> -> vector<8x20xf32>
    %356 = arith.mulf %355, %355 : vector<8x20xf32>
    %357 = tpu.concatenate %355, %356 in 1 : vector<8x20xf32>, vector<8x20xf32> -> vector<8x40xf32>
    %cst_128 = arith.constant dense<0.000000e+00> : vector<40xf32>
    %358 = vector.multi_reduction <add>, %357, %cst_128 [0] : vector<8x40xf32> to vector<40xf32>
    %359 = vector.shape_cast %358 : vector<40xf32> to vector<1x40xf32>
    %cst_129 = arith.constant 1.250000e-01 : f32
    %360 = vector.broadcast %cst_129 : f32 to vector<1x40xf32>
    %361 = arith.mulf %359, %360 : vector<1x40xf32>
    %362 = vector.extract_strided_slice %361 {offsets = [0, 0], sizes = [1, 20], strides = [1, 1]} : vector<1x40xf32> to vector<1x20xf32>
    %363 = vector.extract_strided_slice %361 {offsets = [0, 20], sizes = [1, 20], strides = [1, 1]} : vector<1x40xf32> to vector<1x20xf32>
    %364 = arith.mulf %362, %362 : vector<1x20xf32>
    %365 = arith.subf %363, %364 : vector<1x20xf32>
    %cst_130 = arith.constant 0.000000e+00 : f32
    %366 = vector.broadcast %cst_130 : f32 to vector<1x20xf32>
    %367 = arith.maximumf %365, %366 : vector<1x20xf32>
    %c20 = arith.constant 20 : index
    %c0_131 = arith.constant 0 : index
    %368 = vector.load %arg2[%c20, %c0_131] : memref<88x20xf32, #tpu.memory_space<vmem>>, vector<1x20xf32>
    %c44 = arith.constant 44 : index
    %c0_132 = arith.constant 0 : index
    %369 = vector.load %arg2[%c44, %c0_132] : memref<88x20xf32, #tpu.memory_space<vmem>>, vector<1x20xf32>
    %cst_133 = arith.constant 9.99999974E-6 : f32
    %370 = vector.broadcast %cst_133 : f32 to vector<1x20xf32>
    %371 = arith.addf %367, %370 : vector<1x20xf32>
    %372 = math.rsqrt %371 : vector<1x20xf32>
    %373 = arith.mulf %368, %372 : vector<1x20xf32>
    %374 = arith.mulf %362, %373 : vector<1x20xf32>
    %375 = arith.subf %369, %374 : vector<1x20xf32>
    %376 = vector.broadcast %373 : vector<1x20xf32> to vector<8x20xf32>
    %377 = arith.mulf %355, %376 : vector<8x20xf32>
    %378 = vector.broadcast %375 : vector<1x20xf32> to vector<8x20xf32>
    %379 = arith.addf %377, %378 : vector<8x20xf32>
    %380 = arith.addf %379, %323 : vector<8x20xf32>
    %cst_134 = arith.constant 0.000000e+00 : f32
    %381 = vector.broadcast %cst_134 : f32 to vector<8x20xf32>
    %382 = arith.maximumf %380, %381 : vector<8x20xf32>
    %c12_135 = arith.constant 12 : index
    %c0_136 = arith.constant 0 : index
    %c0_137 = arith.constant 0 : index
    %383 = vector.load %arg1[%c12_135, %c0_136, %c0_137] : memref<20x20x20xf32, #tpu.memory_space<vmem>>, vector<1x20x20xf32>
    %384 = vector.shape_cast %383 : vector<1x20x20xf32> to vector<20x20xf32>
    %cst_138 = arith.constant dense<0.000000e+00> : vector<8x20xf32>
    %385 = tpu.matmul %382, %384, %cst_138 {dimension_numbers = #tpu.dot_dimension_numbers<[1], [0], [0], [1], [0, 0, 1, 1], [], []>} : vector<8x20xf32>, vector<20x20xf32>, vector<8x20xf32> -> vector<8x20xf32>
    %386 = arith.mulf %385, %385 : vector<8x20xf32>
    %387 = tpu.concatenate %385, %386 in 1 : vector<8x20xf32>, vector<8x20xf32> -> vector<8x40xf32>
    %cst_139 = arith.constant dense<0.000000e+00> : vector<40xf32>
    %388 = vector.multi_reduction <add>, %387, %cst_139 [0] : vector<8x40xf32> to vector<40xf32>
    %389 = vector.shape_cast %388 : vector<40xf32> to vector<1x40xf32>
    %cst_140 = arith.constant 1.250000e-01 : f32
    %390 = vector.broadcast %cst_140 : f32 to vector<1x40xf32>
    %391 = arith.mulf %389, %390 : vector<1x40xf32>
    %392 = vector.extract_strided_slice %391 {offsets = [0, 0], sizes = [1, 20], strides = [1, 1]} : vector<1x40xf32> to vector<1x20xf32>
    %393 = vector.extract_strided_slice %391 {offsets = [0, 20], sizes = [1, 20], strides = [1, 1]} : vector<1x40xf32> to vector<1x20xf32>
    %394 = arith.mulf %392, %392 : vector<1x20xf32>
    %395 = arith.subf %393, %394 : vector<1x20xf32>
    %cst_141 = arith.constant 0.000000e+00 : f32
    %396 = vector.broadcast %cst_141 : f32 to vector<1x20xf32>
    %397 = arith.maximumf %395, %396 : vector<1x20xf32>
    %c21 = arith.constant 21 : index
    %c0_142 = arith.constant 0 : index
    %398 = vector.load %arg2[%c21, %c0_142] : memref<88x20xf32, #tpu.memory_space<vmem>>, vector<1x20xf32>
    %c45 = arith.constant 45 : index
    %c0_143 = arith.constant 0 : index
    %399 = vector.load %arg2[%c45, %c0_143] : memref<88x20xf32, #tpu.memory_space<vmem>>, vector<1x20xf32>
    %cst_144 = arith.constant 9.99999974E-6 : f32
    %400 = vector.broadcast %cst_144 : f32 to vector<1x20xf32>
    %401 = arith.addf %397, %400 : vector<1x20xf32>
    %402 = math.rsqrt %401 : vector<1x20xf32>
    %403 = arith.mulf %398, %402 : vector<1x20xf32>
    %404 = arith.mulf %392, %403 : vector<1x20xf32>
    %405 = arith.subf %399, %404 : vector<1x20xf32>
    %406 = vector.broadcast %403 : vector<1x20xf32> to vector<8x20xf32>
    %407 = arith.mulf %385, %406 : vector<8x20xf32>
    %408 = vector.broadcast %405 : vector<1x20xf32> to vector<8x20xf32>
    %409 = arith.addf %407, %408 : vector<8x20xf32>
    %cst_145 = arith.constant 0.000000e+00 : f32
    %410 = vector.broadcast %cst_145 : f32 to vector<8x20xf32>
    %411 = arith.maximumf %409, %410 : vector<8x20xf32>
    %c13_146 = arith.constant 13 : index
    %c0_147 = arith.constant 0 : index
    %c0_148 = arith.constant 0 : index
    %412 = vector.load %arg1[%c13_146, %c0_147, %c0_148] : memref<20x20x20xf32, #tpu.memory_space<vmem>>, vector<1x20x20xf32>
    %413 = vector.shape_cast %412 : vector<1x20x20xf32> to vector<20x20xf32>
    %cst_149 = arith.constant dense<0.000000e+00> : vector<8x20xf32>
    %414 = tpu.matmul %411, %413, %cst_149 {dimension_numbers = #tpu.dot_dimension_numbers<[1], [0], [0], [1], [0, 0, 1, 1], [], []>} : vector<8x20xf32>, vector<20x20xf32>, vector<8x20xf32> -> vector<8x20xf32>
    %415 = arith.mulf %414, %414 : vector<8x20xf32>
    %416 = tpu.concatenate %414, %415 in 1 : vector<8x20xf32>, vector<8x20xf32> -> vector<8x40xf32>
    %cst_150 = arith.constant dense<0.000000e+00> : vector<40xf32>
    %417 = vector.multi_reduction <add>, %416, %cst_150 [0] : vector<8x40xf32> to vector<40xf32>
    %418 = vector.shape_cast %417 : vector<40xf32> to vector<1x40xf32>
    %cst_151 = arith.constant 1.250000e-01 : f32
    %419 = vector.broadcast %cst_151 : f32 to vector<1x40xf32>
    %420 = arith.mulf %418, %419 : vector<1x40xf32>
    %421 = vector.extract_strided_slice %420 {offsets = [0, 0], sizes = [1, 20], strides = [1, 1]} : vector<1x40xf32> to vector<1x20xf32>
    %422 = vector.extract_strided_slice %420 {offsets = [0, 20], sizes = [1, 20], strides = [1, 1]} : vector<1x40xf32> to vector<1x20xf32>
    %423 = arith.mulf %421, %421 : vector<1x20xf32>
    %424 = arith.subf %422, %423 : vector<1x20xf32>
    %cst_152 = arith.constant 0.000000e+00 : f32
    %425 = vector.broadcast %cst_152 : f32 to vector<1x20xf32>
    %426 = arith.maximumf %424, %425 : vector<1x20xf32>
    %c22 = arith.constant 22 : index
    %c0_153 = arith.constant 0 : index
    %427 = vector.load %arg2[%c22, %c0_153] : memref<88x20xf32, #tpu.memory_space<vmem>>, vector<1x20xf32>
    %c46 = arith.constant 46 : index
    %c0_154 = arith.constant 0 : index
    %428 = vector.load %arg2[%c46, %c0_154] : memref<88x20xf32, #tpu.memory_space<vmem>>, vector<1x20xf32>
    %cst_155 = arith.constant 9.99999974E-6 : f32
    %429 = vector.broadcast %cst_155 : f32 to vector<1x20xf32>
    %430 = arith.addf %426, %429 : vector<1x20xf32>
    %431 = math.rsqrt %430 : vector<1x20xf32>
    %432 = arith.mulf %427, %431 : vector<1x20xf32>
    %433 = arith.mulf %421, %432 : vector<1x20xf32>
    %434 = arith.subf %428, %433 : vector<1x20xf32>
    %435 = vector.broadcast %432 : vector<1x20xf32> to vector<8x20xf32>
    %436 = arith.mulf %414, %435 : vector<8x20xf32>
    %437 = vector.broadcast %434 : vector<1x20xf32> to vector<8x20xf32>
    %438 = arith.addf %436, %437 : vector<8x20xf32>
    %439 = arith.addf %438, %382 : vector<8x20xf32>
    %cst_156 = arith.constant 0.000000e+00 : f32
    %440 = vector.broadcast %cst_156 : f32 to vector<8x20xf32>
    %441 = arith.maximumf %439, %440 : vector<8x20xf32>
    %c14_157 = arith.constant 14 : index
    %c0_158 = arith.constant 0 : index
    %c0_159 = arith.constant 0 : index
    %442 = vector.load %arg1[%c14_157, %c0_158, %c0_159] : memref<20x20x20xf32, #tpu.memory_space<vmem>>, vector<1x20x20xf32>
    %443 = vector.shape_cast %442 : vector<1x20x20xf32> to vector<20x20xf32>
    %cst_160 = arith.constant dense<0.000000e+00> : vector<8x20xf32>
    %444 = tpu.matmul %441, %443, %cst_160 {dimension_numbers = #tpu.dot_dimension_numbers<[1], [0], [0], [1], [0, 0, 1, 1], [], []>} : vector<8x20xf32>, vector<20x20xf32>, vector<8x20xf32> -> vector<8x20xf32>
    %445 = arith.mulf %444, %444 : vector<8x20xf32>
    %446 = tpu.concatenate %444, %445 in 1 : vector<8x20xf32>, vector<8x20xf32> -> vector<8x40xf32>
    %cst_161 = arith.constant dense<0.000000e+00> : vector<40xf32>
    %447 = vector.multi_reduction <add>, %446, %cst_161 [0] : vector<8x40xf32> to vector<40xf32>
    %448 = vector.shape_cast %447 : vector<40xf32> to vector<1x40xf32>
    %cst_162 = arith.constant 1.250000e-01 : f32
    %449 = vector.broadcast %cst_162 : f32 to vector<1x40xf32>
    %450 = arith.mulf %448, %449 : vector<1x40xf32>
    %451 = vector.extract_strided_slice %450 {offsets = [0, 0], sizes = [1, 20], strides = [1, 1]} : vector<1x40xf32> to vector<1x20xf32>
    %452 = vector.extract_strided_slice %450 {offsets = [0, 20], sizes = [1, 20], strides = [1, 1]} : vector<1x40xf32> to vector<1x20xf32>
    %453 = arith.mulf %451, %451 : vector<1x20xf32>
    %454 = arith.subf %452, %453 : vector<1x20xf32>
    %cst_163 = arith.constant 0.000000e+00 : f32
    %455 = vector.broadcast %cst_163 : f32 to vector<1x20xf32>
    %456 = arith.maximumf %454, %455 : vector<1x20xf32>
    %c23 = arith.constant 23 : index
    %c0_164 = arith.constant 0 : index
    %457 = vector.load %arg2[%c23, %c0_164] : memref<88x20xf32, #tpu.memory_space<vmem>>, vector<1x20xf32>
    %c47 = arith.constant 47 : index
    %c0_165 = arith.constant 0 : index
    %458 = vector.load %arg2[%c47, %c0_165] : memref<88x20xf32, #tpu.memory_space<vmem>>, vector<1x20xf32>
    %cst_166 = arith.constant 9.99999974E-6 : f32
    %459 = vector.broadcast %cst_166 : f32 to vector<1x20xf32>
    %460 = arith.addf %456, %459 : vector<1x20xf32>
    %461 = math.rsqrt %460 : vector<1x20xf32>
    %462 = arith.mulf %457, %461 : vector<1x20xf32>
    %463 = arith.mulf %451, %462 : vector<1x20xf32>
    %464 = arith.subf %458, %463 : vector<1x20xf32>
    %465 = vector.broadcast %462 : vector<1x20xf32> to vector<8x20xf32>
    %466 = arith.mulf %444, %465 : vector<8x20xf32>
    %467 = vector.broadcast %464 : vector<1x20xf32> to vector<8x20xf32>
    %468 = arith.addf %466, %467 : vector<8x20xf32>
    %cst_167 = arith.constant 0.000000e+00 : f32
    %469 = vector.broadcast %cst_167 : f32 to vector<8x20xf32>
    %470 = arith.maximumf %468, %469 : vector<8x20xf32>
    %c15_168 = arith.constant 15 : index
    %c0_169 = arith.constant 0 : index
    %c0_170 = arith.constant 0 : index
    %471 = vector.load %arg1[%c15_168, %c0_169, %c0_170] : memref<20x20x20xf32, #tpu.memory_space<vmem>>, vector<1x20x20xf32>
    %472 = vector.shape_cast %471 : vector<1x20x20xf32> to vector<20x20xf32>
    %cst_171 = arith.constant dense<0.000000e+00> : vector<8x20xf32>
    %473 = tpu.matmul %470, %472, %cst_171 {dimension_numbers = #tpu.dot_dimension_numbers<[1], [0], [0], [1], [0, 0, 1, 1], [], []>} : vector<8x20xf32>, vector<20x20xf32>, vector<8x20xf32> -> vector<8x20xf32>
    %474 = arith.mulf %473, %473 : vector<8x20xf32>
    %475 = tpu.concatenate %473, %474 in 1 : vector<8x20xf32>, vector<8x20xf32> -> vector<8x40xf32>
    %cst_172 = arith.constant dense<0.000000e+00> : vector<40xf32>
    %476 = vector.multi_reduction <add>, %475, %cst_172 [0] : vector<8x40xf32> to vector<40xf32>
    %477 = vector.shape_cast %476 : vector<40xf32> to vector<1x40xf32>
    %cst_173 = arith.constant 1.250000e-01 : f32
    %478 = vector.broadcast %cst_173 : f32 to vector<1x40xf32>
    %479 = arith.mulf %477, %478 : vector<1x40xf32>
    %480 = vector.extract_strided_slice %479 {offsets = [0, 0], sizes = [1, 20], strides = [1, 1]} : vector<1x40xf32> to vector<1x20xf32>
    %481 = vector.extract_strided_slice %479 {offsets = [0, 20], sizes = [1, 20], strides = [1, 1]} : vector<1x40xf32> to vector<1x20xf32>
    %482 = arith.mulf %480, %480 : vector<1x20xf32>
    %483 = arith.subf %481, %482 : vector<1x20xf32>
    %cst_174 = arith.constant 0.000000e+00 : f32
    %484 = vector.broadcast %cst_174 : f32 to vector<1x20xf32>
    %485 = arith.maximumf %483, %484 : vector<1x20xf32>
    %c24 = arith.constant 24 : index
    %c0_175 = arith.constant 0 : index
    %486 = vector.load %arg2[%c24, %c0_175] : memref<88x20xf32, #tpu.memory_space<vmem>>, vector<1x20xf32>
    %c48 = arith.constant 48 : index
    %c0_176 = arith.constant 0 : index
    %487 = vector.load %arg2[%c48, %c0_176] : memref<88x20xf32, #tpu.memory_space<vmem>>, vector<1x20xf32>
    %cst_177 = arith.constant 9.99999974E-6 : f32
    %488 = vector.broadcast %cst_177 : f32 to vector<1x20xf32>
    %489 = arith.addf %485, %488 : vector<1x20xf32>
    %490 = math.rsqrt %489 : vector<1x20xf32>
    %491 = arith.mulf %486, %490 : vector<1x20xf32>
    %492 = arith.mulf %480, %491 : vector<1x20xf32>
    %493 = arith.subf %487, %492 : vector<1x20xf32>
    %494 = vector.broadcast %491 : vector<1x20xf32> to vector<8x20xf32>
    %495 = arith.mulf %473, %494 : vector<8x20xf32>
    %496 = vector.broadcast %493 : vector<1x20xf32> to vector<8x20xf32>
    %497 = arith.addf %495, %496 : vector<8x20xf32>
    %498 = arith.addf %497, %441 : vector<8x20xf32>
    %cst_178 = arith.constant 0.000000e+00 : f32
    %499 = vector.broadcast %cst_178 : f32 to vector<8x20xf32>
    %500 = arith.maximumf %498, %499 : vector<8x20xf32>
    %c16_179 = arith.constant 16 : index
    %c0_180 = arith.constant 0 : index
    %c0_181 = arith.constant 0 : index
    %501 = vector.load %arg1[%c16_179, %c0_180, %c0_181] : memref<20x20x20xf32, #tpu.memory_space<vmem>>, vector<1x20x20xf32>
    %502 = vector.shape_cast %501 : vector<1x20x20xf32> to vector<20x20xf32>
    %cst_182 = arith.constant dense<0.000000e+00> : vector<8x20xf32>
    %503 = tpu.matmul %500, %502, %cst_182 {dimension_numbers = #tpu.dot_dimension_numbers<[1], [0], [0], [1], [0, 0, 1, 1], [], []>} : vector<8x20xf32>, vector<20x20xf32>, vector<8x20xf32> -> vector<8x20xf32>
    %504 = arith.mulf %503, %503 : vector<8x20xf32>
    %505 = tpu.concatenate %503, %504 in 1 : vector<8x20xf32>, vector<8x20xf32> -> vector<8x40xf32>
    %cst_183 = arith.constant dense<0.000000e+00> : vector<40xf32>
    %506 = vector.multi_reduction <add>, %505, %cst_183 [0] : vector<8x40xf32> to vector<40xf32>
    %507 = vector.shape_cast %506 : vector<40xf32> to vector<1x40xf32>
    %cst_184 = arith.constant 1.250000e-01 : f32
    %508 = vector.broadcast %cst_184 : f32 to vector<1x40xf32>
    %509 = arith.mulf %507, %508 : vector<1x40xf32>
    %510 = vector.extract_strided_slice %509 {offsets = [0, 0], sizes = [1, 20], strides = [1, 1]} : vector<1x40xf32> to vector<1x20xf32>
    %511 = vector.extract_strided_slice %509 {offsets = [0, 20], sizes = [1, 20], strides = [1, 1]} : vector<1x40xf32> to vector<1x20xf32>
    %512 = arith.mulf %510, %510 : vector<1x20xf32>
    %513 = arith.subf %511, %512 : vector<1x20xf32>
    %cst_185 = arith.constant 0.000000e+00 : f32
    %514 = vector.broadcast %cst_185 : f32 to vector<1x20xf32>
    %515 = arith.maximumf %513, %514 : vector<1x20xf32>
    %c25 = arith.constant 25 : index
    %c0_186 = arith.constant 0 : index
    %516 = vector.load %arg2[%c25, %c0_186] : memref<88x20xf32, #tpu.memory_space<vmem>>, vector<1x20xf32>
    %c49 = arith.constant 49 : index
    %c0_187 = arith.constant 0 : index
    %517 = vector.load %arg2[%c49, %c0_187] : memref<88x20xf32, #tpu.memory_space<vmem>>, vector<1x20xf32>
    %cst_188 = arith.constant 9.99999974E-6 : f32
    %518 = vector.broadcast %cst_188 : f32 to vector<1x20xf32>
    %519 = arith.addf %515, %518 : vector<1x20xf32>
    %520 = math.rsqrt %519 : vector<1x20xf32>
    %521 = arith.mulf %516, %520 : vector<1x20xf32>
    %522 = arith.mulf %510, %521 : vector<1x20xf32>
    %523 = arith.subf %517, %522 : vector<1x20xf32>
    %524 = vector.broadcast %521 : vector<1x20xf32> to vector<8x20xf32>
    %525 = arith.mulf %503, %524 : vector<8x20xf32>
    %526 = vector.broadcast %523 : vector<1x20xf32> to vector<8x20xf32>
    %527 = arith.addf %525, %526 : vector<8x20xf32>
    %cst_189 = arith.constant 0.000000e+00 : f32
    %528 = vector.broadcast %cst_189 : f32 to vector<8x20xf32>
    %529 = arith.maximumf %527, %528 : vector<8x20xf32>
    %c17_190 = arith.constant 17 : index
    %c0_191 = arith.constant 0 : index
    %c0_192 = arith.constant 0 : index
    %530 = vector.load %arg1[%c17_190, %c0_191, %c0_192] : memref<20x20x20xf32, #tpu.memory_space<vmem>>, vector<1x20x20xf32>
    %531 = vector.shape_cast %530 : vector<1x20x20xf32> to vector<20x20xf32>
    %cst_193 = arith.constant dense<0.000000e+00> : vector<8x20xf32>
    %532 = tpu.matmul %529, %531, %cst_193 {dimension_numbers = #tpu.dot_dimension_numbers<[1], [0], [0], [1], [0, 0, 1, 1], [], []>} : vector<8x20xf32>, vector<20x20xf32>, vector<8x20xf32> -> vector<8x20xf32>
    %533 = arith.mulf %532, %532 : vector<8x20xf32>
    %534 = tpu.concatenate %532, %533 in 1 : vector<8x20xf32>, vector<8x20xf32> -> vector<8x40xf32>
    %cst_194 = arith.constant dense<0.000000e+00> : vector<40xf32>
    %535 = vector.multi_reduction <add>, %534, %cst_194 [0] : vector<8x40xf32> to vector<40xf32>
    %536 = vector.shape_cast %535 : vector<40xf32> to vector<1x40xf32>
    %cst_195 = arith.constant 1.250000e-01 : f32
    %537 = vector.broadcast %cst_195 : f32 to vector<1x40xf32>
    %538 = arith.mulf %536, %537 : vector<1x40xf32>
    %539 = vector.extract_strided_slice %538 {offsets = [0, 0], sizes = [1, 20], strides = [1, 1]} : vector<1x40xf32> to vector<1x20xf32>
    %540 = vector.extract_strided_slice %538 {offsets = [0, 20], sizes = [1, 20], strides = [1, 1]} : vector<1x40xf32> to vector<1x20xf32>
    %541 = arith.mulf %539, %539 : vector<1x20xf32>
    %542 = arith.subf %540, %541 : vector<1x20xf32>
    %cst_196 = arith.constant 0.000000e+00 : f32
    %543 = vector.broadcast %cst_196 : f32 to vector<1x20xf32>
    %544 = arith.maximumf %542, %543 : vector<1x20xf32>
    %c26 = arith.constant 26 : index
    %c0_197 = arith.constant 0 : index
    %545 = vector.load %arg2[%c26, %c0_197] : memref<88x20xf32, #tpu.memory_space<vmem>>, vector<1x20xf32>
    %c50 = arith.constant 50 : index
    %c0_198 = arith.constant 0 : index
    %546 = vector.load %arg2[%c50, %c0_198] : memref<88x20xf32, #tpu.memory_space<vmem>>, vector<1x20xf32>
    %cst_199 = arith.constant 9.99999974E-6 : f32
    %547 = vector.broadcast %cst_199 : f32 to vector<1x20xf32>
    %548 = arith.addf %544, %547 : vector<1x20xf32>
    %549 = math.rsqrt %548 : vector<1x20xf32>
    %550 = arith.mulf %545, %549 : vector<1x20xf32>
    %551 = arith.mulf %539, %550 : vector<1x20xf32>
    %552 = arith.subf %546, %551 : vector<1x20xf32>
    %553 = vector.broadcast %550 : vector<1x20xf32> to vector<8x20xf32>
    %554 = arith.mulf %532, %553 : vector<8x20xf32>
    %555 = vector.broadcast %552 : vector<1x20xf32> to vector<8x20xf32>
    %556 = arith.addf %554, %555 : vector<8x20xf32>
    %557 = arith.addf %556, %500 : vector<8x20xf32>
    %cst_200 = arith.constant 0.000000e+00 : f32
    %558 = vector.broadcast %cst_200 : f32 to vector<8x20xf32>
    %559 = arith.maximumf %557, %558 : vector<8x20xf32>
    %c18_201 = arith.constant 18 : index
    %c0_202 = arith.constant 0 : index
    %c0_203 = arith.constant 0 : index
    %560 = vector.load %arg1[%c18_201, %c0_202, %c0_203] : memref<20x20x20xf32, #tpu.memory_space<vmem>>, vector<1x20x20xf32>
    %561 = vector.shape_cast %560 : vector<1x20x20xf32> to vector<20x20xf32>
    %cst_204 = arith.constant dense<0.000000e+00> : vector<8x20xf32>
    %562 = tpu.matmul %559, %561, %cst_204 {dimension_numbers = #tpu.dot_dimension_numbers<[1], [0], [0], [1], [0, 0, 1, 1], [], []>} : vector<8x20xf32>, vector<20x20xf32>, vector<8x20xf32> -> vector<8x20xf32>
    %563 = arith.mulf %562, %562 : vector<8x20xf32>
    %564 = tpu.concatenate %562, %563 in 1 : vector<8x20xf32>, vector<8x20xf32> -> vector<8x40xf32>
    %cst_205 = arith.constant dense<0.000000e+00> : vector<40xf32>
    %565 = vector.multi_reduction <add>, %564, %cst_205 [0] : vector<8x40xf32> to vector<40xf32>
    %566 = vector.shape_cast %565 : vector<40xf32> to vector<1x40xf32>
    %cst_206 = arith.constant 1.250000e-01 : f32
    %567 = vector.broadcast %cst_206 : f32 to vector<1x40xf32>
    %568 = arith.mulf %566, %567 : vector<1x40xf32>
    %569 = vector.extract_strided_slice %568 {offsets = [0, 0], sizes = [1, 20], strides = [1, 1]} : vector<1x40xf32> to vector<1x20xf32>
    %570 = vector.extract_strided_slice %568 {offsets = [0, 20], sizes = [1, 20], strides = [1, 1]} : vector<1x40xf32> to vector<1x20xf32>
    %571 = arith.mulf %569, %569 : vector<1x20xf32>
    %572 = arith.subf %570, %571 : vector<1x20xf32>
    %cst_207 = arith.constant 0.000000e+00 : f32
    %573 = vector.broadcast %cst_207 : f32 to vector<1x20xf32>
    %574 = arith.maximumf %572, %573 : vector<1x20xf32>
    %c27 = arith.constant 27 : index
    %c0_208 = arith.constant 0 : index
    %575 = vector.load %arg2[%c27, %c0_208] : memref<88x20xf32, #tpu.memory_space<vmem>>, vector<1x20xf32>
    %c51 = arith.constant 51 : index
    %c0_209 = arith.constant 0 : index
    %576 = vector.load %arg2[%c51, %c0_209] : memref<88x20xf32, #tpu.memory_space<vmem>>, vector<1x20xf32>
    %cst_210 = arith.constant 9.99999974E-6 : f32
    %577 = vector.broadcast %cst_210 : f32 to vector<1x20xf32>
    %578 = arith.addf %574, %577 : vector<1x20xf32>
    %579 = math.rsqrt %578 : vector<1x20xf32>
    %580 = arith.mulf %575, %579 : vector<1x20xf32>
    %581 = arith.mulf %569, %580 : vector<1x20xf32>
    %582 = arith.subf %576, %581 : vector<1x20xf32>
    %583 = vector.broadcast %580 : vector<1x20xf32> to vector<8x20xf32>
    %584 = arith.mulf %562, %583 : vector<8x20xf32>
    %585 = vector.broadcast %582 : vector<1x20xf32> to vector<8x20xf32>
    %586 = arith.addf %584, %585 : vector<8x20xf32>
    %cst_211 = arith.constant 0.000000e+00 : f32
    %587 = vector.broadcast %cst_211 : f32 to vector<8x20xf32>
    %588 = arith.maximumf %586, %587 : vector<8x20xf32>
    %c19_212 = arith.constant 19 : index
    %c0_213 = arith.constant 0 : index
    %c0_214 = arith.constant 0 : index
    %589 = vector.load %arg1[%c19_212, %c0_213, %c0_214] : memref<20x20x20xf32, #tpu.memory_space<vmem>>, vector<1x20x20xf32>
    %590 = vector.shape_cast %589 : vector<1x20x20xf32> to vector<20x20xf32>
    %cst_215 = arith.constant dense<0.000000e+00> : vector<8x20xf32>
    %591 = tpu.matmul %588, %590, %cst_215 {dimension_numbers = #tpu.dot_dimension_numbers<[1], [0], [0], [1], [0, 0, 1, 1], [], []>} : vector<8x20xf32>, vector<20x20xf32>, vector<8x20xf32> -> vector<8x20xf32>
    %592 = arith.mulf %591, %591 : vector<8x20xf32>
    %593 = tpu.concatenate %591, %592 in 1 : vector<8x20xf32>, vector<8x20xf32> -> vector<8x40xf32>
    %cst_216 = arith.constant dense<0.000000e+00> : vector<40xf32>
    %594 = vector.multi_reduction <add>, %593, %cst_216 [0] : vector<8x40xf32> to vector<40xf32>
    %595 = vector.shape_cast %594 : vector<40xf32> to vector<1x40xf32>
    %cst_217 = arith.constant 1.250000e-01 : f32
    %596 = vector.broadcast %cst_217 : f32 to vector<1x40xf32>
    %597 = arith.mulf %595, %596 : vector<1x40xf32>
    %598 = vector.extract_strided_slice %597 {offsets = [0, 0], sizes = [1, 20], strides = [1, 1]} : vector<1x40xf32> to vector<1x20xf32>
    %599 = vector.extract_strided_slice %597 {offsets = [0, 20], sizes = [1, 20], strides = [1, 1]} : vector<1x40xf32> to vector<1x20xf32>
    %600 = arith.mulf %598, %598 : vector<1x20xf32>
    %601 = arith.subf %599, %600 : vector<1x20xf32>
    %cst_218 = arith.constant 0.000000e+00 : f32
    %602 = vector.broadcast %cst_218 : f32 to vector<1x20xf32>
    %603 = arith.maximumf %601, %602 : vector<1x20xf32>
    %c28 = arith.constant 28 : index
    %c0_219 = arith.constant 0 : index
    %604 = vector.load %arg2[%c28, %c0_219] : memref<88x20xf32, #tpu.memory_space<vmem>>, vector<1x20xf32>
    %c52 = arith.constant 52 : index
    %c0_220 = arith.constant 0 : index
    %605 = vector.load %arg2[%c52, %c0_220] : memref<88x20xf32, #tpu.memory_space<vmem>>, vector<1x20xf32>
    %cst_221 = arith.constant 9.99999974E-6 : f32
    %606 = vector.broadcast %cst_221 : f32 to vector<1x20xf32>
    %607 = arith.addf %603, %606 : vector<1x20xf32>
    %608 = math.rsqrt %607 : vector<1x20xf32>
    %609 = arith.mulf %604, %608 : vector<1x20xf32>
    %610 = arith.mulf %598, %609 : vector<1x20xf32>
    %611 = arith.subf %605, %610 : vector<1x20xf32>
    %612 = vector.broadcast %609 : vector<1x20xf32> to vector<8x20xf32>
    %613 = arith.mulf %591, %612 : vector<8x20xf32>
    %614 = vector.broadcast %611 : vector<1x20xf32> to vector<8x20xf32>
    %615 = arith.addf %613, %614 : vector<8x20xf32>
    %616 = arith.addf %615, %559 : vector<8x20xf32>
    %cst_222 = arith.constant 0.000000e+00 : f32
    %617 = vector.broadcast %cst_222 : f32 to vector<8x20xf32>
    %618 = arith.maximumf %616, %617 : vector<8x20xf32>
    %c56 = arith.constant 56 : index
    %c0_223 = arith.constant 0 : index
    %619 = vector.load %arg2[%c56, %c0_223] : memref<88x20xf32, #tpu.memory_space<vmem>>, vector<20x2xf32>
    %c80 = arith.constant 80 : index
    %c0_224 = arith.constant 0 : index
    %620 = vector.load %arg2[%c80, %c0_224] : memref<88x20xf32, #tpu.memory_space<vmem>>, vector<1x2xf32>
    %cst_225 = arith.constant dense<0.000000e+00> : vector<8x2xf32>
    %621 = tpu.matmul %618, %619, %cst_225 {dimension_numbers = #tpu.dot_dimension_numbers<[1], [0], [0], [1], [0, 0, 1, 1], [], []>} : vector<8x20xf32>, vector<20x2xf32>, vector<8x2xf32> -> vector<8x2xf32>
    %622 = vector.broadcast %620 : vector<1x2xf32> to vector<8x2xf32>
    %623 = arith.addf %621, %622 : vector<8x2xf32>
    %c0_226 = arith.constant 0 : index
    %c0_227 = arith.constant 0 : index
    %624 = vector.load %arg3[%c0_226, %c0_227] : memref<8x2xf32, #tpu.memory_space<vmem>>, vector<8x2xf32>
    tpu.vector_store %arg3[%c0_226, %c0_227], %623 {strides = array<i32>} : memref<8x2xf32, #tpu.memory_space<vmem>>, vector<8x2xf32>,
    return
  }
}

</mosaic_0001>

<llo_original>
// kernel: tpu_custom_call.1
$region0: #{tpu_custom_call.1}
  #allocation0 [shape = 'u32[]', space=smem, size = 0x4, offset = 0x4, fixed_abs, tag = 'smem constant byte address 0x4 - core index']
  #allocation1 [shape = 'u32[144,128]{1,0:T(1,128)}', space=vmem, size = 0x12000, scoped, tag = 'internal scratch']
  %s0 = inlined_call_operand.vmem [shape: f32[8,2], index: 0, kind: input, shape index: {}]
  %s1 = inlined_call_operand.hbm [shape: f32[20,20,20], index: 1, kind: input, shape index: {}]
  %s2 = inlined_call_operand.vmem [shape: f32[88,20], index: 2, kind: input, shape index: {}]
  %s3 = inlined_call_operand.vmem [shape: f32[8,2], index: 3, kind: output, shape index: {}]
  %s4 = sld [smem:[#allocation0]]
  $region26: #{tpu_custom_call.1} parent=0
    _
  %s6 = ssub.s32 1, %s4
  %s7 = scalar_select 0, %s6, %s4
  $region1: #{tpu_custom_call.1} parent=0
    #allocation2 [shape = 'u8[245760]{0}', space=vmem, size = 0x3c000, scoped, tag = 'input window, operand 1, single buffered']
    #allocation3 [shape = 's32[1]{0}', space=sflag, size = 0x4, scoped, tag = 'scoped memory for tpu_custom_call.1']
    %8 = vsyncpa [#allocation3], 0
    // Predicated region
    $region2: #{tpu_custom_call.1} parent=1 // pred_check
      _
    $region3: #{tpu_custom_call.1} parent=1 // pred_check_branch
      %10 = sbr.rel (0) target = $region5
    $region4: #{tpu_custom_call.1} parent=1 // pred_region
      _
    $region5: #{tpu_custom_call.1} parent=1 // pred_fallthru
      _
    // Predicated region
    $region6: #{tpu_custom_call.1} parent=1 // pred_check
      _
    $region7: #{tpu_custom_call.1} parent=1 // pred_check_branch
      %12 = sbr.rel (0) target = $region9
    $region8: #{tpu_custom_call.1} parent=1 // pred_region
      %s14 = ssub.s32 7680, 7680
      %15 = vsyncadd [#allocation3], %s14
      %s16 = sshll.u32 [#allocation2], 4
      %s17 = int_to_ptr.vmem [resolvable:$true] %s16
      %22 = dma.hbm_to_vmem [thread:$0]  %s1, 7680, %s17, [#allocation3], 128, 128, 8
    $region9: #{tpu_custom_call.1} parent=1 // pred_fallthru
      _
    // Predicated region
    $region10: #{tpu_custom_call.1} parent=1 // pred_check
      _
    $region11: #{tpu_custom_call.1} parent=1 // pred_check_branch
      %24 = sbr.rel (0) target = $region13
    $region12: #{tpu_custom_call.1} parent=1 // pred_region
      _
    $region13: #{tpu_custom_call.1} parent=1 // pred_fallthru
      _
    // Predicated region
    $region14: #{tpu_custom_call.1} parent=1 // pred_check
      _
    $region15: #{tpu_custom_call.1} parent=1 // pred_check_branch
      %26 = sbr.rel (0) target = $region17
    $region16: #{tpu_custom_call.1} parent=1 // pred_region
      %27 = dma.done [#allocation3], 7680
    $region17: #{tpu_custom_call.1} parent=1 // pred_fallthru
      _
    %v28 = vld [vmem:[%s0] sm:$0xff]
    %v29 = vld [vmem:[%s2] sm:$0x3]
    %vm30 = vcmask 15360
    %v32 = vsel %vm30, %v28, 0
    %vm34 = vcmask 1041408
    %v36 = vsel %vm34, %v29, 0
    %38 = vmatprep.subr.mxu0 0.0
    %39 = vmatpush1.msra.mxu0 %v36
    %40 = vmatprep.subr.mxu0 0.0
    %41 = vmatpush1.msra.mxu0 0.0
    %42 = vmatprep.subr.mxu0 0.0
    %43 = vmatpush1.msra.mxu0 0.0
    %44 = vmatprep.subr.mxu0 0.0
    %45 = vmatpush1.msra.mxu0 0.0
    %46 = vmatprep.subr.mxu0 0.0
    %47 = vmatpush1.msra.mxu0 0.0
    %48 = vmatprep.subr.mxu0 0.0
    %49 = vmatpush1.msra.mxu0 0.0
    %50 = vmatprep.subr.mxu0 0.0
    %51 = vmatpush1.msra.mxu0 0.0
    %52 = vmatprep.subr.mxu0 0.0
    %53 = vmatpush1.msra.mxu0 0.0
    %54 = vmatprep.subr.mxu0 0.0
    %55 = vmatpush1.msra.mxu0 0.0
    %56 = vmatprep.subr.mxu0 0.0
    %57 = vmatpush1.msra.mxu0 0.0
    %58 = vmatprep.subr.mxu0 0.0
    %59 = vmatpush1.msra.mxu0 0.0
    %60 = vmatprep.subr.mxu0 0.0
    %61 = vmatpush1.msra.mxu0 0.0
    %62 = vmatprep.subr.mxu0 0.0
    %63 = vmatpush1.msra.mxu0 0.0
    %64 = vmatprep.subr.mxu0 0.0
    %65 = vmatpush1.msra.mxu0 0.0
    %66 = vmatprep.subr.mxu0 0.0
    %67 = vmatpush1.msra.mxu0 0.0
    %68 = vmatprep.subr.mxu0 0.0
    %69 = vmatpush1.msra.mxu0 0.0
    %70 = vmatprep.subr.mxu0 0.0
    %71 = vmatpush1.msra.mxu0 0.0
    %72 = vmatprep.subr.mxu0 0.0
    %73 = vmatpush1.msra.mxu0 0.0
    %74 = vmatprep.subr.mxu0 0.0
    %75 = vmatpush1.msra.mxu0 0.0
    %76 = vmatprep.subr.mxu0 0.0
    %77 = vmatpush1.msra.mxu0 0.0
    %78 = vmatprep.subr.mxu0 0.0
    %79 = vmatpush1.msra.mxu0 0.0
    %80 = vmatprep.subr.mxu0 0.0
    %81 = vmatpush1.msra.mxu0 0.0
    %82 = vmatprep.subr.mxu0 0.0
    %83 = vmatpush1.msra.mxu0 0.0
    %84 = vmatprep.subr.mxu0 0.0
    %85 = vmatpush1.msra.mxu0 0.0
    %86 = vmatprep.subr.mxu0 0.0
    %87 = vmatpush1.msra.mxu0 0.0
    %88 = vmatprep.subr.mxu0 0.0
    %89 = vmatpush1.msra.mxu0 0.0
    %90 = vmatprep.subr.mxu0 0.0
    %91 = vmatpush1.msra.mxu0 0.0
    %92 = vmatprep.subr.mxu0 0.0
    %93 = vmatpush1.msra.mxu0 0.0
    %94 = vmatprep.subr.mxu0 0.0
    %95 = vmatpush1.msra.mxu0 0.0
    %96 = vmatprep.subr.mxu0 0.0
    %97 = vmatpush1.msra.mxu0 0.0
    %98 = vmatprep.subr.mxu0 0.0
    %99 = vmatpush1.msra.mxu0 0.0
    %100 = vmatprep.subr.mxu0 0.0
    %101 = vmatpush1.msra.mxu0 0.0
    %102 = vmatprep.mubr.f32.mxu0 0.0
    %103 = vmatmul.mubr.f32.gmra.mrb[0].mxu0 %v32
    %v104 = vpop.f32.mrb[0].mxu0
    %v105 = vadd.f32 0.0, %v104
    %v106 = vpop.f32.mrb[0].mxu0
    %107 = vdwg.mxu0
    %v108 = vmul.f32 %v105, %v105
    %110 = vrot.lane.b32.xlu0 %v108, 20
    %v111 = vpop.permute.xlu0 %110
    %vm113 = vcmask 162816
    %v114 = vsel %vm113, %v105, %v111
    %vm115 = vcmask 326656
    %v116 = vsel %vm115, %v114, 0.0
    %v117 = vrot.slane %v116, 4
    %v118 = vadd.f32 %v116, %v117
    %v119 = vrot.slane %v118, 2
    %v120 = vadd.f32 %v118, %v119
    %v121 = vrot.slane %v120, 1
    %v122 = vadd.f32 %v120, %v121
    %v123 = vmul.f32 %v122, 0.125
    %v124 = vmul.f32 %v123, %v123
    %126 = vrot.lane.b32.xlu0 %v124, 20
    %v127 = vpop.permute.xlu0 %126
    %v129 = vsub.f32 %v123, %v127
    %v130 = vmax.f32 %v129, 0.0
    %v131 = vld [vmem:[%s2 + $0x8] sm:$0x1]
    %v132 = vld [vmem:[%s2 + $0x20] sm:$0x1]
    %v133 = vadd.f32 %v130, 1e-05
    %v134 = vrsqrt.pop %v133
    %136 = vrot.lane.b32.xlu0 %v134, 108
    %v137 = vpop.permute.xlu0 %136
    %v139 = vmul.f32 %v131, %v137
    %v140 = vmul.f32 %v123, %v139
    %v141 = vsub.f32 %v132, %v140
    %v142 = vlaneseq
    %v143 = vshrl.u32 %v142, 7
    %v144 = vsub.s32 0, %v143
    %v145 = vrot.slane %v139, %v144
    %v146 = vmul.f32 %v105, %v145
    %v147 = vlaneseq
    %v148 = vshrl.u32 %v147, 7
    %v149 = vsub.s32 0, %v148
    %v150 = vrot.slane %v141, %v149
    %v151 = vadd.f32 %v146, %v150
    %v152 = vmax.f32 %v151, 0.0
    %v153 = vld [vmem:[#allocation2] sm:$0xff]
    %v154 = vld [vmem:[#allocation2 + $0x8] sm:$0xff]
    %v155 = vld [vmem:[#allocation2 + $0x10] sm:$0xf]
    %v157 = vsel %vm113, %v152, 0
    %vm159 = vcmask 1043456
    %v161 = vsel %vm159, %v155, 0
    %163 = vmatprep.subr.mxu0 0.0
    %164 = vmatpush1.msra.mxu0 %v153
    %165 = vmatprep.subr.mxu0 0.0
    %166 = vmatpush1.msra.mxu0 %v154
    %167 = vmatprep.subr.mxu0 0.0
    %168 = vmatpush1.msra.mxu0 %v161
    %169 = vmatprep.subr.mxu0 0.0
    %170 = vmatpush1.msra.mxu0 0.0
    %171 = vmatprep.subr.mxu0 0.0
    %172 = vmatpush1.msra.mxu0 0.0
    %173 = vmatprep.subr.mxu0 0.0
    %174 = vmatpush1.msra.mxu0 0.0
    %175 = vmatprep.subr.mxu0 0.0
    %176 = vmatpush1.msra.mxu0 0.0
    %177 = vmatprep.subr.mxu0 0.0
    %178 = vmatpush1.msra.mxu0 0.0
    %179 = vmatprep.subr.mxu0 0.0
    %180 = vmatpush1.msra.mxu0 0.0
    %181 = vmatprep.subr.mxu0 0.0
    %182 = vmatpush1.msra.mxu0 0.0
    %183 = vmatprep.subr.mxu0 0.0
    %184 = vmatpush1.msra.mxu0 0.0
    %185 = vmatprep.subr.mxu0 0.0
    %186 = vmatpush1.msra.mxu0 0.0
    %187 = vmatprep.subr.mxu0 0.0
    %188 = vmatpush1.msra.mxu0 0.0
    %189 = vmatprep.subr.mxu0 0.0
    %190 = vmatpush1.msra.mxu0 0.0
    %191 = vmatprep.subr.mxu0 0.0
    %192 = vmatpush1.msra.mxu0 0.0
    %193 = vmatprep.subr.mxu0 0.0
    %194 = vmatpush1.msra.mxu0 0.0
    %195 = vmatprep.subr.mxu0 0.0
    %196 = vmatpush1.msra.mxu0 0.0
    %197 = vmatprep.subr.mxu0 0.0
    %198 = vmatpush1.msra.mxu0 0.0
    %199 = vmatprep.subr.mxu0 0.0
    %200 = vmatpush1.msra.mxu0 0.0
    %201 = vmatprep.subr.mxu0 0.0
    %202 = vmatpush1.msra.mxu0 0.0
    %203 = vmatprep.subr.mxu0 0.0
    %204 = vmatpush1.msra.mxu0 0.0
    %205 = vmatprep.subr.mxu0 0.0
    %206 = vmatpush1.msra.mxu0 0.0
    %207 = vmatprep.subr.mxu0 0.0
    %208 = vmatpush1.msra.mxu0 0.0
    %209 = vmatprep.subr.mxu0 0.0
    %210 = vmatpush1.msra.mxu0 0.0
    %211 = vmatprep.subr.mxu0 0.0
    %212 = vmatpush1.msra.mxu0 0.0
    %213 = vmatprep.subr.mxu0 0.0
    %214 = vmatpush1.msra.mxu0 0.0
    %215 = vmatprep.subr.mxu0 0.0
    %216 = vmatpush1.msra.mxu0 0.0
    %217 = vmatprep.subr.mxu0 0.0
    %218 = vmatpush1.msra.mxu0 0.0
    %219 = vmatprep.subr.mxu0 0.0
    %220 = vmatpush1.msra.mxu0 0.0
    %221 = vmatprep.subr.mxu0 0.0
    %222 = vmatpush1.msra.mxu0 0.0
    %223 = vmatprep.subr.mxu0 0.0
    %224 = vmatpush1.msra.mxu0 0.0
    %225 = vmatprep.subr.mxu0 0.0
    %226 = vmatpush1.msra.mxu0 0.0
    %227 = vmatprep.mubr.f32.mxu0 0.0
    %228 = vmatmul.mubr.f32.gmra.mrb[0].mxu0 %v157
    %v229 = vpop.f32.mrb[0].mxu0
    %v230 = vadd.f32 0.0, %v229
    %v231 = vpop.f32.mrb[0].mxu0
    %232 = vdwg.mxu0
    %v233 = vmul.f32 %v230, %v230
    %235 = vrot.lane.b32.xlu0 %v233, 20
    %v236 = vpop.permute.xlu0 %235
    %v238 = vsel %vm113, %v230, %v236
    %v239 = vsel %vm115, %v238, 0.0
    %v240 = vrot.slane %v239, 4
    %v241 = vadd.f32 %v239, %v240
    %v242 = vrot.slane %v241, 2
    %v243 = vadd.f32 %v241, %v242
    %v244 = vrot.slane %v243, 1
    %v245 = vadd.f32 %v243, %v244
    %v246 = vmul.f32 %v245, 0.125
    %v247 = vmul.f32 %v246, %v246
    %249 = vrot.lane.b32.xlu0 %v247, 20
    %v250 = vpop.permute.xlu0 %249
    %v252 = vsub.f32 %v246, %v250
    %v253 = vmax.f32 %v252, 0.0
    %v254 = vld [vmem:[%s2 + $0x9] sm:$0x1]
    %v255 = vld [vmem:[%s2 + $0x21] sm:$0x1]
    %v256 = vadd.f32 %v253, 1e-05
    %v257 = vrsqrt.pop %v256
    %259 = vrot.lane.b32.xlu0 %v257, 108
    %v260 = vpop.permute.xlu0 %259
    %v262 = vmul.f32 %v254, %v260
    %v263 = vmul.f32 %v246, %v262
    %v264 = vsub.f32 %v255, %v263
    %v265 = vlaneseq
    %v266 = vshrl.u32 %v265, 7
    %v267 = vsub.s32 0, %v266
    %v268 = vrot.slane %v262, %v267
    %v269 = vmul.f32 %v230, %v268
    %v270 = vlaneseq
    %v271 = vshrl.u32 %v270, 7
    %v272 = vsub.s32 0, %v271
    %v273 = vrot.slane %v264, %v272
    %v274 = vadd.f32 %v269, %v273
    %v275 = vmax.f32 %v274, 0.0
    %s276 = scalar_lea.vmem [#allocation2], 24
    %v277 = vld [vmem:[%s276] sm:$0xff]
    %v278 = vld [vmem:[%s276 + $0x8] sm:$0xff]
    %v279 = vld [vmem:[%s276 + $0x10] sm:$0xf]
    %v281 = vsel %vm113, %v275, 0
    %v284 = vsel %vm159, %v279, 0
    %286 = vmatprep.subr.mxu0 0.0
    %287 = vmatpush1.msra.mxu0 %v277
    %288 = vmatprep.subr.mxu0 0.0
    %289 = vmatpush1.msra.mxu0 %v278
    %290 = vmatprep.subr.mxu0 0.0
    %291 = vmatpush1.msra.mxu0 %v284
    %292 = vmatprep.subr.mxu0 0.0
    %293 = vmatpush1.msra.mxu0 0.0
    %294 = vmatprep.subr.mxu0 0.0
    %295 = vmatpush1.msra.mxu0 0.0
    %296 = vmatprep.subr.mxu0 0.0
    %297 = vmatpush1.msra.mxu0 0.0
    %298 = vmatprep.subr.mxu0 0.0
    %299 = vmatpush1.msra.mxu0 0.0
    %300 = vmatprep.subr.mxu0 0.0
    %301 = vmatpush1.msra.mxu0 0.0
    %302 = vmatprep.subr.mxu0 0.0
    %303 = vmatpush1.msra.mxu0 0.0
    %304 = vmatprep.subr.mxu0 0.0
    %305 = vmatpush1.msra.mxu0 0.0
    %306 = vmatprep.subr.mxu0 0.0
    %307 = vmatpush1.msra.mxu0 0.0
    %308 = vmatprep.subr.mxu0 0.0
    %309 = vmatpush1.msra.mxu0 0.0
    %310 = vmatprep.subr.mxu0 0.0
    %311 = vmatpush1.msra.mxu0 0.0
    %312 = vmatprep.subr.mxu0 0.0
    %313 = vmatpush1.msra.mxu0 0.0
    %314 = vmatprep.subr.mxu0 0.0
    %315 = vmatpush1.msra.mxu0 0.0
    %316 = vmatprep.subr.mxu0 0.0
    %317 = vmatpush1.msra.mxu0 0.0
    %318 = vmatprep.subr.mxu0 0.0
    %319 = vmatpush1.msra.mxu0 0.0
    %320 = vmatprep.subr.mxu0 0.0
    %321 = vmatpush1.msra.mxu0 0.0
    %322 = vmatprep.subr.mxu0 0.0
    %323 = vmatpush1.msra.mxu0 0.0
    %324 = vmatprep.subr.mxu0 0.0
    %325 = vmatpush1.msra.mxu0 0.0
    %326 = vmatprep.subr.mxu0 0.0
    %327 = vmatpush1.msra.mxu0 0.0
    %328 = vmatprep.subr.mxu0 0.0
    %329 = vmatpush1.msra.mxu0 0.0
    %330 = vmatprep.subr.mxu0 0.0
    %331 = vmatpush1.msra.mxu0 0.0
    %332 = vmatprep.subr.mxu0 0.0
    %333 = vmatpush1.msra.mxu0 0.0
    %334 = vmatprep.subr.mxu0 0.0
    %335 = vmatpush1.msra.mxu0 0.0
    %336 = vmatprep.subr.mxu0 0.0
    %337 = vmatpush1.msra.mxu0 0.0
    %338 = vmatprep.subr.mxu0 0.0
    %339 = vmatpush1.msra.mxu0 0.0
    %340 = vmatprep.subr.mxu0 0.0
    %341 = vmatpush1.msra.mxu0 0.0
    %342 = vmatprep.subr.mxu0 0.0
    %343 = vmatpush1.msra.mxu0 0.0
    %344 = vmatprep.subr.mxu0 0.0
    %345 = vmatpush1.msra.mxu0 0.0
    %346 = vmatprep.subr.mxu0 0.0
    %347 = vmatpush1.msra.mxu0 0.0
    %348 = vmatprep.subr.mxu0 0.0
    %349 = vmatpush1.msra.mxu0 0.0
    %350 = vmatprep.mubr.f32.mxu0 0.0
    %351 = vmatmul.mubr.f32.gmra.mrb[0].mxu0 %v281
    %v352 = vpop.f32.mrb[0].mxu0
    %v353 = vadd.f32 0.0, %v352
    %v354 = vpop.f32.mrb[0].mxu0
    %355 = vdwg.mxu0
    %v356 = vmul.f32 %v353, %v353
    %358 = vrot.lane.b32.xlu0 %v356, 20
    %v359 = vpop.permute.xlu0 %358
    %v361 = vsel %vm113, %v353, %v359
    %v362 = vsel %vm115, %v361, 0.0
    %v363 = vrot.slane %v362, 4
    %v364 = vadd.f32 %v362, %v363
    %v365 = vrot.slane %v364, 2
    %v366 = vadd.f32 %v364, %v365
    %v367 = vrot.slane %v366, 1
    %v368 = vadd.f32 %v366, %v367
    %v369 = vmul.f32 %v368, 0.125
    %v370 = vmul.f32 %v369, %v369
    %372 = vrot.lane.b32.xlu0 %v370, 20
    %v373 = vpop.permute.xlu0 %372
    %v375 = vsub.f32 %v369, %v373
    %v376 = vmax.f32 %v375, 0.0
    %v377 = vld [vmem:[%s2 + $0xa] sm:$0x1]
    %v378 = vld [vmem:[%s2 + $0x22] sm:$0x1]
    %v379 = vadd.f32 %v376, 1e-05
    %v380 = vrsqrt.pop %v379
    %382 = vrot.lane.b32.xlu0 %v380, 108
    %v383 = vpop.permute.xlu0 %382
    %v385 = vmul.f32 %v377, %v383
    %v386 = vmul.f32 %v369, %v385
    %v387 = vsub.f32 %v378, %v386
    %v388 = vlaneseq
    %v389 = vshrl.u32 %v388, 7
    %v390 = vsub.s32 0, %v389
    %v391 = vrot.slane %v385, %v390
    %v392 = vmul.f32 %v353, %v391
    %v393 = vlaneseq
    %v394 = vshrl.u32 %v393, 7
    %v395 = vsub.s32 0, %v394
    %v396 = vrot.slane %v387, %v395
    %v397 = vadd.f32 %v392, %v396
    %v398 = vadd.f32 %v397, %v152
    %v399 = vmax.f32 %v398, 0.0
    %s400 = scalar_lea.vmem [#allocation2], 48
    %v401 = vld [vmem:[%s400] sm:$0xff]
    %v402 = vld [vmem:[%s400 + $0x8] sm:$0xff]
    %v403 = vld [vmem:[%s400 + $0x10] sm:$0xf]
    %v405 = vsel %vm113, %v399, 0
    %v408 = vsel %vm159, %v403, 0
    %410 = vmatprep.subr.mxu0 0.0
    %411 = vmatpush1.msra.mxu0 %v401
    %412 = vmatprep.subr.mxu0 0.0
    %413 = vmatpush1.msra.mxu0 %v402
    %414 = vmatprep.subr.mxu0 0.0
    %415 = vmatpush1.msra.mxu0 %v408
    %416 = vmatprep.subr.mxu0 0.0
    %417 = vmatpush1.msra.mxu0 0.0
    %418 = vmatprep.subr.mxu0 0.0
    %419 = vmatpush1.msra.mxu0 0.0
    %420 = vmatprep.subr.mxu0 0.0
    %421 = vmatpush1.msra.mxu0 0.0
    %422 = vmatprep.subr.mxu0 0.0
    %423 = vmatpush1.msra.mxu0 0.0
    %424 = vmatprep.subr.mxu0 0.0
    %425 = vmatpush1.msra.mxu0 0.0
    %426 = vmatprep.subr.mxu0 0.0
    %427 = vmatpush1.msra.mxu0 0.0
    %428 = vmatprep.subr.mxu0 0.0
    %429 = vmatpush1.msra.mxu0 0.0
    %430 = vmatprep.subr.mxu0 0.0
    %431 = vmatpush1.msra.mxu0 0.0
    %432 = vmatprep.subr.mxu0 0.0
    %433 = vmatpush1.msra.mxu0 0.0
    %434 = vmatprep.subr.mxu0 0.0
    %435 = vmatpush1.msra.mxu0 0.0
    %436 = vmatprep.subr.mxu0 0.0
    %437 = vmatpush1.msra.mxu0 0.0
    %438 = vmatprep.subr.mxu0 0.0
    %439 = vmatpush1.msra.mxu0 0.0
    %440 = vmatprep.subr.mxu0 0.0
    %441 = vmatpush1.msra.mxu0 0.0
    %442 = vmatprep.subr.mxu0 0.0
    %443 = vmatpush1.msra.mxu0 0.0
    %444 = vmatprep.subr.mxu0 0.0
    %445 = vmatpush1.msra.mxu0 0.0
    %446 = vmatprep.subr.mxu0 0.0
    %447 = vmatpush1.msra.mxu0 0.0
    %448 = vmatprep.subr.mxu0 0.0
    %449 = vmatpush1.msra.mxu0 0.0
    %450 = vmatprep.subr.mxu0 0.0
    %451 = vmatpush1.msra.mxu0 0.0
    %452 = vmatprep.subr.mxu0 0.0
    %453 = vmatpush1.msra.mxu0 0.0
    %454 = vmatprep.subr.mxu0 0.0
    %455 = vmatpush1.msra.mxu0 0.0
    %456 = vmatprep.subr.mxu0 0.0
    %457 = vmatpush1.msra.mxu0 0.0
    %458 = vmatprep.subr.mxu0 0.0
    %459 = vmatpush1.msra.mxu0 0.0
    %460 = vmatprep.subr.mxu0 0.0
    %461 = vmatpush1.msra.mxu0 0.0
    %462 = vmatprep.subr.mxu0 0.0
    %463 = vmatpush1.msra.mxu0 0.0
    %464 = vmatprep.subr.mxu0 0.0
    %465 = vmatpush1.msra.mxu0 0.0
    %466 = vmatprep.subr.mxu0 0.0
    %467 = vmatpush1.msra.mxu0 0.0
    %468 = vmatprep.subr.mxu0 0.0
    %469 = vmatpush1.msra.mxu0 0.0
    %470 = vmatprep.subr.mxu0 0.0
    %471 = vmatpush1.msra.mxu0 0.0
    %472 = vmatprep.subr.mxu0 0.0
    %473 = vmatpush1.msra.mxu0 0.0
    %474 = vmatprep.mubr.f32.mxu0 0.0
    %475 = vmatmul.mubr.f32.gmra.mrb[0].mxu0 %v405
    %v476 = vpop.f32.mrb[0].mxu0
    %v477 = vadd.f32 0.0, %v476
    %v478 = vpop.f32.mrb[0].mxu0
    %479 = vdwg.mxu0
    %v480 = vmul.f32 %v477, %v477
    %482 = vrot.lane.b32.xlu0 %v480, 20
    %v483 = vpop.permute.xlu0 %482
    %v485 = vsel %vm113, %v477, %v483
    %v486 = vsel %vm115, %v485, 0.0
    %v487 = vrot.slane %v486, 4
    %v488 = vadd.f32 %v486, %v487
    %v489 = vrot.slane %v488, 2
    %v490 = vadd.f32 %v488, %v489
    %v491 = vrot.slane %v490, 1
    %v492 = vadd.f32 %v490, %v491
    %v493 = vmul.f32 %v492, 0.125
    %v494 = vmul.f32 %v493, %v493
    %496 = vrot.lane.b32.xlu0 %v494, 20
    %v497 = vpop.permute.xlu0 %496
    %v499 = vsub.f32 %v493, %v497
    %v500 = vmax.f32 %v499, 0.0
    %v501 = vld [vmem:[%s2 + $0xb] sm:$0x1]
    %v502 = vld [vmem:[%s2 + $0x23] sm:$0x1]
    %v503 = vadd.f32 %v500, 1e-05
    %v504 = vrsqrt.pop %v503
    %506 = vrot.lane.b32.xlu0 %v504, 108
    %v507 = vpop.permute.xlu0 %506
    %v509 = vmul.f32 %v501, %v507
    %v510 = vmul.f32 %v493, %v509
    %v511 = vsub.f32 %v502, %v510
    %v512 = vlaneseq
    %v513 = vshrl.u32 %v512, 7
    %v514 = vsub.s32 0, %v513
    %v515 = vrot.slane %v509, %v514
    %v516 = vmul.f32 %v477, %v515
    %v517 = vlaneseq
    %v518 = vshrl.u32 %v517, 7
    %v519 = vsub.s32 0, %v518
    %v520 = vrot.slane %v511, %v519
    %v521 = vadd.f32 %v516, %v520
    %v522 = vmax.f32 %v521, 0.0
    %s523 = scalar_lea.vmem [#allocation2], 72
    %v524 = vld [vmem:[%s523] sm:$0xff]
    %v525 = vld [vmem:[%s523 + $0x8] sm:$0xff]
    %v526 = vld [vmem:[%s523 + $0x10] sm:$0xf]
    %v528 = vsel %vm113, %v522, 0
    %v531 = vsel %vm159, %v526, 0
    %533 = vmatprep.subr.mxu0 0.0
    %534 = vmatpush1.msra.mxu0 %v524
    %535 = vmatprep.subr.mxu0 0.0
    %536 = vmatpush1.msra.mxu0 %v525
    %537 = vmatprep.subr.mxu0 0.0
    %538 = vmatpush1.msra.mxu0 %v531
    %539 = vmatprep.subr.mxu0 0.0
    %540 = vmatpush1.msra.mxu0 0.0
    %541 = vmatprep.subr.mxu0 0.0
    %542 = vmatpush1.msra.mxu0 0.0
    %543 = vmatprep.subr.mxu0 0.0
    %544 = vmatpush1.msra.mxu0 0.0
    %545 = vmatprep.subr.mxu0 0.0
    %546 = vmatpush1.msra.mxu0 0.0
    %547 = vmatprep.subr.mxu0 0.0
    %548 = vmatpush1.msra.mxu0 0.0
    %549 = vmatprep.subr.mxu0 0.0
    %550 = vmatpush1.msra.mxu0 0.0
    %551 = vmatprep.subr.mxu0 0.0
    %552 = vmatpush1.msra.mxu0 0.0
    %553 = vmatprep.subr.mxu0 0.0
    %554 = vmatpush1.msra.mxu0 0.0
    %555 = vmatprep.subr.mxu0 0.0
    %556 = vmatpush1.msra.mxu0 0.0
    %557 = vmatprep.subr.mxu0 0.0
    %558 = vmatpush1.msra.mxu0 0.0
    %559 = vmatprep.subr.mxu0 0.0
    %560 = vmatpush1.msra.mxu0 0.0
    %561 = vmatprep.subr.mxu0 0.0
    %562 = vmatpush1.msra.mxu0 0.0
    %563 = vmatprep.subr.mxu0 0.0
    %564 = vmatpush1.msra.mxu0 0.0
    %565 = vmatprep.subr.mxu0 0.0
    %566 = vmatpush1.msra.mxu0 0.0
    %567 = vmatprep.subr.mxu0 0.0
    %568 = vmatpush1.msra.mxu0 0.0
    %569 = vmatprep.subr.mxu0 0.0
    %570 = vmatpush1.msra.mxu0 0.0
    %571 = vmatprep.subr.mxu0 0.0
    %572 = vmatpush1.msra.mxu0 0.0
    %573 = vmatprep.subr.mxu0 0.0
    %574 = vmatpush1.msra.mxu0 0.0
    %575 = vmatprep.subr.mxu0 0.0
    %576 = vmatpush1.msra.mxu0 0.0
    %577 = vmatprep.subr.mxu0 0.0
    %578 = vmatpush1.msra.mxu0 0.0
    %579 = vmatprep.subr.mxu0 0.0
    %580 = vmatpush1.msra.mxu0 0.0
    %581 = vmatprep.subr.mxu0 0.0
    %582 = vmatpush1.msra.mxu0 0.0
    %583 = vmatprep.subr.mxu0 0.0
    %584 = vmatpush1.msra.mxu0 0.0
    %585 = vmatprep.subr.mxu0 0.0
    %586 = vmatpush1.msra.mxu0 0.0
    %587 = vmatprep.subr.mxu0 0.0
    %588 = vmatpush1.msra.mxu0 0.0
    %589 = vmatprep.subr.mxu0 0.0
    %590 = vmatpush1.msra.mxu0 0.0
    %591 = vmatprep.subr.mxu0 0.0
    %592 = vmatpush1.msra.mxu0 0.0
    %593 = vmatprep.subr.mxu0 0.0
    %594 = vmatpush1.msra.mxu0 0.0
    %595 = vmatprep.subr.mxu0 0.0
    %596 = vmatpush1.msra.mxu0 0.0
    %597 = vmatprep.mubr.f32.mxu0 0.0
    %598 = vmatmul.mubr.f32.gmra.mrb[0].mxu0 %v528
    %v599 = vpop.f32.mrb[0].mxu0
    %v600 = vadd.f32 0.0, %v599
    %v601 = vpop.f32.mrb[0].mxu0
    %602 = vdwg.mxu0
    %v603 = vmul.f32 %v600, %v600
    %605 = vrot.lane.b32.xlu0 %v603, 20
    %v606 = vpop.permute.xlu0 %605
    %v608 = vsel %vm113, %v600, %v606
    %v609 = vsel %vm115, %v608, 0.0
    %v610 = vrot.slane %v609, 4
    %v611 = vadd.f32 %v609, %v610
    %v612 = vrot.slane %v611, 2
    %v613 = vadd.f32 %v611, %v612
    %v614 = vrot.slane %v613, 1
    %v615 = vadd.f32 %v613, %v614
    %v616 = vmul.f32 %v615, 0.125
    %v617 = vmul.f32 %v616, %v616
    %619 = vrot.lane.b32.xlu0 %v617, 20
    %v620 = vpop.permute.xlu0 %619
    %v622 = vsub.f32 %v616, %v620
    %v623 = vmax.f32 %v622, 0.0
    %v624 = vld [vmem:[%s2 + $0xc] sm:$0x1]
    %v625 = vld [vmem:[%s2 + $0x24] sm:$0x1]
    %v626 = vadd.f32 %v623, 1e-05
    %v627 = vrsqrt.pop %v626
    %629 = vrot.lane.b32.xlu0 %v627, 108
    %v630 = vpop.permute.xlu0 %629
    %v632 = vmul.f32 %v624, %v630
    %v633 = vmul.f32 %v616, %v632
    %v634 = vsub.f32 %v625, %v633
    %v635 = vlaneseq
    %v636 = vshrl.u32 %v635, 7
    %v637 = vsub.s32 0, %v636
    %v638 = vrot.slane %v632, %v637
    %v639 = vmul.f32 %v600, %v638
    %v640 = vlaneseq
    %v641 = vshrl.u32 %v640, 7
    %v642 = vsub.s32 0, %v641
    %v643 = vrot.slane %v634, %v642
    %v644 = vadd.f32 %v639, %v643
    %v645 = vadd.f32 %v644, %v399
    %v646 = vmax.f32 %v645, 0.0
    %s647 = scalar_lea.vmem [#allocation2], 96
    %v648 = vld [vmem:[%s647] sm:$0xff]
    %v649 = vld [vmem:[%s647 + $0x8] sm:$0xff]
    %v650 = vld [vmem:[%s647 + $0x10] sm:$0xf]
    %v652 = vsel %vm113, %v646, 0
    %v655 = vsel %vm159, %v650, 0
    %657 = vmatprep.subr.mxu0 0.0
    %658 = vmatpush1.msra.mxu0 %v648
    %659 = vmatprep.subr.mxu0 0.0
    %660 = vmatpush1.msra.mxu0 %v649
    %661 = vmatprep.subr.mxu0 0.0
    %662 = vmatpush1.msra.mxu0 %v655
    %663 = vmatprep.subr.mxu0 0.0
    %664 = vmatpush1.msra.mxu0 0.0
    %665 = vmatprep.subr.mxu0 0.0
    %666 = vmatpush1.msra.mxu0 0.0
    %667 = vmatprep.subr.mxu0 0.0
    %668 = vmatpush1.msra.mxu0 0.0
    %669 = vmatprep.subr.mxu0 0.0
    %670 = vmatpush1.msra.mxu0 0.0
    %671 = vmatprep.subr.mxu0 0.0
    %672 = vmatpush1.msra.mxu0 0.0
    %673 = vmatprep.subr.mxu0 0.0
    %674 = vmatpush1.msra.mxu0 0.0
    %675 = vmatprep.subr.mxu0 0.0
    %676 = vmatpush1.msra.mxu0 0.0
    %677 = vmatprep.subr.mxu0 0.0
    %678 = vmatpush1.msra.mxu0 0.0
    %679 = vmatprep.subr.mxu0 0.0
    %680 = vmatpush1.msra.mxu0 0.0
    %681 = vmatprep.subr.mxu0 0.0
    %682 = vmatpush1.msra.mxu0 0.0
    %683 = vmatprep.subr.mxu0 0.0
    %684 = vmatpush1.msra.mxu0 0.0
    %685 = vmatprep.subr.mxu0 0.0
    %686 = vmatpush1.msra.mxu0 0.0
    %687 = vmatprep.subr.mxu0 0.0
    %688 = vmatpush1.msra.mxu0 0.0
    %689 = vmatprep.subr.mxu0 0.0
    %690 = vmatpush1.msra.mxu0 0.0
    %691 = vmatprep.subr.mxu0 0.0
    %692 = vmatpush1.msra.mxu0 0.0
    %693 = vmatprep.subr.mxu0 0.0
    %694 = vmatpush1.msra.mxu0 0.0
    %695 = vmatprep.subr.mxu0 0.0
    %696 = vmatpush1.msra.mxu0 0.0
    %697 = vmatprep.subr.mxu0 0.0
    %698 = vmatpush1.msra.mxu0 0.0
    %699 = vmatprep.subr.mxu0 0.0
    %700 = vmatpush1.msra.mxu0 0.0
    %701 = vmatprep.subr.mxu0 0.0
    %702 = vmatpush1.msra.mxu0 0.0
    %703 = vmatprep.subr.mxu0 0.0
    %704 = vmatpush1.msra.mxu0 0.0
    %705 = vmatprep.subr.mxu0 0.0
    %706 = vmatpush1.msra.mxu0 0.0
    %707 = vmatprep.subr.mxu0 0.0
    %708 = vmatpush1.msra.mxu0 0.0
    %709 = vmatprep.subr.mxu0 0.0
    %710 = vmatpush1.msra.mxu0 0.0
    %711 = vmatprep.subr.mxu0 0.0
    %712 = vmatpush1.msra.mxu0 0.0
    %713 = vmatprep.subr.mxu0 0.0
    %714 = vmatpush1.msra.mxu0 0.0
    %715 = vmatprep.subr.mxu0 0.0
    %716 = vmatpush1.msra.mxu0 0.0
    %717 = vmatprep.subr.mxu0 0.0
    %718 = vmatpush1.msra.mxu0 0.0
    %719 = vmatprep.subr.mxu0 0.0
    %720 = vmatpush1.msra.mxu0 0.0
    %721 = vmatprep.mubr.f32.mxu0 0.0
    %722 = vmatmul.mubr.f32.gmra.mrb[0].mxu0 %v652
    %v723 = vpop.f32.mrb[0].mxu0
    %v724 = vadd.f32 0.0, %v723
    %v725 = vpop.f32.mrb[0].mxu0
    %726 = vdwg.mxu0
    %v727 = vmul.f32 %v724, %v724
    %729 = vrot.lane.b32.xlu0 %v727, 20
    %v730 = vpop.permute.xlu0 %729
    %v732 = vsel %vm113, %v724, %v730
    %v733 = vsel %vm115, %v732, 0.0
    %v734 = vrot.slane %v733, 4
    %v735 = vadd.f32 %v733, %v734
    %v736 = vrot.slane %v735, 2
    %v737 = vadd.f32 %v735, %v736
    %v738 = vrot.slane %v737, 1
    %v739 = vadd.f32 %v737, %v738
    %v740 = vmul.f32 %v739, 0.125
    %v741 = vmul.f32 %v740, %v740
    %743 = vrot.lane.b32.xlu0 %v741, 20
    %v744 = vpop.permute.xlu0 %743
    %v746 = vsub.f32 %v740, %v744
    %v747 = vmax.f32 %v746, 0.0
    %v748 = vld [vmem:[%s2 + $0xd] sm:$0x1]
    %v749 = vld [vmem:[%s2 + $0x25] sm:$0x1]
    %v750 = vadd.f32 %v747, 1e-05
    %v751 = vrsqrt.pop %v750
    %753 = vrot.lane.b32.xlu0 %v751, 108
    %v754 = vpop.permute.xlu0 %753
    %v756 = vmul.f32 %v748, %v754
    %v757 = vmul.f32 %v740, %v756
    %v758 = vsub.f32 %v749, %v757
    %v759 = vlaneseq
    %v760 = vshrl.u32 %v759, 7
    %v761 = vsub.s32 0, %v760
    %v762 = vrot.slane %v756, %v761
    %v763 = vmul.f32 %v724, %v762
    %v764 = vlaneseq
    %v765 = vshrl.u32 %v764, 7
    %v766 = vsub.s32 0, %v765
    %v767 = vrot.slane %v758, %v766
    %v768 = vadd.f32 %v763, %v767
    %v769 = vmax.f32 %v768, 0.0
    %s770 = scalar_lea.vmem [#allocation2], 120
    %v771 = vld [vmem:[%s770] sm:$0xff]
    %v772 = vld [vmem:[%s770 + $0x8] sm:$0xff]
    %v773 = vld [vmem:[%s770 + $0x10] sm:$0xf]
    %v775 = vsel %vm113, %v769, 0
    %v778 = vsel %vm159, %v773, 0
    %780 = vmatprep.subr.mxu0 0.0
    %781 = vmatpush1.msra.mxu0 %v771
    %782 = vmatprep.subr.mxu0 0.0
    %783 = vmatpush1.msra.mxu0 %v772
    %784 = vmatprep.subr.mxu0 0.0
    %785 = vmatpush1.msra.mxu0 %v778
    %786 = vmatprep.subr.mxu0 0.0
    %787 = vmatpush1.msra.mxu0 0.0
    %788 = vmatprep.subr.mxu0 0.0
    %789 = vmatpush1.msra.mxu0 0.0
    %790 = vmatprep.subr.mxu0 0.0
    %791 = vmatpush1.msra.mxu0 0.0
    %792 = vmatprep.subr.mxu0 0.0
    %793 = vmatpush1.msra.mxu0 0.0
    %794 = vmatprep.subr.mxu0 0.0
    %795 = vmatpush1.msra.mxu0 0.0
    %796 = vmatprep.subr.mxu0 0.0
    %797 = vmatpush1.msra.mxu0 0.0
    %798 = vmatprep.subr.mxu0 0.0
    %799 = vmatpush1.msra.mxu0 0.0
    %800 = vmatprep.subr.mxu0 0.0
    %801 = vmatpush1.msra.mxu0 0.0
    %802 = vmatprep.subr.mxu0 0.0
    %803 = vmatpush1.msra.mxu0 0.0
    %804 = vmatprep.subr.mxu0 0.0
    %805 = vmatpush1.msra.mxu0 0.0
    %806 = vmatprep.subr.mxu0 0.0
    %807 = vmatpush1.msra.mxu0 0.0
    %808 = vmatprep.subr.mxu0 0.0
    %809 = vmatpush1.msra.mxu0 0.0
    %810 = vmatprep.subr.mxu0 0.0
    %811 = vmatpush1.msra.mxu0 0.0
    %812 = vmatprep.subr.mxu0 0.0
    %813 = vmatpush1.msra.mxu0 0.0
    %814 = vmatprep.subr.mxu0 0.0
    %815 = vmatpush1.msra.mxu0 0.0
    %816 = vmatprep.subr.mxu0 0.0
    %817 = vmatpush1.msra.mxu0 0.0
    %818 = vmatprep.subr.mxu0 0.0
    %819 = vmatpush1.msra.mxu0 0.0
    %820 = vmatprep.subr.mxu0 0.0
    %821 = vmatpush1.msra.mxu0 0.0
    %822 = vmatprep.subr.mxu0 0.0
    %823 = vmatpush1.msra.mxu0 0.0
    %824 = vmatprep.subr.mxu0 0.0
    %825 = vmatpush1.msra.mxu0 0.0
    %826 = vmatprep.subr.mxu0 0.0
    %827 = vmatpush1.msra.mxu0 0.0
    %828 = vmatprep.subr.mxu0 0.0
    %829 = vmatpush1.msra.mxu0 0.0
    %830 = vmatprep.subr.mxu0 0.0
    %831 = vmatpush1.msra.mxu0 0.0
    %832 = vmatprep.subr.mxu0 0.0
    %833 = vmatpush1.msra.mxu0 0.0
    %834 = vmatprep.subr.mxu0 0.0
    %835 = vmatpush1.msra.mxu0 0.0
    %836 = vmatprep.subr.mxu0 0.0
    %837 = vmatpush1.msra.mxu0 0.0
    %838 = vmatprep.subr.mxu0 0.0
    %839 = vmatpush1.msra.mxu0 0.0
    %840 = vmatprep.subr.mxu0 0.0
    %841 = vmatpush1.msra.mxu0 0.0
    %842 = vmatprep.subr.mxu0 0.0
    %843 = vmatpush1.msra.mxu0 0.0
    %844 = vmatprep.mubr.f32.mxu0 0.0
    %845 = vmatmul.mubr.f32.gmra.mrb[0].mxu0 %v775
    %v846 = vpop.f32.mrb[0].mxu0
    %v847 = vadd.f32 0.0, %v846
    %v848 = vpop.f32.mrb[0].mxu0
    %849 = vdwg.mxu0
    %v850 = vmul.f32 %v847, %v847
    %852 = vrot.lane.b32.xlu0 %v850, 20
    %v853 = vpop.permute.xlu0 %852
    %v855 = vsel %vm113, %v847, %v853
    %v856 = vsel %vm115, %v855, 0.0
    %v857 = vrot.slane %v856, 4
    %v858 = vadd.f32 %v856, %v857
    %v859 = vrot.slane %v858, 2
    %v860 = vadd.f32 %v858, %v859
    %v861 = vrot.slane %v860, 1
    %v862 = vadd.f32 %v860, %v861
    %v863 = vmul.f32 %v862, 0.125
    %v864 = vmul.f32 %v863, %v863
    %866 = vrot.lane.b32.xlu0 %v864, 20
    %v867 = vpop.permute.xlu0 %866
    %v869 = vsub.f32 %v863, %v867
    %v870 = vmax.f32 %v869, 0.0
    %v871 = vld [vmem:[%s2 + $0xe] sm:$0x1]
    %v872 = vld [vmem:[%s2 + $0x26] sm:$0x1]
    %v873 = vadd.f32 %v870, 1e-05
    %v874 = vrsqrt.pop %v873
    %876 = vrot.lane.b32.xlu0 %v874, 108
    %v877 = vpop.permute.xlu0 %876
    %v879 = vmul.f32 %v871, %v877
    %v880 = vmul.f32 %v863, %v879
    %v881 = vsub.f32 %v872, %v880
    %v882 = vlaneseq
    %v883 = vshrl.u32 %v882, 7
    %v884 = vsub.s32 0, %v883
    %v885 = vrot.slane %v879, %v884
    %v886 = vmul.f32 %v847, %v885
    %v887 = vlaneseq
    %v888 = vshrl.u32 %v887, 7
    %v889 = vsub.s32 0, %v888
    %v890 = vrot.slane %v881, %v889
    %v891 = vadd.f32 %v886, %v890
    %v892 = vadd.f32 %v891, %v646
    %v893 = vmax.f32 %v892, 0.0
    %s894 = scalar_lea.vmem [#allocation2], 144
    %v895 = vld [vmem:[%s894] sm:$0xff]
    %v896 = vld [vmem:[%s894 + $0x8] sm:$0xff]
    %v897 = vld [vmem:[%s894 + $0x10] sm:$0xf]
    %v899 = vsel %vm113, %v893, 0
    %v902 = vsel %vm159, %v897, 0
    %904 = vmatprep.subr.mxu0 0.0
    %905 = vmatpush1.msra.mxu0 %v895
    %906 = vmatprep.subr.mxu0 0.0
    %907 = vmatpush1.msra.mxu0 %v896
    %908 = vmatprep.subr.mxu0 0.0
    %909 = vmatpush1.msra.mxu0 %v902
    %910 = vmatprep.subr.mxu0 0.0
    %911 = vmatpush1.msra.mxu0 0.0
    %912 = vmatprep.subr.mxu0 0.0
    %913 = vmatpush1.msra.mxu0 0.0
    %914 = vmatprep.subr.mxu0 0.0
    %915 = vmatpush1.msra.mxu0 0.0
    %916 = vmatprep.subr.mxu0 0.0
    %917 = vmatpush1.msra.mxu0 0.0
    %918 = vmatprep.subr.mxu0 0.0
    %919 = vmatpush1.msra.mxu0 0.0
    %920 = vmatprep.subr.mxu0 0.0
    %921 = vmatpush1.msra.mxu0 0.0
    %922 = vmatprep.subr.mxu0 0.0
    %923 = vmatpush1.msra.mxu0 0.0
    %924 = vmatprep.subr.mxu0 0.0
    %925 = vmatpush1.msra.mxu0 0.0
    %926 = vmatprep.subr.mxu0 0.0
    %927 = vmatpush1.msra.mxu0 0.0
    %928 = vmatprep.subr.mxu0 0.0
    %929 = vmatpush1.msra.mxu0 0.0
    %930 = vmatprep.subr.mxu0 0.0
    %931 = vmatpush1.msra.mxu0 0.0
    %932 = vmatprep.subr.mxu0 0.0
    %933 = vmatpush1.msra.mxu0 0.0
    %934 = vmatprep.subr.mxu0 0.0
    %935 = vmatpush1.msra.mxu0 0.0
    %936 = vmatprep.subr.mxu0 0.0
    %937 = vmatpush1.msra.mxu0 0.0
    %938 = vmatprep.subr.mxu0 0.0
    %939 = vmatpush1.msra.mxu0 0.0
    %940 = vmatprep.subr.mxu0 0.0
    %941 = vmatpush1.msra.mxu0 0.0
    %942 = vmatprep.subr.mxu0 0.0
    %943 = vmatpush1.msra.mxu0 0.0
    %944 = vmatprep.subr.mxu0 0.0
    %945 = vmatpush1.msra.mxu0 0.0
    %946 = vmatprep.subr.mxu0 0.0
    %947 = vmatpush1.msra.mxu0 0.0
    %948 = vmatprep.subr.mxu0 0.0
    %949 = vmatpush1.msra.mxu0 0.0
    %950 = vmatprep.subr.mxu0 0.0
    %951 = vmatpush1.msra.mxu0 0.0
    %952 = vmatprep.subr.mxu0 0.0
    %953 = vmatpush1.msra.mxu0 0.0
    %954 = vmatprep.subr.mxu0 0.0
    %955 = vmatpush1.msra.mxu0 0.0
    %956 = vmatprep.subr.mxu0 0.0
    %957 = vmatpush1.msra.mxu0 0.0
    %958 = vmatprep.subr.mxu0 0.0
    %959 = vmatpush1.msra.mxu0 0.0
    %960 = vmatprep.subr.mxu0 0.0
    %961 = vmatpush1.msra.mxu0 0.0
    %962 = vmatprep.subr.mxu0 0.0
    %963 = vmatpush1.msra.mxu0 0.0
    %964 = vmatprep.subr.mxu0 0.0
    %965 = vmatpush1.msra.mxu0 0.0
    %966 = vmatprep.subr.mxu0 0.0
    %967 = vmatpush1.msra.mxu0 0.0
    %968 = vmatprep.mubr.f32.mxu0 0.0
    %969 = vmatmul.mubr.f32.gmra.mrb[0].mxu0 %v899
    %v970 = vpop.f32.mrb[0].mxu0
    %v971 = vadd.f32 0.0, %v970
    %v972 = vpop.f32.mrb[0].mxu0
    %973 = vdwg.mxu0
    %v974 = vmul.f32 %v971, %v971
    %976 = vrot.lane.b32.xlu0 %v974, 20
    %v977 = vpop.permute.xlu0 %976
    %v979 = vsel %vm113, %v971, %v977
    %v980 = vsel %vm115, %v979, 0.0
    %v981 = vrot.slane %v980, 4
    %v982 = vadd.f32 %v980, %v981
    %v983 = vrot.slane %v982, 2
    %v984 = vadd.f32 %v982, %v983
    %v985 = vrot.slane %v984, 1
    %v986 = vadd.f32 %v984, %v985
    %v987 = vmul.f32 %v986, 0.125
    %v988 = vmul.f32 %v987, %v987
    %990 = vrot.lane.b32.xlu0 %v988, 20
    %v991 = vpop.permute.xlu0 %990
    %v993 = vsub.f32 %v987, %v991
    %v994 = vmax.f32 %v993, 0.0
    %v995 = vld [vmem:[%s2 + $0xf] sm:$0x1]
    %v996 = vld [vmem:[%s2 + $0x27] sm:$0x1]
    %v997 = vadd.f32 %v994, 1e-05
    %v998 = vrsqrt.pop %v997
    %1000 = vrot.lane.b32.xlu0 %v998, 108
    %v1001 = vpop.permute.xlu0 %1000
    %v1003 = vmul.f32 %v995, %v1001
    %v1004 = vmul.f32 %v987, %v1003
    %v1005 = vsub.f32 %v996, %v1004
    %v1006 = vlaneseq
    %v1007 = vshrl.u32 %v1006, 7
    %v1008 = vsub.s32 0, %v1007
    %v1009 = vrot.slane %v1003, %v1008
    %v1010 = vmul.f32 %v971, %v1009
    %v1011 = vlaneseq
    %v1012 = vshrl.u32 %v1011, 7
    %v1013 = vsub.s32 0, %v1012
    %v1014 = vrot.slane %v1005, %v1013
    %v1015 = vadd.f32 %v1010, %v1014
    %v1016 = vmax.f32 %v1015, 0.0
    %s1017 = scalar_lea.vmem [#allocation2], 168
    %v1018 = vld [vmem:[%s1017] sm:$0xff]
    %v1019 = vld [vmem:[%s1017 + $0x8] sm:$0xff]
    %v1020 = vld [vmem:[%s1017 + $0x10] sm:$0xf]
    %v1022 = vsel %vm113, %v1016, 0
    %v1025 = vsel %vm159, %v1020, 0
    %1027 = vmatprep.subr.mxu0 0.0
    %1028 = vmatpush1.msra.mxu0 %v1018
    %1029 = vmatprep.subr.mxu0 0.0
    %1030 = vmatpush1.msra.mxu0 %v1019
    %1031 = vmatprep.subr.mxu0 0.0
    %1032 = vmatpush1.msra.mxu0 %v1025
    %1033 = vmatprep.subr.mxu0 0.0
    %1034 = vmatpush1.msra.mxu0 0.0
    %1035 = vmatprep.subr.mxu0 0.0
    %1036 = vmatpush1.msra.mxu0 0.0
    %1037 = vmatprep.subr.mxu0 0.0
    %1038 = vmatpush1.msra.mxu0 0.0
    %1039 = vmatprep.subr.mxu0 0.0
    %1040 = vmatpush1.msra.mxu0 0.0
    %1041 = vmatprep.subr.mxu0 0.0
    %1042 = vmatpush1.msra.mxu0 0.0
    %1043 = vmatprep.subr.mxu0 0.0
    %1044 = vmatpush1.msra.mxu0 0.0
    %1045 = vmatprep.subr.mxu0 0.0
    %1046 = vmatpush1.msra.mxu0 0.0
    %1047 = vmatprep.subr.mxu0 0.0
    %1048 = vmatpush1.msra.mxu0 0.0
    %1049 = vmatprep.subr.mxu0 0.0
    %1050 = vmatpush1.msra.mxu0 0.0
    %1051 = vmatprep.subr.mxu0 0.0
    %1052 = vmatpush1.msra.mxu0 0.0
    %1053 = vmatprep.subr.mxu0 0.0
    %1054 = vmatpush1.msra.mxu0 0.0
    %1055 = vmatprep.subr.mxu0 0.0
    %1056 = vmatpush1.msra.mxu0 0.0
    %1057 = vmatprep.subr.mxu0 0.0
    %1058 = vmatpush1.msra.mxu0 0.0
    %1059 = vmatprep.subr.mxu0 0.0
    %1060 = vmatpush1.msra.mxu0 0.0
    %1061 = vmatprep.subr.mxu0 0.0
    %1062 = vmatpush1.msra.mxu0 0.0
    %1063 = vmatprep.subr.mxu0 0.0
    %1064 = vmatpush1.msra.mxu0 0.0
    %1065 = vmatprep.subr.mxu0 0.0
    %1066 = vmatpush1.msra.mxu0 0.0
    %1067 = vmatprep.subr.mxu0 0.0
    %1068 = vmatpush1.msra.mxu0 0.0
    %1069 = vmatprep.subr.mxu0 0.0
    %1070 = vmatpush1.msra.mxu0 0.0
    %1071 = vmatprep.subr.mxu0 0.0
    %1072 = vmatpush1.msra.mxu0 0.0
    %1073 = vmatprep.subr.mxu0 0.0
    %1074 = vmatpush1.msra.mxu0 0.0
    %1075 = vmatprep.subr.mxu0 0.0
    %1076 = vmatpush1.msra.mxu0 0.0
    %1077 = vmatprep.subr.mxu0 0.0
    %1078 = vmatpush1.msra.mxu0 0.0
    %1079 = vmatprep.subr.mxu0 0.0
    %1080 = vmatpush1.msra.mxu0 0.0
    %1081 = vmatprep.subr.mxu0 0.0
    %1082 = vmatpush1.msra.mxu0 0.0
    %1083 = vmatprep.subr.mxu0 0.0
    %1084 = vmatpush1.msra.mxu0 0.0
    %1085 = vmatprep.subr.mxu0 0.0
    %1086 = vmatpush1.msra.mxu0 0.0
    %1087 = vmatprep.subr.mxu0 0.0
    %1088 = vmatpush1.msra.mxu0 0.0
    %1089 = vmatprep.subr.mxu0 0.0
    %1090 = vmatpush1.msra.mxu0 0.0
    %1091 = vmatprep.mubr.f32.mxu0 0.0
    %1092 = vmatmul.mubr.f32.gmra.mrb[0].mxu0 %v1022
    %v1093 = vpop.f32.mrb[0].mxu0
    %v1094 = vadd.f32 0.0, %v1093
    %v1095 = vpop.f32.mrb[0].mxu0
    %1096 = vdwg.mxu0
    %v1097 = vmul.f32 %v1094, %v1094
    %1099 = vrot.lane.b32.xlu0 %v1097, 20
    %v1100 = vpop.permute.xlu0 %1099
    %v1102 = vsel %vm113, %v1094, %v1100
    %v1103 = vsel %vm115, %v1102, 0.0
    %v1104 = vrot.slane %v1103, 4
    %v1105 = vadd.f32 %v1103, %v1104
    %v1106 = vrot.slane %v1105, 2
    %v1107 = vadd.f32 %v1105, %v1106
    %v1108 = vrot.slane %v1107, 1
    %v1109 = vadd.f32 %v1107, %v1108
    %v1110 = vmul.f32 %v1109, 0.125
    %v1111 = vmul.f32 %v1110, %v1110
    %1113 = vrot.lane.b32.xlu0 %v1111, 20
    %v1114 = vpop.permute.xlu0 %1113
    %v1116 = vsub.f32 %v1110, %v1114
    %v1117 = vmax.f32 %v1116, 0.0
    %v1118 = vld [vmem:[%s2 + $0x10] sm:$0x1]
    %v1119 = vld [vmem:[%s2 + $0x28] sm:$0x1]
    %v1120 = vadd.f32 %v1117, 1e-05
    %v1121 = vrsqrt.pop %v1120
    %1123 = vrot.lane.b32.xlu0 %v1121, 108
    %v1124 = vpop.permute.xlu0 %1123
    %v1126 = vmul.f32 %v1118, %v1124
    %v1127 = vmul.f32 %v1110, %v1126
    %v1128 = vsub.f32 %v1119, %v1127
    %v1129 = vlaneseq
    %v1130 = vshrl.u32 %v1129, 7
    %v1131 = vsub.s32 0, %v1130
    %v1132 = vrot.slane %v1126, %v1131
    %v1133 = vmul.f32 %v1094, %v1132
    %v1134 = vlaneseq
    %v1135 = vshrl.u32 %v1134, 7
    %v1136 = vsub.s32 0, %v1135
    %v1137 = vrot.slane %v1128, %v1136
    %v1138 = vadd.f32 %v1133, %v1137
    %v1139 = vadd.f32 %v1138, %v893
    %v1140 = vmax.f32 %v1139, 0.0
    %s1141 = scalar_lea.vmem [#allocation2], 192
    %v1142 = vld [vmem:[%s1141] sm:$0xff]
    %v1143 = vld [vmem:[%s1141 + $0x8] sm:$0xff]
    %v1144 = vld [vmem:[%s1141 + $0x10] sm:$0xf]
    %v1146 = vsel %vm113, %v1140, 0
    %v1149 = vsel %vm159, %v1144, 0
    %1151 = vmatprep.subr.mxu0 0.0
    %1152 = vmatpush1.msra.mxu0 %v1142
    %1153 = vmatprep.subr.mxu0 0.0
    %1154 = vmatpush1.msra.mxu0 %v1143
    %1155 = vmatprep.subr.mxu0 0.0
    %1156 = vmatpush1.msra.mxu0 %v1149
    %1157 = vmatprep.subr.mxu0 0.0
    %1158 = vmatpush1.msra.mxu0 0.0
    %1159 = vmatprep.subr.mxu0 0.0
    %1160 = vmatpush1.msra.mxu0 0.0
    %1161 = vmatprep.subr.mxu0 0.0
    %1162 = vmatpush1.msra.mxu0 0.0
    %1163 = vmatprep.subr.mxu0 0.0
    %1164 = vmatpush1.msra.mxu0 0.0
    %1165 = vmatprep.subr.mxu0 0.0
    %1166 = vmatpush1.msra.mxu0 0.0
    %1167 = vmatprep.subr.mxu0 0.0
    %1168 = vmatpush1.msra.mxu0 0.0
    %1169 = vmatprep.subr.mxu0 0.0
    %1170 = vmatpush1.msra.mxu0 0.0
    %1171 = vmatprep.subr.mxu0 0.0
    %1172 = vmatpush1.msra.mxu0 0.0
    %1173 = vmatprep.subr.mxu0 0.0
    %1174 = vmatpush1.msra.mxu0 0.0
    %1175 = vmatprep.subr.mxu0 0.0
    %1176 = vmatpush1.msra.mxu0 0.0
    %1177 = vmatprep.subr.mxu0 0.0
    %1178 = vmatpush1.msra.mxu0 0.0
    %1179 = vmatprep.subr.mxu0 0.0
    %1180 = vmatpush1.msra.mxu0 0.0
    %1181 = vmatprep.subr.mxu0 0.0
    %1182 = vmatpush1.msra.mxu0 0.0
    %1183 = vmatprep.subr.mxu0 0.0
    %1184 = vmatpush1.msra.mxu0 0.0
    %1185 = vmatprep.subr.mxu0 0.0
    %1186 = vmatpush1.msra.mxu0 0.0
    %1187 = vmatprep.subr.mxu0 0.0
    %1188 = vmatpush1.msra.mxu0 0.0
    %1189 = vmatprep.subr.mxu0 0.0
    %1190 = vmatpush1.msra.mxu0 0.0
    %1191 = vmatprep.subr.mxu0 0.0
    %1192 = vmatpush1.msra.mxu0 0.0
    %1193 = vmatprep.subr.mxu0 0.0
    %1194 = vmatpush1.msra.mxu0 0.0
    %1195 = vmatprep.subr.mxu0 0.0
    %1196 = vmatpush1.msra.mxu0 0.0
    %1197 = vmatprep.subr.mxu0 0.0
    %1198 = vmatpush1.msra.mxu0 0.0
    %1199 = vmatprep.subr.mxu0 0.0
    %1200 = vmatpush1.msra.mxu0 0.0
    %1201 = vmatprep.subr.mxu0 0.0
    %1202 = vmatpush1.msra.mxu0 0.0
    %1203 = vmatprep.subr.mxu0 0.0
    %1204 = vmatpush1.msra.mxu0 0.0
    %1205 = vmatprep.subr.mxu0 0.0
    %1206 = vmatpush1.msra.mxu0 0.0
    %1207 = vmatprep.subr.mxu0 0.0
    %1208 = vmatpush1.msra.mxu0 0.0
    %1209 = vmatprep.subr.mxu0 0.0
    %1210 = vmatpush1.msra.mxu0 0.0
    %1211 = vmatprep.subr.mxu0 0.0
    %1212 = vmatpush1.msra.mxu0 0.0
    %1213 = vmatprep.subr.mxu0 0.0
    %1214 = vmatpush1.msra.mxu0 0.0
    %1215 = vmatprep.mubr.f32.mxu0 0.0
    %1216 = vmatmul.mubr.f32.gmra.mrb[0].mxu0 %v1146
    %v1217 = vpop.f32.mrb[0].mxu0
    %v1218 = vadd.f32 0.0, %v1217
    %v1219 = vpop.f32.mrb[0].mxu0
    %1220 = vdwg.mxu0
    %v1221 = vmul.f32 %v1218, %v1218
    %1223 = vrot.lane.b32.xlu0 %v1221, 20
    %v1224 = vpop.permute.xlu0 %1223
    %v1226 = vsel %vm113, %v1218, %v1224
    %v1227 = vsel %vm115, %v1226, 0.0
    %v1228 = vrot.slane %v1227, 4
    %v1229 = vadd.f32 %v1227, %v1228
    %v1230 = vrot.slane %v1229, 2
    %v1231 = vadd.f32 %v1229, %v1230
    %v1232 = vrot.slane %v1231, 1
    %v1233 = vadd.f32 %v1231, %v1232
    %v1234 = vmul.f32 %v1233, 0.125
    %v1235 = vmul.f32 %v1234, %v1234
    %1237 = vrot.lane.b32.xlu0 %v1235, 20
    %v1238 = vpop.permute.xlu0 %1237
    %v1240 = vsub.f32 %v1234, %v1238
    %v1241 = vmax.f32 %v1240, 0.0
    %v1242 = vld [vmem:[%s2 + $0x11] sm:$0x1]
    %v1243 = vld [vmem:[%s2 + $0x29] sm:$0x1]
    %v1244 = vadd.f32 %v1241, 1e-05
    %v1245 = vrsqrt.pop %v1244
    %1247 = vrot.lane.b32.xlu0 %v1245, 108
    %v1248 = vpop.permute.xlu0 %1247
    %v1250 = vmul.f32 %v1242, %v1248
    %v1251 = vmul.f32 %v1234, %v1250
    %v1252 = vsub.f32 %v1243, %v1251
    %v1253 = vlaneseq
    %v1254 = vshrl.u32 %v1253, 7
    %v1255 = vsub.s32 0, %v1254
    %v1256 = vrot.slane %v1250, %v1255
    %v1257 = vmul.f32 %v1218, %v1256
    %v1258 = vlaneseq
    %v1259 = vshrl.u32 %v1258, 7
    %v1260 = vsub.s32 0, %v1259
    %v1261 = vrot.slane %v1252, %v1260
    %v1262 = vadd.f32 %v1257, %v1261
    %v1263 = vmax.f32 %v1262, 0.0
    %s1264 = scalar_lea.vmem [#allocation2], 216
    %v1265 = vld [vmem:[%s1264] sm:$0xff]
    %v1266 = vld [vmem:[%s1264 + $0x8] sm:$0xff]
    %v1267 = vld [vmem:[%s1264 + $0x10] sm:$0xf]
    %v1269 = vsel %vm113, %v1263, 0
    %v1272 = vsel %vm159, %v1267, 0
    %1274 = vmatprep.subr.mxu0 0.0
    %1275 = vmatpush1.msra.mxu0 %v1265
    %1276 = vmatprep.subr.mxu0 0.0
    %1277 = vmatpush1.msra.mxu0 %v1266
    %1278 = vmatprep.subr.mxu0 0.0
    %1279 = vmatpush1.msra.mxu0 %v1272
    %1280 = vmatprep.subr.mxu0 0.0
    %1281 = vmatpush1.msra.mxu0 0.0
    %1282 = vmatprep.subr.mxu0 0.0
    %1283 = vmatpush1.msra.mxu0 0.0
    %1284 = vmatprep.subr.mxu0 0.0
    %1285 = vmatpush1.msra.mxu0 0.0
    %1286 = vmatprep.subr.mxu0 0.0
    %1287 = vmatpush1.msra.mxu0 0.0
    %1288 = vmatprep.subr.mxu0 0.0
    %1289 = vmatpush1.msra.mxu0 0.0
    %1290 = vmatprep.subr.mxu0 0.0
    %1291 = vmatpush1.msra.mxu0 0.0
    %1292 = vmatprep.subr.mxu0 0.0
    %1293 = vmatpush1.msra.mxu0 0.0
    %1294 = vmatprep.subr.mxu0 0.0
    %1295 = vmatpush1.msra.mxu0 0.0
    %1296 = vmatprep.subr.mxu0 0.0
    %1297 = vmatpush1.msra.mxu0 0.0
    %1298 = vmatprep.subr.mxu0 0.0
    %1299 = vmatpush1.msra.mxu0 0.0
    %1300 = vmatprep.subr.mxu0 0.0
    %1301 = vmatpush1.msra.mxu0 0.0
    %1302 = vmatprep.subr.mxu0 0.0
    %1303 = vmatpush1.msra.mxu0 0.0
    %1304 = vmatprep.subr.mxu0 0.0
    %1305 = vmatpush1.msra.mxu0 0.0
    %1306 = vmatprep.subr.mxu0 0.0
    %1307 = vmatpush1.msra.mxu0 0.0
    %1308 = vmatprep.subr.mxu0 0.0
    %1309 = vmatpush1.msra.mxu0 0.0
    %1310 = vmatprep.subr.mxu0 0.0
    %1311 = vmatpush1.msra.mxu0 0.0
    %1312 = vmatprep.subr.mxu0 0.0
    %1313 = vmatpush1.msra.mxu0 0.0
    %1314 = vmatprep.subr.mxu0 0.0
    %1315 = vmatpush1.msra.mxu0 0.0
    %1316 = vmatprep.subr.mxu0 0.0
    %1317 = vmatpush1.msra.mxu0 0.0
    %1318 = vmatprep.subr.mxu0 0.0
    %1319 = vmatpush1.msra.mxu0 0.0
    %1320 = vmatprep.subr.mxu0 0.0
    %1321 = vmatpush1.msra.mxu0 0.0
    %1322 = vmatprep.subr.mxu0 0.0
    %1323 = vmatpush1.msra.mxu0 0.0
    %1324 = vmatprep.subr.mxu0 0.0
    %1325 = vmatpush1.msra.mxu0 0.0
    %1326 = vmatprep.subr.mxu0 0.0
    %1327 = vmatpush1.msra.mxu0 0.0
    %1328 = vmatprep.subr.mxu0 0.0
    %1329 = vmatpush1.msra.mxu0 0.0
    %1330 = vmatprep.subr.mxu0 0.0
    %1331 = vmatpush1.msra.mxu0 0.0
    %1332 = vmatprep.subr.mxu0 0.0
    %1333 = vmatpush1.msra.mxu0 0.0
    %1334 = vmatprep.subr.mxu0 0.0
    %1335 = vmatpush1.msra.mxu0 0.0
    %1336 = vmatprep.subr.mxu0 0.0
    %1337 = vmatpush1.msra.mxu0 0.0
    %1338 = vmatprep.mubr.f32.mxu0 0.0
    %1339 = vmatmul.mubr.f32.gmra.mrb[0].mxu0 %v1269
    %v1340 = vpop.f32.mrb[0].mxu0
    %v1341 = vadd.f32 0.0, %v1340
    %v1342 = vpop.f32.mrb[0].mxu0
    %1343 = vdwg.mxu0
    %v1344 = vmul.f32 %v1341, %v1341
    %1346 = vrot.lane.b32.xlu0 %v1344, 20
    %v1347 = vpop.permute.xlu0 %1346
    %v1349 = vsel %vm113, %v1341, %v1347
    %v1350 = vsel %vm115, %v1349, 0.0
    %v1351 = vrot.slane %v1350, 4
    %v1352 = vadd.f32 %v1350, %v1351
    %v1353 = vrot.slane %v1352, 2
    %v1354 = vadd.f32 %v1352, %v1353
    %v1355 = vrot.slane %v1354, 1
    %v1356 = vadd.f32 %v1354, %v1355
    %v1357 = vmul.f32 %v1356, 0.125
    %v1358 = vmul.f32 %v1357, %v1357
    %1360 = vrot.lane.b32.xlu0 %v1358, 20
    %v1361 = vpop.permute.xlu0 %1360
    %v1363 = vsub.f32 %v1357, %v1361
    %v1364 = vmax.f32 %v1363, 0.0
    %v1365 = vld [vmem:[%s2 + $0x12] sm:$0x1]
    %v1366 = vld [vmem:[%s2 + $0x2a] sm:$0x1]
    %v1367 = vadd.f32 %v1364, 1e-05
    %v1368 = vrsqrt.pop %v1367
    %1370 = vrot.lane.b32.xlu0 %v1368, 108
    %v1371 = vpop.permute.xlu0 %1370
    %v1373 = vmul.f32 %v1365, %v1371
    %v1374 = vmul.f32 %v1357, %v1373
    %v1375 = vsub.f32 %v1366, %v1374
    %v1376 = vlaneseq
    %v1377 = vshrl.u32 %v1376, 7
    %v1378 = vsub.s32 0, %v1377
    %v1379 = vrot.slane %v1373, %v1378
    %v1380 = vmul.f32 %v1341, %v1379
    %v1381 = vlaneseq
    %v1382 = vshrl.u32 %v1381, 7
    %v1383 = vsub.s32 0, %v1382
    %v1384 = vrot.slane %v1375, %v1383
    %v1385 = vadd.f32 %v1380, %v1384
    %v1386 = vadd.f32 %v1385, %v1140
    %v1387 = vmax.f32 %v1386, 0.0
    %s1388 = scalar_lea.vmem [#allocation2], 240
    %v1389 = vld [vmem:[%s1388] sm:$0xff]
    %v1390 = vld [vmem:[%s1388 + $0x8] sm:$0xff]
    %v1391 = vld [vmem:[%s1388 + $0x10] sm:$0xf]
    %v1393 = vsel %vm113, %v1387, 0
    %v1396 = vsel %vm159, %v1391, 0
    %1398 = vmatprep.subr.mxu0 0.0
    %1399 = vmatpush1.msra.mxu0 %v1389
    %1400 = vmatprep.subr.mxu0 0.0
    %1401 = vmatpush1.msra.mxu0 %v1390
    %1402 = vmatprep.subr.mxu0 0.0
    %1403 = vmatpush1.msra.mxu0 %v1396
    %1404 = vmatprep.subr.mxu0 0.0
    %1405 = vmatpush1.msra.mxu0 0.0
    %1406 = vmatprep.subr.mxu0 0.0
    %1407 = vmatpush1.msra.mxu0 0.0
    %1408 = vmatprep.subr.mxu0 0.0
    %1409 = vmatpush1.msra.mxu0 0.0
    %1410 = vmatprep.subr.mxu0 0.0
    %1411 = vmatpush1.msra.mxu0 0.0
    %1412 = vmatprep.subr.mxu0 0.0
    %1413 = vmatpush1.msra.mxu0 0.0
    %1414 = vmatprep.subr.mxu0 0.0
    %1415 = vmatpush1.msra.mxu0 0.0
    %1416 = vmatprep.subr.mxu0 0.0
    %1417 = vmatpush1.msra.mxu0 0.0
    %1418 = vmatprep.subr.mxu0 0.0
    %1419 = vmatpush1.msra.mxu0 0.0
    %1420 = vmatprep.subr.mxu0 0.0
    %1421 = vmatpush1.msra.mxu0 0.0
    %1422 = vmatprep.subr.mxu0 0.0
    %1423 = vmatpush1.msra.mxu0 0.0
    %1424 = vmatprep.subr.mxu0 0.0
    %1425 = vmatpush1.msra.mxu0 0.0
    %1426 = vmatprep.subr.mxu0 0.0
    %1427 = vmatpush1.msra.mxu0 0.0
    %1428 = vmatprep.subr.mxu0 0.0
    %1429 = vmatpush1.msra.mxu0 0.0
    %1430 = vmatprep.subr.mxu0 0.0
    %1431 = vmatpush1.msra.mxu0 0.0
    %1432 = vmatprep.subr.mxu0 0.0
    %1433 = vmatpush1.msra.mxu0 0.0
    %1434 = vmatprep.subr.mxu0 0.0
    %1435 = vmatpush1.msra.mxu0 0.0
    %1436 = vmatprep.subr.mxu0 0.0
    %1437 = vmatpush1.msra.mxu0 0.0
    %1438 = vmatprep.subr.mxu0 0.0
    %1439 = vmatpush1.msra.mxu0 0.0
    %1440 = vmatprep.subr.mxu0 0.0
    %1441 = vmatpush1.msra.mxu0 0.0
    %1442 = vmatprep.subr.mxu0 0.0
    %1443 = vmatpush1.msra.mxu0 0.0
    %1444 = vmatprep.subr.mxu0 0.0
    %1445 = vmatpush1.msra.mxu0 0.0
    %1446 = vmatprep.subr.mxu0 0.0
    %1447 = vmatpush1.msra.mxu0 0.0
    %1448 = vmatprep.subr.mxu0 0.0
    %1449 = vmatpush1.msra.mxu0 0.0
    %1450 = vmatprep.subr.mxu0 0.0
    %1451 = vmatpush1.msra.mxu0 0.0
    %1452 = vmatprep.subr.mxu0 0.0
    %1453 = vmatpush1.msra.mxu0 0.0
    %1454 = vmatprep.subr.mxu0 0.0
    %1455 = vmatpush1.msra.mxu0 0.0
    %1456 = vmatprep.subr.mxu0 0.0
    %1457 = vmatpush1.msra.mxu0 0.0
    %1458 = vmatprep.subr.mxu0 0.0
    %1459 = vmatpush1.msra.mxu0 0.0
    %1460 = vmatprep.subr.mxu0 0.0
    %1461 = vmatpush1.msra.mxu0 0.0
    %1462 = vmatprep.mubr.f32.mxu0 0.0
    %1463 = vmatmul.mubr.f32.gmra.mrb[0].mxu0 %v1393
    %v1464 = vpop.f32.mrb[0].mxu0
    %v1465 = vadd.f32 0.0, %v1464
    %v1466 = vpop.f32.mrb[0].mxu0
    %1467 = vdwg.mxu0
    %v1468 = vmul.f32 %v1465, %v1465
    %1470 = vrot.lane.b32.xlu0 %v1468, 20
    %v1471 = vpop.permute.xlu0 %1470
    %v1473 = vsel %vm113, %v1465, %v1471
    %v1474 = vsel %vm115, %v1473, 0.0
    %v1475 = vrot.slane %v1474, 4
    %v1476 = vadd.f32 %v1474, %v1475
    %v1477 = vrot.slane %v1476, 2
    %v1478 = vadd.f32 %v1476, %v1477
    %v1479 = vrot.slane %v1478, 1
    %v1480 = vadd.f32 %v1478, %v1479
    %v1481 = vmul.f32 %v1480, 0.125
    %v1482 = vmul.f32 %v1481, %v1481
    %1484 = vrot.lane.b32.xlu0 %v1482, 20
    %v1485 = vpop.permute.xlu0 %1484
    %v1487 = vsub.f32 %v1481, %v1485
    %v1488 = vmax.f32 %v1487, 0.0
    %v1489 = vld [vmem:[%s2 + $0x13] sm:$0x1]
    %v1490 = vld [vmem:[%s2 + $0x2b] sm:$0x1]
    %v1491 = vadd.f32 %v1488, 1e-05
    %v1492 = vrsqrt.pop %v1491
    %1494 = vrot.lane.b32.xlu0 %v1492, 108
    %v1495 = vpop.permute.xlu0 %1494
    %v1497 = vmul.f32 %v1489, %v1495
    %v1498 = vmul.f32 %v1481, %v1497
    %v1499 = vsub.f32 %v1490, %v1498
    %v1500 = vlaneseq
    %v1501 = vshrl.u32 %v1500, 7
    %v1502 = vsub.s32 0, %v1501
    %v1503 = vrot.slane %v1497, %v1502
    %v1504 = vmul.f32 %v1465, %v1503
    %v1505 = vlaneseq
    %v1506 = vshrl.u32 %v1505, 7
    %v1507 = vsub.s32 0, %v1506
    %v1508 = vrot.slane %v1499, %v1507
    %v1509 = vadd.f32 %v1504, %v1508
    %v1510 = vmax.f32 %v1509, 0.0
    %s1511 = scalar_lea.vmem [#allocation2], 264
    %v1512 = vld [vmem:[%s1511] sm:$0xff]
    %v1513 = vld [vmem:[%s1511 + $0x8] sm:$0xff]
    %v1514 = vld [vmem:[%s1511 + $0x10] sm:$0xf]
    %v1516 = vsel %vm113, %v1510, 0
    %v1519 = vsel %vm159, %v1514, 0
    %1521 = vmatprep.subr.mxu0 0.0
    %1522 = vmatpush1.msra.mxu0 %v1512
    %1523 = vmatprep.subr.mxu0 0.0
    %1524 = vmatpush1.msra.mxu0 %v1513
    %1525 = vmatprep.subr.mxu0 0.0
    %1526 = vmatpush1.msra.mxu0 %v1519
    %1527 = vmatprep.subr.mxu0 0.0
    %1528 = vmatpush1.msra.mxu0 0.0
    %1529 = vmatprep.subr.mxu0 0.0
    %1530 = vmatpush1.msra.mxu0 0.0
    %1531 = vmatprep.subr.mxu0 0.0
    %1532 = vmatpush1.msra.mxu0 0.0
    %1533 = vmatprep.subr.mxu0 0.0
    %1534 = vmatpush1.msra.mxu0 0.0
    %1535 = vmatprep.subr.mxu0 0.0
    %1536 = vmatpush1.msra.mxu0 0.0
    %1537 = vmatprep.subr.mxu0 0.0
    %1538 = vmatpush1.msra.mxu0 0.0
    %1539 = vmatprep.subr.mxu0 0.0
    %1540 = vmatpush1.msra.mxu0 0.0
    %1541 = vmatprep.subr.mxu0 0.0
    %1542 = vmatpush1.msra.mxu0 0.0
    %1543 = vmatprep.subr.mxu0 0.0
    %1544 = vmatpush1.msra.mxu0 0.0
    %1545 = vmatprep.subr.mxu0 0.0
    %1546 = vmatpush1.msra.mxu0 0.0
    %1547 = vmatprep.subr.mxu0 0.0
    %1548 = vmatpush1.msra.mxu0 0.0
    %1549 = vmatprep.subr.mxu0 0.0
    %1550 = vmatpush1.msra.mxu0 0.0
    %1551 = vmatprep.subr.mxu0 0.0
    %1552 = vmatpush1.msra.mxu0 0.0
    %1553 = vmatprep.subr.mxu0 0.0
    %1554 = vmatpush1.msra.mxu0 0.0
    %1555 = vmatprep.subr.mxu0 0.0
    %1556 = vmatpush1.msra.mxu0 0.0
    %1557 = vmatprep.subr.mxu0 0.0
    %1558 = vmatpush1.msra.mxu0 0.0
    %1559 = vmatprep.subr.mxu0 0.0
    %1560 = vmatpush1.msra.mxu0 0.0
    %1561 = vmatprep.subr.mxu0 0.0
    %1562 = vmatpush1.msra.mxu0 0.0
    %1563 = vmatprep.subr.mxu0 0.0
    %1564 = vmatpush1.msra.mxu0 0.0
    %1565 = vmatprep.subr.mxu0 0.0
    %1566 = vmatpush1.msra.mxu0 0.0
    %1567 = vmatprep.subr.mxu0 0.0
    %1568 = vmatpush1.msra.mxu0 0.0
    %1569 = vmatprep.subr.mxu0 0.0
    %1570 = vmatpush1.msra.mxu0 0.0
    %1571 = vmatprep.subr.mxu0 0.0
    %1572 = vmatpush1.msra.mxu0 0.0
    %1573 = vmatprep.subr.mxu0 0.0
    %1574 = vmatpush1.msra.mxu0 0.0
    %1575 = vmatprep.subr.mxu0 0.0
    %1576 = vmatpush1.msra.mxu0 0.0
    %1577 = vmatprep.subr.mxu0 0.0
    %1578 = vmatpush1.msra.mxu0 0.0
    %1579 = vmatprep.subr.mxu0 0.0
    %1580 = vmatpush1.msra.mxu0 0.0
    %1581 = vmatprep.subr.mxu0 0.0
    %1582 = vmatpush1.msra.mxu0 0.0
    %1583 = vmatprep.subr.mxu0 0.0
    %1584 = vmatpush1.msra.mxu0 0.0
    %1585 = vmatprep.mubr.f32.mxu0 0.0
    %1586 = vmatmul.mubr.f32.gmra.mrb[0].mxu0 %v1516
    %v1587 = vpop.f32.mrb[0].mxu0
    %v1588 = vadd.f32 0.0, %v1587
    %v1589 = vpop.f32.mrb[0].mxu0
    %1590 = vdwg.mxu0
    %v1591 = vmul.f32 %v1588, %v1588
    %1593 = vrot.lane.b32.xlu0 %v1591, 20
    %v1594 = vpop.permute.xlu0 %1593
    %v1596 = vsel %vm113, %v1588, %v1594
    %v1597 = vsel %vm115, %v1596, 0.0
    %v1598 = vrot.slane %v1597, 4
    %v1599 = vadd.f32 %v1597, %v1598
    %v1600 = vrot.slane %v1599, 2
    %v1601 = vadd.f32 %v1599, %v1600
    %v1602 = vrot.slane %v1601, 1
    %v1603 = vadd.f32 %v1601, %v1602
    %v1604 = vmul.f32 %v1603, 0.125
    %v1605 = vmul.f32 %v1604, %v1604
    %1607 = vrot.lane.b32.xlu0 %v1605, 20
    %v1608 = vpop.permute.xlu0 %1607
    %v1610 = vsub.f32 %v1604, %v1608
    %v1611 = vmax.f32 %v1610, 0.0
    %v1612 = vld [vmem:[%s2 + $0x14] sm:$0x1]
    %v1613 = vld [vmem:[%s2 + $0x2c] sm:$0x1]
    %v1614 = vadd.f32 %v1611, 1e-05
    %v1615 = vrsqrt.pop %v1614
    %1617 = vrot.lane.b32.xlu0 %v1615, 108
    %v1618 = vpop.permute.xlu0 %1617
    %v1620 = vmul.f32 %v1612, %v1618
    %v1621 = vmul.f32 %v1604, %v1620
    %v1622 = vsub.f32 %v1613, %v1621
    %v1623 = vlaneseq
    %v1624 = vshrl.u32 %v1623, 7
    %v1625 = vsub.s32 0, %v1624
    %v1626 = vrot.slane %v1620, %v1625
    %v1627 = vmul.f32 %v1588, %v1626
    %v1628 = vlaneseq
    %v1629 = vshrl.u32 %v1628, 7
    %v1630 = vsub.s32 0, %v1629
    %v1631 = vrot.slane %v1622, %v1630
    %v1632 = vadd.f32 %v1627, %v1631
    %v1633 = vadd.f32 %v1632, %v1387
    %v1634 = vmax.f32 %v1633, 0.0
    %s1635 = scalar_lea.vmem [#allocation2], 288
    %v1636 = vld [vmem:[%s1635] sm:$0xff]
    %v1637 = vld [vmem:[%s1635 + $0x8] sm:$0xff]
    %v1638 = vld [vmem:[%s1635 + $0x10] sm:$0xf]
    %v1640 = vsel %vm113, %v1634, 0
    %v1643 = vsel %vm159, %v1638, 0
    %1645 = vmatprep.subr.mxu0 0.0
    %1646 = vmatpush1.msra.mxu0 %v1636
    %1647 = vmatprep.subr.mxu0 0.0
    %1648 = vmatpush1.msra.mxu0 %v1637
    %1649 = vmatprep.subr.mxu0 0.0
    %1650 = vmatpush1.msra.mxu0 %v1643
    %1651 = vmatprep.subr.mxu0 0.0
    %1652 = vmatpush1.msra.mxu0 0.0
    %1653 = vmatprep.subr.mxu0 0.0
    %1654 = vmatpush1.msra.mxu0 0.0
    %1655 = vmatprep.subr.mxu0 0.0
    %1656 = vmatpush1.msra.mxu0 0.0
    %1657 = vmatprep.subr.mxu0 0.0
    %1658 = vmatpush1.msra.mxu0 0.0
    %1659 = vmatprep.subr.mxu0 0.0
    %1660 = vmatpush1.msra.mxu0 0.0
    %1661 = vmatprep.subr.mxu0 0.0
    %1662 = vmatpush1.msra.mxu0 0.0
    %1663 = vmatprep.subr.mxu0 0.0
    %1664 = vmatpush1.msra.mxu0 0.0
    %1665 = vmatprep.subr.mxu0 0.0
    %1666 = vmatpush1.msra.mxu0 0.0
    %1667 = vmatprep.subr.mxu0 0.0
    %1668 = vmatpush1.msra.mxu0 0.0
    %1669 = vmatprep.subr.mxu0 0.0
    %1670 = vmatpush1.msra.mxu0 0.0
    %1671 = vmatprep.subr.mxu0 0.0
    %1672 = vmatpush1.msra.mxu0 0.0
    %1673 = vmatprep.subr.mxu0 0.0
    %1674 = vmatpush1.msra.mxu0 0.0
    %1675 = vmatprep.subr.mxu0 0.0
    %1676 = vmatpush1.msra.mxu0 0.0
    %1677 = vmatprep.subr.mxu0 0.0
    %1678 = vmatpush1.msra.mxu0 0.0
    %1679 = vmatprep.subr.mxu0 0.0
    %1680 = vmatpush1.msra.mxu0 0.0
    %1681 = vmatprep.subr.mxu0 0.0
    %1682 = vmatpush1.msra.mxu0 0.0
    %1683 = vmatprep.subr.mxu0 0.0
    %1684 = vmatpush1.msra.mxu0 0.0
    %1685 = vmatprep.subr.mxu0 0.0
    %1686 = vmatpush1.msra.mxu0 0.0
    %1687 = vmatprep.subr.mxu0 0.0
    %1688 = vmatpush1.msra.mxu0 0.0
    %1689 = vmatprep.subr.mxu0 0.0
    %1690 = vmatpush1.msra.mxu0 0.0
    %1691 = vmatprep.subr.mxu0 0.0
    %1692 = vmatpush1.msra.mxu0 0.0
    %1693 = vmatprep.subr.mxu0 0.0
    %1694 = vmatpush1.msra.mxu0 0.0
    %1695 = vmatprep.subr.mxu0 0.0
    %1696 = vmatpush1.msra.mxu0 0.0
    %1697 = vmatprep.subr.mxu0 0.0
    %1698 = vmatpush1.msra.mxu0 0.0
    %1699 = vmatprep.subr.mxu0 0.0
    %1700 = vmatpush1.msra.mxu0 0.0
    %1701 = vmatprep.subr.mxu0 0.0
    %1702 = vmatpush1.msra.mxu0 0.0
    %1703 = vmatprep.subr.mxu0 0.0
    %1704 = vmatpush1.msra.mxu0 0.0
    %1705 = vmatprep.subr.mxu0 0.0
    %1706 = vmatpush1.msra.mxu0 0.0
    %1707 = vmatprep.subr.mxu0 0.0
    %1708 = vmatpush1.msra.mxu0 0.0
    %1709 = vmatprep.mubr.f32.mxu0 0.0
    %1710 = vmatmul.mubr.f32.gmra.mrb[0].mxu0 %v1640
    %v1711 = vpop.f32.mrb[0].mxu0
    %v1712 = vadd.f32 0.0, %v1711
    %v1713 = vpop.f32.mrb[0].mxu0
    %1714 = vdwg.mxu0
    %v1715 = vmul.f32 %v1712, %v1712
    %1717 = vrot.lane.b32.xlu0 %v1715, 20
    %v1718 = vpop.permute.xlu0 %1717
    %v1720 = vsel %vm113, %v1712, %v1718
    %v1721 = vsel %vm115, %v1720, 0.0
    %v1722 = vrot.slane %v1721, 4
    %v1723 = vadd.f32 %v1721, %v1722
    %v1724 = vrot.slane %v1723, 2
    %v1725 = vadd.f32 %v1723, %v1724
    %v1726 = vrot.slane %v1725, 1
    %v1727 = vadd.f32 %v1725, %v1726
    %v1728 = vmul.f32 %v1727, 0.125
    %v1729 = vmul.f32 %v1728, %v1728
    %1731 = vrot.lane.b32.xlu0 %v1729, 20
    %v1732 = vpop.permute.xlu0 %1731
    %v1734 = vsub.f32 %v1728, %v1732
    %v1735 = vmax.f32 %v1734, 0.0
    %v1736 = vld [vmem:[%s2 + $0x15] sm:$0x1]
    %v1737 = vld [vmem:[%s2 + $0x2d] sm:$0x1]
    %v1738 = vadd.f32 %v1735, 1e-05
    %v1739 = vrsqrt.pop %v1738
    %1741 = vrot.lane.b32.xlu0 %v1739, 108
    %v1742 = vpop.permute.xlu0 %1741
    %v1744 = vmul.f32 %v1736, %v1742
    %v1745 = vmul.f32 %v1728, %v1744
    %v1746 = vsub.f32 %v1737, %v1745
    %v1747 = vlaneseq
    %v1748 = vshrl.u32 %v1747, 7
    %v1749 = vsub.s32 0, %v1748
    %v1750 = vrot.slane %v1744, %v1749
    %v1751 = vmul.f32 %v1712, %v1750
    %v1752 = vlaneseq
    %v1753 = vshrl.u32 %v1752, 7
    %v1754 = vsub.s32 0, %v1753
    %v1755 = vrot.slane %v1746, %v1754
    %v1756 = vadd.f32 %v1751, %v1755
    %v1757 = vmax.f32 %v1756, 0.0
    %s1758 = scalar_lea.vmem [#allocation2], 312
    %v1759 = vld [vmem:[%s1758] sm:$0xff]
    %v1760 = vld [vmem:[%s1758 + $0x8] sm:$0xff]
    %v1761 = vld [vmem:[%s1758 + $0x10] sm:$0xf]
    %v1763 = vsel %vm113, %v1757, 0
    %v1766 = vsel %vm159, %v1761, 0
    %1768 = vmatprep.subr.mxu0 0.0
    %1769 = vmatpush1.msra.mxu0 %v1759
    %1770 = vmatprep.subr.mxu0 0.0
    %1771 = vmatpush1.msra.mxu0 %v1760
    %1772 = vmatprep.subr.mxu0 0.0
    %1773 = vmatpush1.msra.mxu0 %v1766
    %1774 = vmatprep.subr.mxu0 0.0
    %1775 = vmatpush1.msra.mxu0 0.0
    %1776 = vmatprep.subr.mxu0 0.0
    %1777 = vmatpush1.msra.mxu0 0.0
    %1778 = vmatprep.subr.mxu0 0.0
    %1779 = vmatpush1.msra.mxu0 0.0
    %1780 = vmatprep.subr.mxu0 0.0
    %1781 = vmatpush1.msra.mxu0 0.0
    %1782 = vmatprep.subr.mxu0 0.0
    %1783 = vmatpush1.msra.mxu0 0.0
    %1784 = vmatprep.subr.mxu0 0.0
    %1785 = vmatpush1.msra.mxu0 0.0
    %1786 = vmatprep.subr.mxu0 0.0
    %1787 = vmatpush1.msra.mxu0 0.0
    %1788 = vmatprep.subr.mxu0 0.0
    %1789 = vmatpush1.msra.mxu0 0.0
    %1790 = vmatprep.subr.mxu0 0.0
    %1791 = vmatpush1.msra.mxu0 0.0
    %1792 = vmatprep.subr.mxu0 0.0
    %1793 = vmatpush1.msra.mxu0 0.0
    %1794 = vmatprep.subr.mxu0 0.0
    %1795 = vmatpush1.msra.mxu0 0.0
    %1796 = vmatprep.subr.mxu0 0.0
    %1797 = vmatpush1.msra.mxu0 0.0
    %1798 = vmatprep.subr.mxu0 0.0
    %1799 = vmatpush1.msra.mxu0 0.0
    %1800 = vmatprep.subr.mxu0 0.0
    %1801 = vmatpush1.msra.mxu0 0.0
    %1802 = vmatprep.subr.mxu0 0.0
    %1803 = vmatpush1.msra.mxu0 0.0
    %1804 = vmatprep.subr.mxu0 0.0
    %1805 = vmatpush1.msra.mxu0 0.0
    %1806 = vmatprep.subr.mxu0 0.0
    %1807 = vmatpush1.msra.mxu0 0.0
    %1808 = vmatprep.subr.mxu0 0.0
    %1809 = vmatpush1.msra.mxu0 0.0
    %1810 = vmatprep.subr.mxu0 0.0
    %1811 = vmatpush1.msra.mxu0 0.0
    %1812 = vmatprep.subr.mxu0 0.0
    %1813 = vmatpush1.msra.mxu0 0.0
    %1814 = vmatprep.subr.mxu0 0.0
    %1815 = vmatpush1.msra.mxu0 0.0
    %1816 = vmatprep.subr.mxu0 0.0
    %1817 = vmatpush1.msra.mxu0 0.0
    %1818 = vmatprep.subr.mxu0 0.0
    %1819 = vmatpush1.msra.mxu0 0.0
    %1820 = vmatprep.subr.mxu0 0.0
    %1821 = vmatpush1.msra.mxu0 0.0
    %1822 = vmatprep.subr.mxu0 0.0
    %1823 = vmatpush1.msra.mxu0 0.0
    %1824 = vmatprep.subr.mxu0 0.0
    %1825 = vmatpush1.msra.mxu0 0.0
    %1826 = vmatprep.subr.mxu0 0.0
    %1827 = vmatpush1.msra.mxu0 0.0
    %1828 = vmatprep.subr.mxu0 0.0
    %1829 = vmatpush1.msra.mxu0 0.0
    %1830 = vmatprep.subr.mxu0 0.0
    %1831 = vmatpush1.msra.mxu0 0.0
    %1832 = vmatprep.mubr.f32.mxu0 0.0
    %1833 = vmatmul.mubr.f32.gmra.mrb[0].mxu0 %v1763
    %v1834 = vpop.f32.mrb[0].mxu0
    %v1835 = vadd.f32 0.0, %v1834
    %v1836 = vpop.f32.mrb[0].mxu0
    %1837 = vdwg.mxu0
    %v1838 = vmul.f32 %v1835, %v1835
    %1840 = vrot.lane.b32.xlu0 %v1838, 20
    %v1841 = vpop.permute.xlu0 %1840
    %v1843 = vsel %vm113, %v1835, %v1841
    %v1844 = vsel %vm115, %v1843, 0.0
    %v1845 = vrot.slane %v1844, 4
    %v1846 = vadd.f32 %v1844, %v1845
    %v1847 = vrot.slane %v1846, 2
    %v1848 = vadd.f32 %v1846, %v1847
    %v1849 = vrot.slane %v1848, 1
    %v1850 = vadd.f32 %v1848, %v1849
    %v1851 = vmul.f32 %v1850, 0.125
    %v1852 = vmul.f32 %v1851, %v1851
    %1854 = vrot.lane.b32.xlu0 %v1852, 20
    %v1855 = vpop.permute.xlu0 %1854
    %v1857 = vsub.f32 %v1851, %v1855
    %v1858 = vmax.f32 %v1857, 0.0
    %v1859 = vld [vmem:[%s2 + $0x16] sm:$0x1]
    %v1860 = vld [vmem:[%s2 + $0x2e] sm:$0x1]
    %v1861 = vadd.f32 %v1858, 1e-05
    %v1862 = vrsqrt.pop %v1861
    %1864 = vrot.lane.b32.xlu0 %v1862, 108
    %v1865 = vpop.permute.xlu0 %1864
    %v1867 = vmul.f32 %v1859, %v1865
    %v1868 = vmul.f32 %v1851, %v1867
    %v1869 = vsub.f32 %v1860, %v1868
    %v1870 = vlaneseq
    %v1871 = vshrl.u32 %v1870, 7
    %v1872 = vsub.s32 0, %v1871
    %v1873 = vrot.slane %v1867, %v1872
    %v1874 = vmul.f32 %v1835, %v1873
    %v1875 = vlaneseq
    %v1876 = vshrl.u32 %v1875, 7
    %v1877 = vsub.s32 0, %v1876
    %v1878 = vrot.slane %v1869, %v1877
    %v1879 = vadd.f32 %v1874, %v1878
    %v1880 = vadd.f32 %v1879, %v1634
    %v1881 = vmax.f32 %v1880, 0.0
    %s1882 = scalar_lea.vmem [#allocation2], 336
    %v1883 = vld [vmem:[%s1882] sm:$0xff]
    %v1884 = vld [vmem:[%s1882 + $0x8] sm:$0xff]
    %v1885 = vld [vmem:[%s1882 + $0x10] sm:$0xf]
    %v1887 = vsel %vm113, %v1881, 0
    %v1890 = vsel %vm159, %v1885, 0
    %1892 = vmatprep.subr.mxu0 0.0
    %1893 = vmatpush1.msra.mxu0 %v1883
    %1894 = vmatprep.subr.mxu0 0.0
    %1895 = vmatpush1.msra.mxu0 %v1884
    %1896 = vmatprep.subr.mxu0 0.0
    %1897 = vmatpush1.msra.mxu0 %v1890
    %1898 = vmatprep.subr.mxu0 0.0
    %1899 = vmatpush1.msra.mxu0 0.0
    %1900 = vmatprep.subr.mxu0 0.0
    %1901 = vmatpush1.msra.mxu0 0.0
    %1902 = vmatprep.subr.mxu0 0.0
    %1903 = vmatpush1.msra.mxu0 0.0
    %1904 = vmatprep.subr.mxu0 0.0
    %1905 = vmatpush1.msra.mxu0 0.0
    %1906 = vmatprep.subr.mxu0 0.0
    %1907 = vmatpush1.msra.mxu0 0.0
    %1908 = vmatprep.subr.mxu0 0.0
    %1909 = vmatpush1.msra.mxu0 0.0
    %1910 = vmatprep.subr.mxu0 0.0
    %1911 = vmatpush1.msra.mxu0 0.0
    %1912 = vmatprep.subr.mxu0 0.0
    %1913 = vmatpush1.msra.mxu0 0.0
    %1914 = vmatprep.subr.mxu0 0.0
    %1915 = vmatpush1.msra.mxu0 0.0
    %1916 = vmatprep.subr.mxu0 0.0
    %1917 = vmatpush1.msra.mxu0 0.0
    %1918 = vmatprep.subr.mxu0 0.0
    %1919 = vmatpush1.msra.mxu0 0.0
    %1920 = vmatprep.subr.mxu0 0.0
    %1921 = vmatpush1.msra.mxu0 0.0
    %1922 = vmatprep.subr.mxu0 0.0
    %1923 = vmatpush1.msra.mxu0 0.0
    %1924 = vmatprep.subr.mxu0 0.0
    %1925 = vmatpush1.msra.mxu0 0.0
    %1926 = vmatprep.subr.mxu0 0.0
    %1927 = vmatpush1.msra.mxu0 0.0
    %1928 = vmatprep.subr.mxu0 0.0
    %1929 = vmatpush1.msra.mxu0 0.0
    %1930 = vmatprep.subr.mxu0 0.0
    %1931 = vmatpush1.msra.mxu0 0.0
    %1932 = vmatprep.subr.mxu0 0.0
    %1933 = vmatpush1.msra.mxu0 0.0
    %1934 = vmatprep.subr.mxu0 0.0
    %1935 = vmatpush1.msra.mxu0 0.0
    %1936 = vmatprep.subr.mxu0 0.0
    %1937 = vmatpush1.msra.mxu0 0.0
    %1938 = vmatprep.subr.mxu0 0.0
    %1939 = vmatpush1.msra.mxu0 0.0
    %1940 = vmatprep.subr.mxu0 0.0
    %1941 = vmatpush1.msra.mxu0 0.0
    %1942 = vmatprep.subr.mxu0 0.0
    %1943 = vmatpush1.msra.mxu0 0.0
    %1944 = vmatprep.subr.mxu0 0.0
    %1945 = vmatpush1.msra.mxu0 0.0
    %1946 = vmatprep.subr.mxu0 0.0
    %1947 = vmatpush1.msra.mxu0 0.0
    %1948 = vmatprep.subr.mxu0 0.0
    %1949 = vmatpush1.msra.mxu0 0.0
    %1950 = vmatprep.subr.mxu0 0.0
    %1951 = vmatpush1.msra.mxu0 0.0
    %1952 = vmatprep.subr.mxu0 0.0
    %1953 = vmatpush1.msra.mxu0 0.0
    %1954 = vmatprep.subr.mxu0 0.0
    %1955 = vmatpush1.msra.mxu0 0.0
    %1956 = vmatprep.mubr.f32.mxu0 0.0
    %1957 = vmatmul.mubr.f32.gmra.mrb[0].mxu0 %v1887
    %v1958 = vpop.f32.mrb[0].mxu0
    %v1959 = vadd.f32 0.0, %v1958
    %v1960 = vpop.f32.mrb[0].mxu0
    %1961 = vdwg.mxu0
    %v1962 = vmul.f32 %v1959, %v1959
    %1964 = vrot.lane.b32.xlu0 %v1962, 20
    %v1965 = vpop.permute.xlu0 %1964
    %v1967 = vsel %vm113, %v1959, %v1965
    %v1968 = vsel %vm115, %v1967, 0.0
    %v1969 = vrot.slane %v1968, 4
    %v1970 = vadd.f32 %v1968, %v1969
    %v1971 = vrot.slane %v1970, 2
    %v1972 = vadd.f32 %v1970, %v1971
    %v1973 = vrot.slane %v1972, 1
    %v1974 = vadd.f32 %v1972, %v1973
    %v1975 = vmul.f32 %v1974, 0.125
    %v1976 = vmul.f32 %v1975, %v1975
    %1978 = vrot.lane.b32.xlu0 %v1976, 20
    %v1979 = vpop.permute.xlu0 %1978
    %v1981 = vsub.f32 %v1975, %v1979
    %v1982 = vmax.f32 %v1981, 0.0
    %v1983 = vld [vmem:[%s2 + $0x17] sm:$0x1]
    %v1984 = vld [vmem:[%s2 + $0x2f] sm:$0x1]
    %v1985 = vadd.f32 %v1982, 1e-05
    %v1986 = vrsqrt.pop %v1985
    %1988 = vrot.lane.b32.xlu0 %v1986, 108
    %v1989 = vpop.permute.xlu0 %1988
    %v1991 = vmul.f32 %v1983, %v1989
    %v1992 = vmul.f32 %v1975, %v1991
    %v1993 = vsub.f32 %v1984, %v1992
    %v1994 = vlaneseq
    %v1995 = vshrl.u32 %v1994, 7
    %v1996 = vsub.s32 0, %v1995
    %v1997 = vrot.slane %v1991, %v1996
    %v1998 = vmul.f32 %v1959, %v1997
    %v1999 = vlaneseq
    %v2000 = vshrl.u32 %v1999, 7
    %v2001 = vsub.s32 0, %v2000
    %v2002 = vrot.slane %v1993, %v2001
    %v2003 = vadd.f32 %v1998, %v2002
    %v2004 = vmax.f32 %v2003, 0.0
    %s2005 = scalar_lea.vmem [#allocation2], 360
    %v2006 = vld [vmem:[%s2005] sm:$0xff]
    %v2007 = vld [vmem:[%s2005 + $0x8] sm:$0xff]
    %v2008 = vld [vmem:[%s2005 + $0x10] sm:$0xf]
    %v2010 = vsel %vm113, %v2004, 0
    %v2013 = vsel %vm159, %v2008, 0
    %2015 = vmatprep.subr.mxu0 0.0
    %2016 = vmatpush1.msra.mxu0 %v2006
    %2017 = vmatprep.subr.mxu0 0.0
    %2018 = vmatpush1.msra.mxu0 %v2007
    %2019 = vmatprep.subr.mxu0 0.0
    %2020 = vmatpush1.msra.mxu0 %v2013
    %2021 = vmatprep.subr.mxu0 0.0
    %2022 = vmatpush1.msra.mxu0 0.0
    %2023 = vmatprep.subr.mxu0 0.0
    %2024 = vmatpush1.msra.mxu0 0.0
    %2025 = vmatprep.subr.mxu0 0.0
    %2026 = vmatpush1.msra.mxu0 0.0
    %2027 = vmatprep.subr.mxu0 0.0
    %2028 = vmatpush1.msra.mxu0 0.0
    %2029 = vmatprep.subr.mxu0 0.0
    %2030 = vmatpush1.msra.mxu0 0.0
    %2031 = vmatprep.subr.mxu0 0.0
    %2032 = vmatpush1.msra.mxu0 0.0
    %2033 = vmatprep.subr.mxu0 0.0
    %2034 = vmatpush1.msra.mxu0 0.0
    %2035 = vmatprep.subr.mxu0 0.0
    %2036 = vmatpush1.msra.mxu0 0.0
    %2037 = vmatprep.subr.mxu0 0.0
    %2038 = vmatpush1.msra.mxu0 0.0
    %2039 = vmatprep.subr.mxu0 0.0
    %2040 = vmatpush1.msra.mxu0 0.0
    %2041 = vmatprep.subr.mxu0 0.0
    %2042 = vmatpush1.msra.mxu0 0.0
    %2043 = vmatprep.subr.mxu0 0.0
    %2044 = vmatpush1.msra.mxu0 0.0
    %2045 = vmatprep.subr.mxu0 0.0
    %2046 = vmatpush1.msra.mxu0 0.0
    %2047 = vmatprep.subr.mxu0 0.0
    %2048 = vmatpush1.msra.mxu0 0.0
    %2049 = vmatprep.subr.mxu0 0.0
    %2050 = vmatpush1.msra.mxu0 0.0
    %2051 = vmatprep.subr.mxu0 0.0
    %2052 = vmatpush1.msra.mxu0 0.0
    %2053 = vmatprep.subr.mxu0 0.0
    %2054 = vmatpush1.msra.mxu0 0.0
    %2055 = vmatprep.subr.mxu0 0.0
    %2056 = vmatpush1.msra.mxu0 0.0
    %2057 = vmatprep.subr.mxu0 0.0
    %2058 = vmatpush1.msra.mxu0 0.0
    %2059 = vmatprep.subr.mxu0 0.0
    %2060 = vmatpush1.msra.mxu0 0.0
    %2061 = vmatprep.subr.mxu0 0.0
    %2062 = vmatpush1.msra.mxu0 0.0
    %2063 = vmatprep.subr.mxu0 0.0
    %2064 = vmatpush1.msra.mxu0 0.0
    %2065 = vmatprep.subr.mxu0 0.0
    %2066 = vmatpush1.msra.mxu0 0.0
    %2067 = vmatprep.subr.mxu0 0.0
    %2068 = vmatpush1.msra.mxu0 0.0
    %2069 = vmatprep.subr.mxu0 0.0
    %2070 = vmatpush1.msra.mxu0 0.0
    %2071 = vmatprep.subr.mxu0 0.0
    %2072 = vmatpush1.msra.mxu0 0.0
    %2073 = vmatprep.subr.mxu0 0.0
    %2074 = vmatpush1.msra.mxu0 0.0
    %2075 = vmatprep.subr.mxu0 0.0
    %2076 = vmatpush1.msra.mxu0 0.0
    %2077 = vmatprep.subr.mxu0 0.0
    %2078 = vmatpush1.msra.mxu0 0.0
    %2079 = vmatprep.mubr.f32.mxu0 0.0
    %2080 = vmatmul.mubr.f32.gmra.mrb[0].mxu0 %v2010
    %v2081 = vpop.f32.mrb[0].mxu0
    %v2082 = vadd.f32 0.0, %v2081
    %v2083 = vpop.f32.mrb[0].mxu0
    %2084 = vdwg.mxu0
    %v2085 = vmul.f32 %v2082, %v2082
    %2087 = vrot.lane.b32.xlu0 %v2085, 20
    %v2088 = vpop.permute.xlu0 %2087
    %v2090 = vsel %vm113, %v2082, %v2088
    %v2091 = vsel %vm115, %v2090, 0.0
    %v2092 = vrot.slane %v2091, 4
    %v2093 = vadd.f32 %v2091, %v2092
    %v2094 = vrot.slane %v2093, 2
    %v2095 = vadd.f32 %v2093, %v2094
    %v2096 = vrot.slane %v2095, 1
    %v2097 = vadd.f32 %v2095, %v2096
    %v2098 = vmul.f32 %v2097, 0.125
    %v2099 = vmul.f32 %v2098, %v2098
    %2101 = vrot.lane.b32.xlu0 %v2099, 20
    %v2102 = vpop.permute.xlu0 %2101
    %v2104 = vsub.f32 %v2098, %v2102
    %v2105 = vmax.f32 %v2104, 0.0
    %v2106 = vld [vmem:[%s2 + $0x18] sm:$0x1]
    %v2107 = vld [vmem:[%s2 + $0x30] sm:$0x1]
    %v2108 = vadd.f32 %v2105, 1e-05
    %v2109 = vrsqrt.pop %v2108
    %2111 = vrot.lane.b32.xlu0 %v2109, 108
    %v2112 = vpop.permute.xlu0 %2111
    %v2114 = vmul.f32 %v2106, %v2112
    %v2115 = vmul.f32 %v2098, %v2114
    %v2116 = vsub.f32 %v2107, %v2115
    %v2117 = vlaneseq
    %v2118 = vshrl.u32 %v2117, 7
    %v2119 = vsub.s32 0, %v2118
    %v2120 = vrot.slane %v2114, %v2119
    %v2121 = vmul.f32 %v2082, %v2120
    %v2122 = vlaneseq
    %v2123 = vshrl.u32 %v2122, 7
    %v2124 = vsub.s32 0, %v2123
    %v2125 = vrot.slane %v2116, %v2124
    %v2126 = vadd.f32 %v2121, %v2125
    %v2127 = vadd.f32 %v2126, %v1881
    %v2128 = vmax.f32 %v2127, 0.0
    %s2129 = scalar_lea.vmem [#allocation2], 384
    %v2130 = vld [vmem:[%s2129] sm:$0xff]
    %v2131 = vld [vmem:[%s2129 + $0x8] sm:$0xff]
    %v2132 = vld [vmem:[%s2129 + $0x10] sm:$0xf]
    %v2134 = vsel %vm113, %v2128, 0
    %v2137 = vsel %vm159, %v2132, 0
    %2139 = vmatprep.subr.mxu0 0.0
    %2140 = vmatpush1.msra.mxu0 %v2130
    %2141 = vmatprep.subr.mxu0 0.0
    %2142 = vmatpush1.msra.mxu0 %v2131
    %2143 = vmatprep.subr.mxu0 0.0
    %2144 = vmatpush1.msra.mxu0 %v2137
    %2145 = vmatprep.subr.mxu0 0.0
    %2146 = vmatpush1.msra.mxu0 0.0
    %2147 = vmatprep.subr.mxu0 0.0
    %2148 = vmatpush1.msra.mxu0 0.0
    %2149 = vmatprep.subr.mxu0 0.0
    %2150 = vmatpush1.msra.mxu0 0.0
    %2151 = vmatprep.subr.mxu0 0.0
    %2152 = vmatpush1.msra.mxu0 0.0
    %2153 = vmatprep.subr.mxu0 0.0
    %2154 = vmatpush1.msra.mxu0 0.0
    %2155 = vmatprep.subr.mxu0 0.0
    %2156 = vmatpush1.msra.mxu0 0.0
    %2157 = vmatprep.subr.mxu0 0.0
    %2158 = vmatpush1.msra.mxu0 0.0
    %2159 = vmatprep.subr.mxu0 0.0
    %2160 = vmatpush1.msra.mxu0 0.0
    %2161 = vmatprep.subr.mxu0 0.0
    %2162 = vmatpush1.msra.mxu0 0.0
    %2163 = vmatprep.subr.mxu0 0.0
    %2164 = vmatpush1.msra.mxu0 0.0
    %2165 = vmatprep.subr.mxu0 0.0
    %2166 = vmatpush1.msra.mxu0 0.0
    %2167 = vmatprep.subr.mxu0 0.0
    %2168 = vmatpush1.msra.mxu0 0.0
    %2169 = vmatprep.subr.mxu0 0.0
    %2170 = vmatpush1.msra.mxu0 0.0
    %2171 = vmatprep.subr.mxu0 0.0
    %2172 = vmatpush1.msra.mxu0 0.0
    %2173 = vmatprep.subr.mxu0 0.0
    %2174 = vmatpush1.msra.mxu0 0.0
    %2175 = vmatprep.subr.mxu0 0.0
    %2176 = vmatpush1.msra.mxu0 0.0
    %2177 = vmatprep.subr.mxu0 0.0
    %2178 = vmatpush1.msra.mxu0 0.0
    %2179 = vmatprep.subr.mxu0 0.0
    %2180 = vmatpush1.msra.mxu0 0.0
    %2181 = vmatprep.subr.mxu0 0.0
    %2182 = vmatpush1.msra.mxu0 0.0
    %2183 = vmatprep.subr.mxu0 0.0
    %2184 = vmatpush1.msra.mxu0 0.0
    %2185 = vmatprep.subr.mxu0 0.0
    %2186 = vmatpush1.msra.mxu0 0.0
    %2187 = vmatprep.subr.mxu0 0.0
    %2188 = vmatpush1.msra.mxu0 0.0
    %2189 = vmatprep.subr.mxu0 0.0
    %2190 = vmatpush1.msra.mxu0 0.0
    %2191 = vmatprep.subr.mxu0 0.0
    %2192 = vmatpush1.msra.mxu0 0.0
    %2193 = vmatprep.subr.mxu0 0.0
    %2194 = vmatpush1.msra.mxu0 0.0
    %2195 = vmatprep.subr.mxu0 0.0
    %2196 = vmatpush1.msra.mxu0 0.0
    %2197 = vmatprep.subr.mxu0 0.0
    %2198 = vmatpush1.msra.mxu0 0.0
    %2199 = vmatprep.subr.mxu0 0.0
    %2200 = vmatpush1.msra.mxu0 0.0
    %2201 = vmatprep.subr.mxu0 0.0
    %2202 = vmatpush1.msra.mxu0 0.0
    %2203 = vmatprep.mubr.f32.mxu0 0.0
    %2204 = vmatmul.mubr.f32.gmra.mrb[0].mxu0 %v2134
    %v2205 = vpop.f32.mrb[0].mxu0
    %v2206 = vadd.f32 0.0, %v2205
    %v2207 = vpop.f32.mrb[0].mxu0
    %2208 = vdwg.mxu0
    %v2209 = vmul.f32 %v2206, %v2206
    %2211 = vrot.lane.b32.xlu0 %v2209, 20
    %v2212 = vpop.permute.xlu0 %2211
    %v2214 = vsel %vm113, %v2206, %v2212
    %v2215 = vsel %vm115, %v2214, 0.0
    %v2216 = vrot.slane %v2215, 4
    %v2217 = vadd.f32 %v2215, %v2216
    %v2218 = vrot.slane %v2217, 2
    %v2219 = vadd.f32 %v2217, %v2218
    %v2220 = vrot.slane %v2219, 1
    %v2221 = vadd.f32 %v2219, %v2220
    %v2222 = vmul.f32 %v2221, 0.125
    %v2223 = vmul.f32 %v2222, %v2222
    %2225 = vrot.lane.b32.xlu0 %v2223, 20
    %v2226 = vpop.permute.xlu0 %2225
    %v2228 = vsub.f32 %v2222, %v2226
    %v2229 = vmax.f32 %v2228, 0.0
    %v2230 = vld [vmem:[%s2 + $0x19] sm:$0x1]
    %v2231 = vld [vmem:[%s2 + $0x31] sm:$0x1]
    %v2232 = vadd.f32 %v2229, 1e-05
    %v2233 = vrsqrt.pop %v2232
    %2235 = vrot.lane.b32.xlu0 %v2233, 108
    %v2236 = vpop.permute.xlu0 %2235
    %v2238 = vmul.f32 %v2230, %v2236
    %v2239 = vmul.f32 %v2222, %v2238
    %v2240 = vsub.f32 %v2231, %v2239
    %v2241 = vlaneseq
    %v2242 = vshrl.u32 %v2241, 7
    %v2243 = vsub.s32 0, %v2242
    %v2244 = vrot.slane %v2238, %v2243
    %v2245 = vmul.f32 %v2206, %v2244
    %v2246 = vlaneseq
    %v2247 = vshrl.u32 %v2246, 7
    %v2248 = vsub.s32 0, %v2247
    %v2249 = vrot.slane %v2240, %v2248
    %v2250 = vadd.f32 %v2245, %v2249
    %v2251 = vmax.f32 %v2250, 0.0
    %s2252 = scalar_lea.vmem [#allocation2], 408
    %v2253 = vld [vmem:[%s2252] sm:$0xff]
    %v2254 = vld [vmem:[%s2252 + $0x8] sm:$0xff]
    %v2255 = vld [vmem:[%s2252 + $0x10] sm:$0xf]
    %v2257 = vsel %vm113, %v2251, 0
    %v2260 = vsel %vm159, %v2255, 0
    %2262 = vmatprep.subr.mxu0 0.0
    %2263 = vmatpush1.msra.mxu0 %v2253
    %2264 = vmatprep.subr.mxu0 0.0
    %2265 = vmatpush1.msra.mxu0 %v2254
    %2266 = vmatprep.subr.mxu0 0.0
    %2267 = vmatpush1.msra.mxu0 %v2260
    %2268 = vmatprep.subr.mxu0 0.0
    %2269 = vmatpush1.msra.mxu0 0.0
    %2270 = vmatprep.subr.mxu0 0.0
    %2271 = vmatpush1.msra.mxu0 0.0
    %2272 = vmatprep.subr.mxu0 0.0
    %2273 = vmatpush1.msra.mxu0 0.0
    %2274 = vmatprep.subr.mxu0 0.0
    %2275 = vmatpush1.msra.mxu0 0.0
    %2276 = vmatprep.subr.mxu0 0.0
    %2277 = vmatpush1.msra.mxu0 0.0
    %2278 = vmatprep.subr.mxu0 0.0
    %2279 = vmatpush1.msra.mxu0 0.0
    %2280 = vmatprep.subr.mxu0 0.0
    %2281 = vmatpush1.msra.mxu0 0.0
    %2282 = vmatprep.subr.mxu0 0.0
    %2283 = vmatpush1.msra.mxu0 0.0
    %2284 = vmatprep.subr.mxu0 0.0
    %2285 = vmatpush1.msra.mxu0 0.0
    %2286 = vmatprep.subr.mxu0 0.0
    %2287 = vmatpush1.msra.mxu0 0.0
    %2288 = vmatprep.subr.mxu0 0.0
    %2289 = vmatpush1.msra.mxu0 0.0
    %2290 = vmatprep.subr.mxu0 0.0
    %2291 = vmatpush1.msra.mxu0 0.0
    %2292 = vmatprep.subr.mxu0 0.0
    %2293 = vmatpush1.msra.mxu0 0.0
    %2294 = vmatprep.subr.mxu0 0.0
    %2295 = vmatpush1.msra.mxu0 0.0
    %2296 = vmatprep.subr.mxu0 0.0
    %2297 = vmatpush1.msra.mxu0 0.0
    %2298 = vmatprep.subr.mxu0 0.0
    %2299 = vmatpush1.msra.mxu0 0.0
    %2300 = vmatprep.subr.mxu0 0.0
    %2301 = vmatpush1.msra.mxu0 0.0
    %2302 = vmatprep.subr.mxu0 0.0
    %2303 = vmatpush1.msra.mxu0 0.0
    %2304 = vmatprep.subr.mxu0 0.0
    %2305 = vmatpush1.msra.mxu0 0.0
    %2306 = vmatprep.subr.mxu0 0.0
    %2307 = vmatpush1.msra.mxu0 0.0
    %2308 = vmatprep.subr.mxu0 0.0
    %2309 = vmatpush1.msra.mxu0 0.0
    %2310 = vmatprep.subr.mxu0 0.0
    %2311 = vmatpush1.msra.mxu0 0.0
    %2312 = vmatprep.subr.mxu0 0.0
    %2313 = vmatpush1.msra.mxu0 0.0
    %2314 = vmatprep.subr.mxu0 0.0
    %2315 = vmatpush1.msra.mxu0 0.0
    %2316 = vmatprep.subr.mxu0 0.0
    %2317 = vmatpush1.msra.mxu0 0.0
    %2318 = vmatprep.subr.mxu0 0.0
    %2319 = vmatpush1.msra.mxu0 0.0
    %2320 = vmatprep.subr.mxu0 0.0
    %2321 = vmatpush1.msra.mxu0 0.0
    %2322 = vmatprep.subr.mxu0 0.0
    %2323 = vmatpush1.msra.mxu0 0.0
    %2324 = vmatprep.subr.mxu0 0.0
    %2325 = vmatpush1.msra.mxu0 0.0
    %2326 = vmatprep.mubr.f32.mxu0 0.0
    %2327 = vmatmul.mubr.f32.gmra.mrb[0].mxu0 %v2257
    %v2328 = vpop.f32.mrb[0].mxu0
    %v2329 = vadd.f32 0.0, %v2328
    %v2330 = vpop.f32.mrb[0].mxu0
    %2331 = vdwg.mxu0
    %v2332 = vmul.f32 %v2329, %v2329
    %2334 = vrot.lane.b32.xlu0 %v2332, 20
    %v2335 = vpop.permute.xlu0 %2334
    %v2337 = vsel %vm113, %v2329, %v2335
    %v2338 = vsel %vm115, %v2337, 0.0
    %v2339 = vrot.slane %v2338, 4
    %v2340 = vadd.f32 %v2338, %v2339
    %v2341 = vrot.slane %v2340, 2
    %v2342 = vadd.f32 %v2340, %v2341
    %v2343 = vrot.slane %v2342, 1
    %v2344 = vadd.f32 %v2342, %v2343
    %v2345 = vmul.f32 %v2344, 0.125
    %v2346 = vmul.f32 %v2345, %v2345
    %2348 = vrot.lane.b32.xlu0 %v2346, 20
    %v2349 = vpop.permute.xlu0 %2348
    %v2351 = vsub.f32 %v2345, %v2349
    %v2352 = vmax.f32 %v2351, 0.0
    %v2353 = vld [vmem:[%s2 + $0x1a] sm:$0x1]
    %v2354 = vld [vmem:[%s2 + $0x32] sm:$0x1]
    %v2355 = vadd.f32 %v2352, 1e-05
    %v2356 = vrsqrt.pop %v2355
    %2358 = vrot.lane.b32.xlu0 %v2356, 108
    %v2359 = vpop.permute.xlu0 %2358
    %v2361 = vmul.f32 %v2353, %v2359
    %v2362 = vmul.f32 %v2345, %v2361
    %v2363 = vsub.f32 %v2354, %v2362
    %v2364 = vlaneseq
    %v2365 = vshrl.u32 %v2364, 7
    %v2366 = vsub.s32 0, %v2365
    %v2367 = vrot.slane %v2361, %v2366
    %v2368 = vmul.f32 %v2329, %v2367
    %v2369 = vlaneseq
    %v2370 = vshrl.u32 %v2369, 7
    %v2371 = vsub.s32 0, %v2370
    %v2372 = vrot.slane %v2363, %v2371
    %v2373 = vadd.f32 %v2368, %v2372
    %v2374 = vadd.f32 %v2373, %v2128
    %v2375 = vmax.f32 %v2374, 0.0
    %s2376 = scalar_lea.vmem [#allocation2], 432
    %v2377 = vld [vmem:[%s2376] sm:$0xff]
    %v2378 = vld [vmem:[%s2376 + $0x8] sm:$0xff]
    %v2379 = vld [vmem:[%s2376 + $0x10] sm:$0xf]
    %v2381 = vsel %vm113, %v2375, 0
    %v2384 = vsel %vm159, %v2379, 0
    %2386 = vmatprep.subr.mxu0 0.0
    %2387 = vmatpush1.msra.mxu0 %v2377
    %2388 = vmatprep.subr.mxu0 0.0
    %2389 = vmatpush1.msra.mxu0 %v2378
    %2390 = vmatprep.subr.mxu0 0.0
    %2391 = vmatpush1.msra.mxu0 %v2384
    %2392 = vmatprep.subr.mxu0 0.0
    %2393 = vmatpush1.msra.mxu0 0.0
    %2394 = vmatprep.subr.mxu0 0.0
    %2395 = vmatpush1.msra.mxu0 0.0
    %2396 = vmatprep.subr.mxu0 0.0
    %2397 = vmatpush1.msra.mxu0 0.0
    %2398 = vmatprep.subr.mxu0 0.0
    %2399 = vmatpush1.msra.mxu0 0.0
    %2400 = vmatprep.subr.mxu0 0.0
    %2401 = vmatpush1.msra.mxu0 0.0
    %2402 = vmatprep.subr.mxu0 0.0
    %2403 = vmatpush1.msra.mxu0 0.0
    %2404 = vmatprep.subr.mxu0 0.0
    %2405 = vmatpush1.msra.mxu0 0.0
    %2406 = vmatprep.subr.mxu0 0.0
    %2407 = vmatpush1.msra.mxu0 0.0
    %2408 = vmatprep.subr.mxu0 0.0
    %2409 = vmatpush1.msra.mxu0 0.0
    %2410 = vmatprep.subr.mxu0 0.0
    %2411 = vmatpush1.msra.mxu0 0.0
    %2412 = vmatprep.subr.mxu0 0.0
    %2413 = vmatpush1.msra.mxu0 0.0
    %2414 = vmatprep.subr.mxu0 0.0
    %2415 = vmatpush1.msra.mxu0 0.0
    %2416 = vmatprep.subr.mxu0 0.0
    %2417 = vmatpush1.msra.mxu0 0.0
    %2418 = vmatprep.subr.mxu0 0.0
    %2419 = vmatpush1.msra.mxu0 0.0
    %2420 = vmatprep.subr.mxu0 0.0
    %2421 = vmatpush1.msra.mxu0 0.0
    %2422 = vmatprep.subr.mxu0 0.0
    %2423 = vmatpush1.msra.mxu0 0.0
    %2424 = vmatprep.subr.mxu0 0.0
    %2425 = vmatpush1.msra.mxu0 0.0
    %2426 = vmatprep.subr.mxu0 0.0
    %2427 = vmatpush1.msra.mxu0 0.0
    %2428 = vmatprep.subr.mxu0 0.0
    %2429 = vmatpush1.msra.mxu0 0.0
    %2430 = vmatprep.subr.mxu0 0.0
    %2431 = vmatpush1.msra.mxu0 0.0
    %2432 = vmatprep.subr.mxu0 0.0
    %2433 = vmatpush1.msra.mxu0 0.0
    %2434 = vmatprep.subr.mxu0 0.0
    %2435 = vmatpush1.msra.mxu0 0.0
    %2436 = vmatprep.subr.mxu0 0.0
    %2437 = vmatpush1.msra.mxu0 0.0
    %2438 = vmatprep.subr.mxu0 0.0
    %2439 = vmatpush1.msra.mxu0 0.0
    %2440 = vmatprep.subr.mxu0 0.0
    %2441 = vmatpush1.msra.mxu0 0.0
    %2442 = vmatprep.subr.mxu0 0.0
    %2443 = vmatpush1.msra.mxu0 0.0
    %2444 = vmatprep.subr.mxu0 0.0
    %2445 = vmatpush1.msra.mxu0 0.0
    %2446 = vmatprep.subr.mxu0 0.0
    %2447 = vmatpush1.msra.mxu0 0.0
    %2448 = vmatprep.subr.mxu0 0.0
    %2449 = vmatpush1.msra.mxu0 0.0
    %2450 = vmatprep.mubr.f32.mxu0 0.0
    %2451 = vmatmul.mubr.f32.gmra.mrb[0].mxu0 %v2381
    %v2452 = vpop.f32.mrb[0].mxu0
    %v2453 = vadd.f32 0.0, %v2452
    %v2454 = vpop.f32.mrb[0].mxu0
    %2455 = vdwg.mxu0
    %v2456 = vmul.f32 %v2453, %v2453
    %2458 = vrot.lane.b32.xlu0 %v2456, 20
    %v2459 = vpop.permute.xlu0 %2458
    %v2461 = vsel %vm113, %v2453, %v2459
    %v2462 = vsel %vm115, %v2461, 0.0
    %v2463 = vrot.slane %v2462, 4
    %v2464 = vadd.f32 %v2462, %v2463
    %v2465 = vrot.slane %v2464, 2
    %v2466 = vadd.f32 %v2464, %v2465
    %v2467 = vrot.slane %v2466, 1
    %v2468 = vadd.f32 %v2466, %v2467
    %v2469 = vmul.f32 %v2468, 0.125
    %v2470 = vmul.f32 %v2469, %v2469
    %2472 = vrot.lane.b32.xlu0 %v2470, 20
    %v2473 = vpop.permute.xlu0 %2472
    %v2475 = vsub.f32 %v2469, %v2473
    %v2476 = vmax.f32 %v2475, 0.0
    %v2477 = vld [vmem:[%s2 + $0x1b] sm:$0x1]
    %v2478 = vld [vmem:[%s2 + $0x33] sm:$0x1]
    %v2479 = vadd.f32 %v2476, 1e-05
    %v2480 = vrsqrt.pop %v2479
    %2482 = vrot.lane.b32.xlu0 %v2480, 108
    %v2483 = vpop.permute.xlu0 %2482
    %v2485 = vmul.f32 %v2477, %v2483
    %v2486 = vmul.f32 %v2469, %v2485
    %v2487 = vsub.f32 %v2478, %v2486
    %v2488 = vlaneseq
    %v2489 = vshrl.u32 %v2488, 7
    %v2490 = vsub.s32 0, %v2489
    %v2491 = vrot.slane %v2485, %v2490
    %v2492 = vmul.f32 %v2453, %v2491
    %v2493 = vlaneseq
    %v2494 = vshrl.u32 %v2493, 7
    %v2495 = vsub.s32 0, %v2494
    %v2496 = vrot.slane %v2487, %v2495
    %v2497 = vadd.f32 %v2492, %v2496
    %v2498 = vmax.f32 %v2497, 0.0
    %s2499 = scalar_lea.vmem [#allocation2], 456
    %v2500 = vld [vmem:[%s2499] sm:$0xff]
    %v2501 = vld [vmem:[%s2499 + $0x8] sm:$0xff]
    %v2502 = vld [vmem:[%s2499 + $0x10] sm:$0xf]
    %v2504 = vsel %vm113, %v2498, 0
    %v2507 = vsel %vm159, %v2502, 0
    %2509 = vmatprep.subr.mxu0 0.0
    %2510 = vmatpush1.msra.mxu0 %v2500
    %2511 = vmatprep.subr.mxu0 0.0
    %2512 = vmatpush1.msra.mxu0 %v2501
    %2513 = vmatprep.subr.mxu0 0.0
    %2514 = vmatpush1.msra.mxu0 %v2507
    %2515 = vmatprep.subr.mxu0 0.0
    %2516 = vmatpush1.msra.mxu0 0.0
    %2517 = vmatprep.subr.mxu0 0.0
    %2518 = vmatpush1.msra.mxu0 0.0
    %2519 = vmatprep.subr.mxu0 0.0
    %2520 = vmatpush1.msra.mxu0 0.0
    %2521 = vmatprep.subr.mxu0 0.0
    %2522 = vmatpush1.msra.mxu0 0.0
    %2523 = vmatprep.subr.mxu0 0.0
    %2524 = vmatpush1.msra.mxu0 0.0
    %2525 = vmatprep.subr.mxu0 0.0
    %2526 = vmatpush1.msra.mxu0 0.0
    %2527 = vmatprep.subr.mxu0 0.0
    %2528 = vmatpush1.msra.mxu0 0.0
    %2529 = vmatprep.subr.mxu0 0.0
    %2530 = vmatpush1.msra.mxu0 0.0
    %2531 = vmatprep.subr.mxu0 0.0
    %2532 = vmatpush1.msra.mxu0 0.0
    %2533 = vmatprep.subr.mxu0 0.0
    %2534 = vmatpush1.msra.mxu0 0.0
    %2535 = vmatprep.subr.mxu0 0.0
    %2536 = vmatpush1.msra.mxu0 0.0
    %2537 = vmatprep.subr.mxu0 0.0
    %2538 = vmatpush1.msra.mxu0 0.0
    %2539 = vmatprep.subr.mxu0 0.0
    %2540 = vmatpush1.msra.mxu0 0.0
    %2541 = vmatprep.subr.mxu0 0.0
    %2542 = vmatpush1.msra.mxu0 0.0
    %2543 = vmatprep.subr.mxu0 0.0
    %2544 = vmatpush1.msra.mxu0 0.0
    %2545 = vmatprep.subr.mxu0 0.0
    %2546 = vmatpush1.msra.mxu0 0.0
    %2547 = vmatprep.subr.mxu0 0.0
    %2548 = vmatpush1.msra.mxu0 0.0
    %2549 = vmatprep.subr.mxu0 0.0
    %2550 = vmatpush1.msra.mxu0 0.0
    %2551 = vmatprep.subr.mxu0 0.0
    %2552 = vmatpush1.msra.mxu0 0.0
    %2553 = vmatprep.subr.mxu0 0.0
    %2554 = vmatpush1.msra.mxu0 0.0
    %2555 = vmatprep.subr.mxu0 0.0
    %2556 = vmatpush1.msra.mxu0 0.0
    %2557 = vmatprep.subr.mxu0 0.0
    %2558 = vmatpush1.msra.mxu0 0.0
    %2559 = vmatprep.subr.mxu0 0.0
    %2560 = vmatpush1.msra.mxu0 0.0
    %2561 = vmatprep.subr.mxu0 0.0
    %2562 = vmatpush1.msra.mxu0 0.0
    %2563 = vmatprep.subr.mxu0 0.0
    %2564 = vmatpush1.msra.mxu0 0.0
    %2565 = vmatprep.subr.mxu0 0.0
    %2566 = vmatpush1.msra.mxu0 0.0
    %2567 = vmatprep.subr.mxu0 0.0
    %2568 = vmatpush1.msra.mxu0 0.0
    %2569 = vmatprep.subr.mxu0 0.0
    %2570 = vmatpush1.msra.mxu0 0.0
    %2571 = vmatprep.subr.mxu0 0.0
    %2572 = vmatpush1.msra.mxu0 0.0
    %2573 = vmatprep.mubr.f32.mxu0 0.0
    %2574 = vmatmul.mubr.f32.gmra.mrb[0].mxu0 %v2504
    %v2575 = vpop.f32.mrb[0].mxu0
    %v2576 = vadd.f32 0.0, %v2575
    %v2577 = vpop.f32.mrb[0].mxu0
    %2578 = vdwg.mxu0
    %v2579 = vmul.f32 %v2576, %v2576
    %2581 = vrot.lane.b32.xlu0 %v2579, 20
    %v2582 = vpop.permute.xlu0 %2581
    %v2584 = vsel %vm113, %v2576, %v2582
    %v2585 = vsel %vm115, %v2584, 0.0
    %v2586 = vrot.slane %v2585, 4
    %v2587 = vadd.f32 %v2585, %v2586
    %v2588 = vrot.slane %v2587, 2
    %v2589 = vadd.f32 %v2587, %v2588
    %v2590 = vrot.slane %v2589, 1
    %v2591 = vadd.f32 %v2589, %v2590
    %v2592 = vmul.f32 %v2591, 0.125
    %v2593 = vmul.f32 %v2592, %v2592
    %2595 = vrot.lane.b32.xlu0 %v2593, 20
    %v2596 = vpop.permute.xlu0 %2595
    %v2598 = vsub.f32 %v2592, %v2596
    %v2599 = vmax.f32 %v2598, 0.0
    %v2600 = vld [vmem:[%s2 + $0x1c] sm:$0x1]
    %v2601 = vld [vmem:[%s2 + $0x34] sm:$0x1]
    %v2602 = vadd.f32 %v2599, 1e-05
    %v2603 = vrsqrt.pop %v2602
    %2605 = vrot.lane.b32.xlu0 %v2603, 108
    %v2606 = vpop.permute.xlu0 %2605
    %v2608 = vmul.f32 %v2600, %v2606
    %v2609 = vmul.f32 %v2592, %v2608
    %v2610 = vsub.f32 %v2601, %v2609
    %v2611 = vlaneseq
    %v2612 = vshrl.u32 %v2611, 7
    %v2613 = vsub.s32 0, %v2612
    %v2614 = vrot.slane %v2608, %v2613
    %v2615 = vmul.f32 %v2576, %v2614
    %v2616 = vlaneseq
    %v2617 = vshrl.u32 %v2616, 7
    %v2618 = vsub.s32 0, %v2617
    %v2619 = vrot.slane %v2610, %v2618
    %v2620 = vadd.f32 %v2615, %v2619
    %v2621 = vadd.f32 %v2620, %v2375
    %v2622 = vmax.f32 %v2621, 0.0
    %v2623 = vld [vmem:[%s2 + $0x38] sm:$0xff]
    %v2624 = vld [vmem:[%s2 + $0x40] sm:$0xff]
    %v2625 = vld [vmem:[%s2 + $0x48] sm:$0xf]
    %v2626 = vld [vmem:[%s2 + $0x50] sm:$0x1]
    %v2627 = vlaneseq
    %v2628 = vshrl.u32 %v2627, 7
    %v2629 = vsub.s32 0, %v2628
    %v2630 = vrot.slane %v2626, %v2629
    %v2632 = vsel %vm113, %v2622, 0
    %v2635 = vsel %vm159, %v2625, 0
    %2637 = vmatprep.subr.mxu0 0.0
    %2638 = vmatpush1.msra.mxu0 %v2623
    %2639 = vmatprep.subr.mxu0 0.0
    %2640 = vmatpush1.msra.mxu0 %v2624
    %2641 = vmatprep.subr.mxu0 0.0
    %2642 = vmatpush1.msra.mxu0 %v2635
    %2643 = vmatprep.subr.mxu0 0.0
    %2644 = vmatpush1.msra.mxu0 0.0
    %2645 = vmatprep.subr.mxu0 0.0
    %2646 = vmatpush1.msra.mxu0 0.0
    %2647 = vmatprep.subr.mxu0 0.0
    %2648 = vmatpush1.msra.mxu0 0.0
    %2649 = vmatprep.subr.mxu0 0.0
    %2650 = vmatpush1.msra.mxu0 0.0
    %2651 = vmatprep.subr.mxu0 0.0
    %2652 = vmatpush1.msra.mxu0 0.0
    %2653 = vmatprep.subr.mxu0 0.0
    %2654 = vmatpush1.msra.mxu0 0.0
    %2655 = vmatprep.subr.mxu0 0.0
    %2656 = vmatpush1.msra.mxu0 0.0
    %2657 = vmatprep.subr.mxu0 0.0
    %2658 = vmatpush1.msra.mxu0 0.0
    %2659 = vmatprep.subr.mxu0 0.0
    %2660 = vmatpush1.msra.mxu0 0.0
    %2661 = vmatprep.subr.mxu0 0.0
    %2662 = vmatpush1.msra.mxu0 0.0
    %2663 = vmatprep.subr.mxu0 0.0
    %2664 = vmatpush1.msra.mxu0 0.0
    %2665 = vmatprep.subr.mxu0 0.0
    %2666 = vmatpush1.msra.mxu0 0.0
    %2667 = vmatprep.subr.mxu0 0.0
    %2668 = vmatpush1.msra.mxu0 0.0
    %2669 = vmatprep.subr.mxu0 0.0
    %2670 = vmatpush1.msra.mxu0 0.0
    %2671 = vmatprep.subr.mxu0 0.0
    %2672 = vmatpush1.msra.mxu0 0.0
    %2673 = vmatprep.subr.mxu0 0.0
    %2674 = vmatpush1.msra.mxu0 0.0
    %2675 = vmatprep.subr.mxu0 0.0
    %2676 = vmatpush1.msra.mxu0 0.0
    %2677 = vmatprep.subr.mxu0 0.0
    %2678 = vmatpush1.msra.mxu0 0.0
    %2679 = vmatprep.subr.mxu0 0.0
    %2680 = vmatpush1.msra.mxu0 0.0
    %2681 = vmatprep.subr.mxu0 0.0
    %2682 = vmatpush1.msra.mxu0 0.0
    %2683 = vmatprep.subr.mxu0 0.0
    %2684 = vmatpush1.msra.mxu0 0.0
    %2685 = vmatprep.subr.mxu0 0.0
    %2686 = vmatpush1.msra.mxu0 0.0
    %2687 = vmatprep.subr.mxu0 0.0
    %2688 = vmatpush1.msra.mxu0 0.0
    %2689 = vmatprep.subr.mxu0 0.0
    %2690 = vmatpush1.msra.mxu0 0.0
    %2691 = vmatprep.subr.mxu0 0.0
    %2692 = vmatpush1.msra.mxu0 0.0
    %2693 = vmatprep.subr.mxu0 0.0
    %2694 = vmatpush1.msra.mxu0 0.0
    %2695 = vmatprep.subr.mxu0 0.0
    %2696 = vmatpush1.msra.mxu0 0.0
    %2697 = vmatprep.subr.mxu0 0.0
    %2698 = vmatpush1.msra.mxu0 0.0
    %2699 = vmatprep.subr.mxu0 0.0
    %2700 = vmatpush1.msra.mxu0 0.0
    %2701 = vmatprep.mubr.f32.mxu0 0.0
    %2702 = vmatmul.mubr.f32.gmra.mrb[0].mxu0 %v2632
    %v2703 = vpop.f32.mrb[0].mxu0
    %v2704 = vadd.f32 %v2630, %v2703
    %v2705 = vpop.f32.mrb[0].mxu0
    %2706 = vdwg.mxu0
    %2707 = vst.msk [vmem:[%s3] sm:$0xff] %vm30, %v2704
    // Predicated region
    $region18: #{tpu_custom_call.1} parent=1 // pred_check
      _
    $region19: #{tpu_custom_call.1} parent=1 // pred_check_branch
      %2709 = sbr.rel (0) target = $region21
    $region20: #{tpu_custom_call.1} parent=1 // pred_region
      _
    $region21: #{tpu_custom_call.1} parent=1 // pred_fallthru
      _
    // Predicated region
    $region22: #{tpu_custom_call.1} parent=1 // pred_check
      _
    $region23: #{tpu_custom_call.1} parent=1 // pred_check_branch
      %2711 = sbr.rel (0) target = $region25
    $region24: #{tpu_custom_call.1} parent=1 // pred_region
      _
    $region25: #{tpu_custom_call.1} parent=1 // pred_fallthru
      _
    %2712 = vsyncpa [#allocation3], 1

</llo_original>
